<compile_context>
chip_gen: v7x
topology: tpu7x:2x2x1
jax: 0.10.0
libtpu: 0.0.40
codegen_flags: <defaults>
</compile_context>

<pallas_src>
import functools

import jax
import jax.numpy as jnp
from jax.experimental import pallas as pl
from jax.experimental.pallas import tpu as pltpu

_EPS = 1e-5
_LANE = 128
_VMEM_LIMIT = 32 * 1024 * 1024  # safe on v5e/v6e/v7x; actual footprint ~2 MiB


def _round_up(x, m):
    return ((x + m - 1) // m) * m


def _pick_tiles(M, N, K):
    """Tile sizes + padded dims.  128/256-wide tiles fit the MXU on all gens
    and the double-buffered footprint stays far below the 16/32 MiB scoped
    VMEM defaults (v5e/v6e) and the 64 MiB physical VMEM on v7x."""
    tm = min(256, _round_up(M, 16))          # 16: bf16 sublane packing
    Mp = _round_up(M, tm)
    Np = _round_up(N, _LANE)
    tn = 256 if Np % 256 == 0 else 128
    Kp = _round_up(K, _LANE)
    tk = 256 if Kp % 256 == 0 else 128
    return tm, tn, tk, Mp, Np, Kp


# ------------------------------ Pallas kernels ------------------------------ #

def _gemm_colstats_kernel(x_ref, w_ref, y_ref, stats_ref, acc_ref):
    """Tiled bf16 GEMM with f32 accumulation.  On the last K step it stores the
    output tile and per-M-tile column sum / sum-of-squares (for BatchNorm)."""
    k = pl.program_id(2)

    @pl.when(k == 0)
    def _():
        acc_ref[...] = jnp.zeros_like(acc_ref)

    acc_ref[...] += jnp.dot(x_ref[...], w_ref[...],
                            preferred_element_type=jnp.float32)

    @pl.when(k == pl.num_programs(2) - 1)
    def _():
        y = acc_ref[...]
        y_ref[...] = y
        s = jnp.sum(y, axis=0, keepdims=True)        # (1, tn)
        ss = jnp.sum(y * y, axis=0, keepdims=True)   # (1, tn)
        stats_ref[...] = jnp.concatenate([s, ss], axis=0)[None, :, :]


def _bn_relu_kernel(y_ref, scale_ref, shift_ref, o_ref):
    o_ref[...] = jnp.maximum(
        y_ref[...] * scale_ref[...] + shift_ref[...], 0.0).astype(o_ref.dtype)


def _bn_add_relu_kernel(y_ref, scale_ref, shift_ref, res_ref, o_ref):
    o_ref[...] = jnp.maximum(
        y_ref[...] * scale_ref[...] + shift_ref[...] + res_ref[...], 0.0
    ).astype(o_ref.dtype)


# ------------------------------ kernel wrappers ----------------------------- #

def _gemm_with_colstats(x, w, tm, tn, tk, Mp, Np, Kp):
    M, K = x.shape
    N = w.shape[1]
    xp = jnp.pad(x.astype(jnp.bfloat16), ((0, Mp - M), (0, Kp - K)))
    wp = jnp.pad(w.astype(jnp.bfloat16), ((0, Kp - K), (0, Np - N)))
    gm, gn, gk = Mp // tm, Np // tn, Kp // tk

    y, stats = pl.pallas_call(
        _gemm_colstats_kernel,
        out_shape=(jax.ShapeDtypeStruct((Mp, Np), jnp.float32),
                   jax.ShapeDtypeStruct((gm, 2, Np), jnp.float32)),
        grid_spec=pltpu.PrefetchScalarGridSpec(
            num_scalar_prefetch=0,
            grid=(gm, gn, gk),
            in_specs=[
                pl.BlockSpec((tm, tk), lambda i, j, k: (i, k)),
                pl.BlockSpec((tk, tn), lambda i, j, k: (k, j)),
            ],
            out_specs=[
                pl.BlockSpec((tm, tn), lambda i, j, k: (i, j)),
                pl.BlockSpec((1, 2, tn), lambda i, j, k: (i, 0, j)),
            ],
            scratch_shapes=[pltpu.VMEM((tm, tn), jnp.float32)],
        ),
        compiler_params=pltpu.CompilerParams(
            dimension_semantics=("parallel", "parallel", "arbitrary"),
            vmem_limit_bytes=_VMEM_LIMIT,
        ),
        cost_estimate=pl.CostEstimate(
            flops=2 * Mp * Np * Kp,
            transcendentals=0,
            bytes_accessed=(Mp * Kp + Kp * Np) * 2 + (Mp * Np + gm * 2 * Np) * 4,
        ),
    )(xp, wp)
    return y, stats


def _bn_act(y, scale, shift, res, out_dtype, tm, tn):
    Mp, Np = y.shape
    gm, gn = Mp // tm, Np // tn
    tile = pl.BlockSpec((tm, tn), lambda i, j: (i, j))
    vec = pl.BlockSpec((1, tn), lambda i, j: (0, j))
    if res is None:
        kernel, in_specs, args, nread = _bn_relu_kernel, [tile, vec, vec], (y, scale, shift), 2
    else:
        kernel, in_specs, args, nread = (_bn_add_relu_kernel,
                                         [tile, vec, vec, tile],
                                         (y, scale, shift, res), 3)
    return pl.pallas_call(
        kernel,
        out_shape=jax.ShapeDtypeStruct((Mp, Np), out_dtype),
        grid_spec=pltpu.PrefetchScalarGridSpec(
            num_scalar_prefetch=0,
            grid=(gm, gn),
            in_specs=in_specs,
            out_specs=pl.BlockSpec((tm, tn), lambda i, j: (i, j)),
        ),
        compiler_params=pltpu.CompilerParams(
            dimension_semantics=("parallel", "parallel"),
            vmem_limit_bytes=_VMEM_LIMIT,
        ),
        cost_estimate=pl.CostEstimate(
            flops=4 * Mp * Np,
            transcendentals=0,
            bytes_accessed=Mp * Np * 4 * (nread + 1),
        ),
    )(*args)


def _fused_gemm_bn_act(x_rows, w, gamma, beta, *, m_true, residual=None,
                       out_dtype=jnp.float32):
    """(M,K) @ (K,N) -> training-mode BatchNorm over rows -> (+residual) -> ReLU.

    Returns (M, round_up(N, 128)); the padded columns are exact zeros."""
    M, K = x_rows.shape
    N = w.shape[1]
    tm, tn, tk, Mp, Np, Kp = _pick_tiles(M, N, K)

    y, stats = _gemm_with_colstats(x_rows, w, tm, tn, tk, Mp, Np, Kp)

    # Finalize BatchNorm statistics (tiny (Np,) vectors -> plain JAX).  Padded
    # rows of x are zero so they contribute nothing; divide by the true M.
    col_sum = jnp.sum(stats[:, 0, :], axis=0)
    col_sq = jnp.sum(stats[:, 1, :], axis=0)
    mean = col_sum / m_true
    var = jnp.maximum(col_sq / m_true - mean * mean, 0.0)
    gamma_p = jnp.pad(gamma, (0, Np - N))
    beta_p = jnp.pad(beta, (0, Np - N))
    inv_std = jax.lax.rsqrt(var + _EPS)
    scale = gamma_p * inv_std
    shift = beta_p - mean * scale
    scale = scale.reshape(1, Np).astype(jnp.float32)
    shift = shift.reshape(1, Np).astype(jnp.float32)

    res_p = None
    if residual is not None:
        Mr, Nr = residual.shape
        res_p = jnp.pad(residual.astype(jnp.float32),
                        ((0, Mp - Mr), (0, Np - Nr)))

    out = _bn_act(y, scale, shift, res_p, out_dtype, tm, tn)
    return out[:M]


# ------------------------------- plain-JAX glue ------------------------------ #

def _im2col_3x3(x_nhwc, stride, dilation):
    """Extract 3x3 patches (zero padded) -> (N*Ho*Wo, 9*C)."""
    N, H, W, C = x_nhwc.shape
    pad = (3 * dilation - 1) // 2
    Ho = (H + 2 * pad - 2 * dilation - 1) // stride + 1
    Wo = (W + 2 * pad - 2 * dilation - 1) // stride + 1
    xp = jnp.pad(x_nhwc, ((0, 0), (pad, pad), (pad, pad), (0, 0)))
    cols = []
    for ky in range(3):
        for kx in range(3):
            y0 = ky * dilation
            x0 = kx * dilation
            cols.append(xp[:, y0:y0 + stride * (Ho - 1) + 1:stride,
                           x0:x0 + stride * (Wo - 1) + 1:stride, :])
    patches = jnp.concatenate(cols, axis=-1)                # (N, Ho, Wo, 9*C)
    return patches.reshape(N * Ho * Wo, 9 * C), Ho, Wo


def bottleneck_forward(params, x_nchw, stride=1, dilation=1):
    # TODO(synk): the NCHW<->NHWC transposes are XLA ops outside the kernels;
    # folding them into the first/last BlockSpec index_maps would save one HBM
    # round-trip each at production sizes.
    x = jnp.transpose(x_nchw, (0, 2, 3, 1))                  # NCHW -> NHWC
    N, H, W, Cin = x.shape
    P = params["conv1_w"].shape[0]
    Pp = _round_up(P, _LANE)

    M1 = N * H * W
    x_rows = x.reshape(M1, Cin)

    # conv1 (1x1) + bn1 + relu
    w1 = params["conv1_w"].reshape(P, Cin).T                 # (Cin, P)
    h1 = _fused_gemm_bn_act(x_rows, w1, *params["bn1"], m_true=M1,
                            out_dtype=jnp.bfloat16)          # (M1, Pp)

    # conv2 (3x3, stride/dilation) + bn2 + relu -- im2col GEMM; the K grid
    # axis of the GEMM walks the 9 taps (tk = padded C per tap).
    # TODO(synk): the im2col patches tensor is a 9x HBM inflation of h1; a
    # fully fused variant would stream shifted spatial windows per K step.
    h1_sp = h1.reshape(N, H, W, Pp)
    patches, Ho, Wo = _im2col_3x3(h1_sp, stride, dilation)   # (M2, 9*Pp)
    M2 = N * Ho * Wo
    w2 = jnp.transpose(params["conv2_w"], (2, 3, 1, 0))      # (3,3,Pin,Pout)
    w2 = jnp.pad(w2, ((0, 0), (0, 0), (0, Pp - P), (0, 0)))  # per-tap cin pad
    w2 = w2.reshape(9 * Pp, P)
    h2 = _fused_gemm_bn_act(patches, w2, *params["bn2"], m_true=M2,
                            out_dtype=jnp.bfloat16)          # (M2, Pp)

    # conv3 (1x1) + bn3 + residual add + relu
    # TODO(synk): identity shortcut assumes stride == 1 and Cin == 4*planes.
    w3 = params["conv3_w"].reshape(4 * P, P).T               # (P, 4P)
    w3 = jnp.pad(w3, ((0, Pp - P), (0, 0)))                  # match h2's cols
    out = _fused_gemm_bn_act(h2, w3, *params["bn3"], m_true=M2,
                             residual=x_rows,
                             out_dtype=jnp.float32)          # (M2, 4P padded)

    out = out[:, :4 * P].reshape(N, Ho, Wo, 4 * P)
    return jnp.transpose(out, (0, 3, 1, 2))                  # NHWC -> NCHW


# --------------------------- reference + parameters -------------------------- #

def _reference_forward(params, x_nchw, stride=1, dilation=1):
    x = jnp.transpose(x_nchw, (0, 2, 3, 1))

    def conv(h, w_oihw, s, d, p):
        return jax.lax.conv_general_dilated(
            h, jnp.transpose(w_oihw, (2, 3, 1, 0)),
            window_strides=(s, s), padding=((p, p), (p, p)),
            rhs_dilation=(d, d), dimension_numbers=("NHWC", "HWIO", "NHWC"))

    def bn(h, gamma, beta):
        mean = jnp.mean(h, axis=(0, 1, 2), keepdims=True)
        var = jnp.mean((h - mean) ** 2, axis=(0, 1, 2), keepdims=True)
        return (h - mean) * jax.lax.rsqrt(var + _EPS) * gamma + beta

    out = jax.nn.relu(bn(conv(x, params["conv1_w"], 1, 1, 0), *params["bn1"]))
    pad = (3 * dilation - 1) // 2
    out = jax.nn.relu(bn(conv(out, params["conv2_w"], stride, dilation, pad),
                         *params["bn2"]))
    out = bn(conv(out, params["conv3_w"], 1, 1, 0), *params["bn3"])
    out = jax.nn.relu(out + x)
    return jnp.transpose(out, (0, 3, 1, 2))


def init_params(key, inplanes, planes):
    ks = jax.random.split(key, 9)

    def w(k, shape, fan_in):
        return jax.random.normal(k, shape, jnp.float32) / jnp.sqrt(float(fan_in))

    return {
        "conv1_w": w(ks[0], (planes, inplanes, 1, 1), inplanes),
        "conv2_w": w(ks[1], (planes, planes, 3, 3), planes * 9),
        "conv3_w": w(ks[2], (planes * 4, planes, 1, 1), planes),
        "bn1": (1.0 + 0.1 * jax.random.normal(ks[3], (planes,), jnp.float32),
                0.1 * jax.random.normal(ks[4], (planes,), jnp.float32)),
        "bn2": (1.0 + 0.1 * jax.random.normal(ks[5], (planes,), jnp.float32),
                0.1 * jax.random.normal(ks[6], (planes,), jnp.float32)),
        "bn3": (1.0 + 0.1 * jax.random.normal(ks[7], (planes * 4,), jnp.float32),
                0.1 * jax.random.normal(ks[8], (planes * 4,), jnp.float32)),
    }


if __name__ == "__main__":
    key = jax.random.PRNGKey(0)
    kx, kp = jax.random.split(key)

    inplanes, planes = 16, 4                 # inplanes == planes*4 (identity shortcut)
    x = jax.random.normal(kx, (2, inplanes, 16, 16), jnp.float32)   # NCHW
    params = init_params(kp, inplanes, planes)

    fwd = jax.jit(functools.partial(bottleneck_forward, stride=1, dilation=1))
    out = jax.block_until_ready(fwd(params, x))

    ref = _reference_forward(params, x, stride=1, dilation=1)
    assert out.shape == ref.shape == (2, inplanes, 16, 16), (out.shape, ref.shape)
    if not bool(jnp.allclose(out, ref, atol=5e-2, rtol=5e-2)):
        raise AssertionError(
            "mismatch vs reference, max abs diff = %g"
            % float(jnp.max(jnp.abs(out - ref))))
    print("KERNEL_OK")
</pallas_src>

<mosaic_0001>
module attributes {stable_mosaic.version = 11 : i64} {
  func.func @_bn_relu_kernel(%arg0: i32, %arg1: i32, %arg2: memref<256x128xf32, #tpu.memory_space<vmem>>, %arg3: memref<1x128xf32, #tpu.memory_space<vmem>>, %arg4: memref<1x128xf32, #tpu.memory_space<vmem>>, %arg5: memref<256x128xbf16, #tpu.memory_space<vmem>>) attributes {dimension_semantics = [#tpu.dimension_semantics<parallel>, #tpu.dimension_semantics<parallel>], iteration_bounds = array<i64: 2, 1>, scalar_prefetch = 0 : i64, scratch_operands = 0 : i64, tpu.core_type = #tpu.core_type<tc>, window_params = [{transform_indices = @transform_0, window_bounds = array<i64: 256, 128>}, {transform_indices = @transform_1, window_bounds = array<i64: 1, 128>}, {transform_indices = @transform_2, window_bounds = array<i64: 1, 128>}, {transform_indices = @transform_3, window_bounds = array<i64: 256, 128>}]} {
    %c0 = arith.constant 0 : index
    %c0_0 = arith.constant 0 : index
    %0 = vector.load %arg2[%c0, %c0_0] : memref<256x128xf32, #tpu.memory_space<vmem>>, vector<256x128xf32>
    %c0_1 = arith.constant 0 : index
    %c0_2 = arith.constant 0 : index
    %1 = vector.load %arg3[%c0_1, %c0_2] : memref<1x128xf32, #tpu.memory_space<vmem>>, vector<1x128xf32>
    %2 = vector.broadcast %1 : vector<1x128xf32> to vector<256x128xf32>
    %3 = arith.mulf %0, %2 : vector<256x128xf32>
    %c0_3 = arith.constant 0 : index
    %c0_4 = arith.constant 0 : index
    %4 = vector.load %arg4[%c0_3, %c0_4] : memref<1x128xf32, #tpu.memory_space<vmem>>, vector<1x128xf32>
    %5 = vector.broadcast %4 : vector<1x128xf32> to vector<256x128xf32>
    %6 = arith.addf %3, %5 : vector<256x128xf32>
    %cst = arith.constant 0.000000e+00 : f32
    %7 = vector.broadcast %cst : f32 to vector<256x128xf32>
    %8 = arith.maximumf %6, %7 : vector<256x128xf32>
    %9 = arith.truncf %8 : vector<256x128xf32> to vector<256x128xbf16>
    %c0_5 = arith.constant 0 : index
    %c0_6 = arith.constant 0 : index
    %10 = vector.load %arg5[%c0_5, %c0_6] : memref<256x128xbf16, #tpu.memory_space<vmem>>, vector<256x128xbf16>
    tpu.vector_store %arg5[%c0_5, %c0_6], %9 {strides = array<i32>} : memref<256x128xbf16, #tpu.memory_space<vmem>>, vector<256x128xbf16>,
    return
  }
  func.func @transform_0(%arg0: i32, %arg1: i32) -> (i32, i32) {
    %c0_i32 = arith.constant 0 : i32
    return %arg0, %arg1 : i32, i32
  }
  func.func @transform_1(%arg0: i32, %arg1: i32) -> (i32, i32) {
    %c0_i32 = arith.constant 0 : i32
    %c0_i32_0 = arith.constant 0 : i32
    return %c0_i32, %arg1 : i32, i32
  }
  func.func @transform_2(%arg0: i32, %arg1: i32) -> (i32, i32) {
    %c0_i32 = arith.constant 0 : i32
    %c0_i32_0 = arith.constant 0 : i32
    return %c0_i32, %arg1 : i32, i32
  }
  func.func @transform_3(%arg0: i32, %arg1: i32) -> (i32, i32) {
    %c0_i32 = arith.constant 0 : i32
    return %arg0, %arg1 : i32, i32
  }
}

module attributes {stable_mosaic.version = 11 : i64} {
  func.func @_gemm_colstats_kernel(%arg0: i32, %arg1: i32, %arg2: i32, %arg3: memref<256x128xbf16, #tpu.memory_space<vmem>>, %arg4: memref<128x128xbf16, #tpu.memory_space<vmem>>, %arg5: memref<256x128xf32, #tpu.memory_space<vmem>>, %arg6: memref<1x2x128xf32, #tpu.memory_space<vmem>>, %arg7: memref<256x128xf32, #tpu.memory_space<vmem>>) attributes {dimension_semantics = [#tpu.dimension_semantics<parallel>, #tpu.dimension_semantics<parallel>, #tpu.dimension_semantics<arbitrary>], iteration_bounds = array<i64: 2, 1, 1>, scalar_prefetch = 0 : i64, scratch_operands = 1 : i64, tpu.core_type = #tpu.core_type<tc>, window_params = [{transform_indices = @transform_0, window_bounds = array<i64: 256, 128>}, {transform_indices = @transform_1, window_bounds = array<i64: 128, 128>}, {transform_indices = @transform_2, window_bounds = array<i64: 256, 128>}, {transform_indices = @transform_3, window_bounds = array<i64: 1, 2, 128>}]} {
    %c0_i32 = arith.constant 0 : i32
    %0 = arith.cmpi eq, %arg2, %c0_i32 : i32
    %1 = arith.extui %0 : i1 to i32
    %c0_i32_0 = arith.constant 0 : i32
    %2 = arith.cmpi ne, %1, %c0_i32_0 : i32
    scf.if %2 {
      %cst_10 = arith.constant 0.000000e+00 : f32
      %12 = vector.broadcast %cst_10 : f32 to vector<256x128xf32>
      %c0_11 = arith.constant 0 : index
      %c0_12 = arith.constant 0 : index
      %13 = vector.load %arg7[%c0_11, %c0_12] : memref<256x128xf32, #tpu.memory_space<vmem>>, vector<256x128xf32>
      tpu.vector_store %arg7[%c0_11, %c0_12], %12 {strides = array<i32>} : memref<256x128xf32, #tpu.memory_space<vmem>>, vector<256x128xf32>,
    } else {
    }
    %c0 = arith.constant 0 : index
    %c0_1 = arith.constant 0 : index
    %3 = vector.load %arg7[%c0, %c0_1] : memref<256x128xf32, #tpu.memory_space<vmem>>, vector<256x128xf32>
    %c0_2 = arith.constant 0 : index
    %c0_3 = arith.constant 0 : index
    %4 = vector.load %arg3[%c0_2, %c0_3] : memref<256x128xbf16, #tpu.memory_space<vmem>>, vector<256x128xbf16>
    %c0_4 = arith.constant 0 : index
    %c0_5 = arith.constant 0 : index
    %5 = vector.load %arg4[%c0_4, %c0_5] : memref<128x128xbf16, #tpu.memory_space<vmem>>, vector<128x128xbf16>
    %cst = arith.constant dense<0.000000e+00> : vector<256x128xf32>
    %6 = tpu.matmul %4, %5, %cst {dimension_numbers = #tpu.dot_dimension_numbers<[1], [0], [0], [1], [0, 0, 1, 1], [], []>} : vector<256x128xbf16>, vector<128x128xbf16>, vector<256x128xf32> -> vector<256x128xf32>
    %7 = arith.addf %3, %6 : vector<256x128xf32>
    %c0_6 = arith.constant 0 : index
    %c0_7 = arith.constant 0 : index
    %8 = vector.load %arg7[%c0_6, %c0_7] : memref<256x128xf32, #tpu.memory_space<vmem>>, vector<256x128xf32>
    tpu.vector_store %arg7[%c0_6, %c0_7], %7 {strides = array<i32>} : memref<256x128xf32, #tpu.memory_space<vmem>>, vector<256x128xf32>,
    %c0_i32_8 = arith.constant 0 : i32
    %9 = arith.cmpi eq, %arg2, %c0_i32_8 : i32
    %10 = arith.extui %9 : i1 to i32
    %c0_i32_9 = arith.constant 0 : i32
    %11 = arith.cmpi ne, %10, %c0_i32_9 : i32
    scf.if %11 {
      %c0_10 = arith.constant 0 : index
      %c0_11 = arith.constant 0 : index
      %12 = vector.load %arg7[%c0_10, %c0_11] : memref<256x128xf32, #tpu.memory_space<vmem>>, vector<256x128xf32>
      %c0_12 = arith.constant 0 : index
      %c0_13 = arith.constant 0 : index
      %13 = vector.load %arg5[%c0_12, %c0_13] : memref<256x128xf32, #tpu.memory_space<vmem>>, vector<256x128xf32>
      tpu.vector_store %arg5[%c0_12, %c0_13], %12 {strides = array<i32>} : memref<256x128xf32, #tpu.memory_space<vmem>>, vector<256x128xf32>,
      %cst_14 = arith.constant dense<0.000000e+00> : vector<128xf32>
      %14 = vector.multi_reduction <add>, %12, %cst_14 [0] : vector<256x128xf32> to vector<128xf32>
      %15 = vector.shape_cast %14 : vector<128xf32> to vector<1x128xf32>
      %16 = arith.mulf %12, %12 : vector<256x128xf32>
      %cst_15 = arith.constant dense<0.000000e+00> : vector<128xf32>
      %17 = vector.multi_reduction <add>, %16, %cst_15 [0] : vector<256x128xf32> to vector<128xf32>
      %18 = vector.shape_cast %17 : vector<128xf32> to vector<1x128xf32>
      %19 = tpu.concatenate %15, %18 in 0 : vector<1x128xf32>, vector<1x128xf32> -> vector<2x128xf32>
      %20 = vector.shape_cast %19 : vector<2x128xf32> to vector<1x2x128xf32>
      %c0_16 = arith.constant 0 : index
      %c0_17 = arith.constant 0 : index
      %c0_18 = arith.constant 0 : index
      %21 = vector.load %arg6[%c0_16, %c0_17, %c0_18] : memref<1x2x128xf32, #tpu.memory_space<vmem>>, vector<1x2x128xf32>
      tpu.vector_store %arg6[%c0_16, %c0_17, %c0_18], %20 {strides = array<i32>} : memref<1x2x128xf32, #tpu.memory_space<vmem>>, vector<1x2x128xf32>,
    } else {
    }
    return
  }
  func.func @transform_0(%arg0: i32, %arg1: i32, %arg2: i32) -> (i32, i32) {
    %c0_i32 = arith.constant 0 : i32
    return %arg0, %arg2 : i32, i32
  }
  func.func @transform_1(%arg0: i32, %arg1: i32, %arg2: i32) -> (i32, i32) {
    %c0_i32 = arith.constant 0 : i32
    return %arg2, %arg1 : i32, i32
  }
  func.func @transform_2(%arg0: i32, %arg1: i32, %arg2: i32) -> (i32, i32) {
    %c0_i32 = arith.constant 0 : i32
    return %arg0, %arg1 : i32, i32
  }
  func.func @transform_3(%arg0: i32, %arg1: i32, %arg2: i32) -> (i32, i32, i32) {
    %c0_i32 = arith.constant 0 : i32
    %c0_i32_0 = arith.constant 0 : i32
    return %arg0, %c0_i32, %arg1 : i32, i32, i32
  }
}

module attributes {stable_mosaic.version = 11 : i64} {
  func.func @_gemm_colstats_kernel(%arg0: i32, %arg1: i32, %arg2: i32, %arg3: memref<256x128xbf16, #tpu.memory_space<vmem>>, %arg4: memref<128x128xbf16, #tpu.memory_space<vmem>>, %arg5: memref<256x128xf32, #tpu.memory_space<vmem>>, %arg6: memref<1x2x128xf32, #tpu.memory_space<vmem>>, %arg7: memref<256x128xf32, #tpu.memory_space<vmem>>) attributes {dimension_semantics = [#tpu.dimension_semantics<parallel>, #tpu.dimension_semantics<parallel>, #tpu.dimension_semantics<arbitrary>], iteration_bounds = array<i64: 2, 1, 9>, scalar_prefetch = 0 : i64, scratch_operands = 1 : i64, tpu.core_type = #tpu.core_type<tc>, window_params = [{transform_indices = @transform_0, window_bounds = array<i64: 256, 128>}, {transform_indices = @transform_1, window_bounds = array<i64: 128, 128>}, {transform_indices = @transform_2, window_bounds = array<i64: 256, 128>}, {transform_indices = @transform_3, window_bounds = array<i64: 1, 2, 128>}]} {
    %c0_i32 = arith.constant 0 : i32
    %0 = arith.cmpi eq, %arg2, %c0_i32 : i32
    %1 = arith.extui %0 : i1 to i32
    %c0_i32_0 = arith.constant 0 : i32
    %2 = arith.cmpi ne, %1, %c0_i32_0 : i32
    scf.if %2 {
      %cst_9 = arith.constant 0.000000e+00 : f32
      %12 = vector.broadcast %cst_9 : f32 to vector<256x128xf32>
      %c0_10 = arith.constant 0 : index
      %c0_11 = arith.constant 0 : index
      %13 = vector.load %arg7[%c0_10, %c0_11] : memref<256x128xf32, #tpu.memory_space<vmem>>, vector<256x128xf32>
      tpu.vector_store %arg7[%c0_10, %c0_11], %12 {strides = array<i32>} : memref<256x128xf32, #tpu.memory_space<vmem>>, vector<256x128xf32>,
    } else {
    }
    %c0 = arith.constant 0 : index
    %c0_1 = arith.constant 0 : index
    %3 = vector.load %arg7[%c0, %c0_1] : memref<256x128xf32, #tpu.memory_space<vmem>>, vector<256x128xf32>
    %c0_2 = arith.constant 0 : index
    %c0_3 = arith.constant 0 : index
    %4 = vector.load %arg3[%c0_2, %c0_3] : memref<256x128xbf16, #tpu.memory_space<vmem>>, vector<256x128xbf16>
    %c0_4 = arith.constant 0 : index
    %c0_5 = arith.constant 0 : index
    %5 = vector.load %arg4[%c0_4, %c0_5] : memref<128x128xbf16, #tpu.memory_space<vmem>>, vector<128x128xbf16>
    %cst = arith.constant dense<0.000000e+00> : vector<256x128xf32>
    %6 = tpu.matmul %4, %5, %cst {dimension_numbers = #tpu.dot_dimension_numbers<[1], [0], [0], [1], [0, 0, 1, 1], [], []>} : vector<256x128xbf16>, vector<128x128xbf16>, vector<256x128xf32> -> vector<256x128xf32>
    %7 = arith.addf %3, %6 : vector<256x128xf32>
    %c0_6 = arith.constant 0 : index
    %c0_7 = arith.constant 0 : index
    %8 = vector.load %arg7[%c0_6, %c0_7] : memref<256x128xf32, #tpu.memory_space<vmem>>, vector<256x128xf32>
    tpu.vector_store %arg7[%c0_6, %c0_7], %7 {strides = array<i32>} : memref<256x128xf32, #tpu.memory_space<vmem>>, vector<256x128xf32>,
    %c8_i32 = arith.constant 8 : i32
    %9 = arith.cmpi eq, %arg2, %c8_i32 : i32
    %10 = arith.extui %9 : i1 to i32
    %c0_i32_8 = arith.constant 0 : i32
    %11 = arith.cmpi ne, %10, %c0_i32_8 : i32
    scf.if %11 {
      %c0_9 = arith.constant 0 : index
      %c0_10 = arith.constant 0 : index
      %12 = vector.load %arg7[%c0_9, %c0_10] : memref<256x128xf32, #tpu.memory_space<vmem>>, vector<256x128xf32>
      %c0_11 = arith.constant 0 : index
      %c0_12 = arith.constant 0 : index
      %13 = vector.load %arg5[%c0_11, %c0_12] : memref<256x128xf32, #tpu.memory_space<vmem>>, vector<256x128xf32>
      tpu.vector_store %arg5[%c0_11, %c0_12], %12 {strides = array<i32>} : memref<256x128xf32, #tpu.memory_space<vmem>>, vector<256x128xf32>,
      %cst_13 = arith.constant dense<0.000000e+00> : vector<128xf32>
      %14 = vector.multi_reduction <add>, %12, %cst_13 [0] : vector<256x128xf32> to vector<128xf32>
      %15 = vector.shape_cast %14 : vector<128xf32> to vector<1x128xf32>
      %16 = arith.mulf %12, %12 : vector<256x128xf32>
      %cst_14 = arith.constant dense<0.000000e+00> : vector<128xf32>
      %17 = vector.multi_reduction <add>, %16, %cst_14 [0] : vector<256x128xf32> to vector<128xf32>
      %18 = vector.shape_cast %17 : vector<128xf32> to vector<1x128xf32>
      %19 = tpu.concatenate %15, %18 in 0 : vector<1x128xf32>, vector<1x128xf32> -> vector<2x128xf32>
      %20 = vector.shape_cast %19 : vector<2x128xf32> to vector<1x2x128xf32>
      %c0_15 = arith.constant 0 : index
      %c0_16 = arith.constant 0 : index
      %c0_17 = arith.constant 0 : index
      %21 = vector.load %arg6[%c0_15, %c0_16, %c0_17] : memref<1x2x128xf32, #tpu.memory_space<vmem>>, vector<1x2x128xf32>
      tpu.vector_store %arg6[%c0_15, %c0_16, %c0_17], %20 {strides = array<i32>} : memref<1x2x128xf32, #tpu.memory_space<vmem>>, vector<1x2x128xf32>,
    } else {
    }
    return
  }
  func.func @transform_0(%arg0: i32, %arg1: i32, %arg2: i32) -> (i32, i32) {
    %c0_i32 = arith.constant 0 : i32
    return %arg0, %arg2 : i32, i32
  }
  func.func @transform_1(%arg0: i32, %arg1: i32, %arg2: i32) -> (i32, i32) {
    %c0_i32 = arith.constant 0 : i32
    return %arg2, %arg1 : i32, i32
  }
  func.func @transform_2(%arg0: i32, %arg1: i32, %arg2: i32) -> (i32, i32) {
    %c0_i32 = arith.constant 0 : i32
    return %arg0, %arg1 : i32, i32
  }
  func.func @transform_3(%arg0: i32, %arg1: i32, %arg2: i32) -> (i32, i32, i32) {
    %c0_i32 = arith.constant 0 : i32
    %c0_i32_0 = arith.constant 0 : i32
    return %arg0, %c0_i32, %arg1 : i32, i32, i32
  }
}

module attributes {stable_mosaic.version = 11 : i64} {
  func.func @_bn_add_relu_kernel(%arg0: i32, %arg1: i32, %arg2: memref<256x128xf32, #tpu.memory_space<vmem>>, %arg3: memref<1x128xf32, #tpu.memory_space<vmem>>, %arg4: memref<1x128xf32, #tpu.memory_space<vmem>>, %arg5: memref<256x128xf32, #tpu.memory_space<vmem>>, %arg6: memref<256x128xf32, #tpu.memory_space<vmem>>) attributes {dimension_semantics = [#tpu.dimension_semantics<parallel>, #tpu.dimension_semantics<parallel>], iteration_bounds = array<i64: 2, 1>, scalar_prefetch = 0 : i64, scratch_operands = 0 : i64, tpu.core_type = #tpu.core_type<tc>, window_params = [{transform_indices = @transform_0, window_bounds = array<i64: 256, 128>}, {transform_indices = @transform_1, window_bounds = array<i64: 1, 128>}, {transform_indices = @transform_2, window_bounds = array<i64: 1, 128>}, {transform_indices = @transform_3, window_bounds = array<i64: 256, 128>}, {transform_indices = @transform_4, window_bounds = array<i64: 256, 128>}]} {
    %c0 = arith.constant 0 : index
    %c0_0 = arith.constant 0 : index
    %0 = vector.load %arg2[%c0, %c0_0] : memref<256x128xf32, #tpu.memory_space<vmem>>, vector<256x128xf32>
    %c0_1 = arith.constant 0 : index
    %c0_2 = arith.constant 0 : index
    %1 = vector.load %arg3[%c0_1, %c0_2] : memref<1x128xf32, #tpu.memory_space<vmem>>, vector<1x128xf32>
    %2 = vector.broadcast %1 : vector<1x128xf32> to vector<256x128xf32>
    %3 = arith.mulf %0, %2 : vector<256x128xf32>
    %c0_3 = arith.constant 0 : index
    %c0_4 = arith.constant 0 : index
    %4 = vector.load %arg4[%c0_3, %c0_4] : memref<1x128xf32, #tpu.memory_space<vmem>>, vector<1x128xf32>
    %5 = vector.broadcast %4 : vector<1x128xf32> to vector<256x128xf32>
    %6 = arith.addf %3, %5 : vector<256x128xf32>
    %c0_5 = arith.constant 0 : index
    %c0_6 = arith.constant 0 : index
    %7 = vector.load %arg5[%c0_5, %c0_6] : memref<256x128xf32, #tpu.memory_space<vmem>>, vector<256x128xf32>
    %8 = arith.addf %6, %7 : vector<256x128xf32>
    %cst = arith.constant 0.000000e+00 : f32
    %9 = vector.broadcast %cst : f32 to vector<256x128xf32>
    %10 = arith.maximumf %8, %9 : vector<256x128xf32>
    %c0_7 = arith.constant 0 : index
    %c0_8 = arith.constant 0 : index
    %11 = vector.load %arg6[%c0_7, %c0_8] : memref<256x128xf32, #tpu.memory_space<vmem>>, vector<256x128xf32>
    tpu.vector_store %arg6[%c0_7, %c0_8], %10 {strides = array<i32>} : memref<256x128xf32, #tpu.memory_space<vmem>>, vector<256x128xf32>,
    return
  }
  func.func @transform_0(%arg0: i32, %arg1: i32) -> (i32, i32) {
    %c0_i32 = arith.constant 0 : i32
    return %arg0, %arg1 : i32, i32
  }
  func.func @transform_1(%arg0: i32, %arg1: i32) -> (i32, i32) {
    %c0_i32 = arith.constant 0 : i32
    %c0_i32_0 = arith.constant 0 : i32
    return %c0_i32, %arg1 : i32, i32
  }
  func.func @transform_2(%arg0: i32, %arg1: i32) -> (i32, i32) {
    %c0_i32 = arith.constant 0 : i32
    %c0_i32_0 = arith.constant 0 : i32
    return %c0_i32, %arg1 : i32, i32
  }
  func.func @transform_3(%arg0: i32, %arg1: i32) -> (i32, i32) {
    %c0_i32 = arith.constant 0 : i32
    return %arg0, %arg1 : i32, i32
  }
  func.func @transform_4(%arg0: i32, %arg1: i32) -> (i32, i32) {
    %c0_i32 = arith.constant 0 : i32
    return %arg0, %arg1 : i32, i32
  }
}

</mosaic_0001>

<llo_original>
// kernel: bottleneck_forward.7
$region0: #{bottleneck_forward.7}
  #allocation0 [shape = 'u32[]', space=smem, size = 0x4, offset = 0x4, fixed_abs, tag = 'smem constant byte address 0x4 - core index']
  #allocation1 [shape = 'u32[144,128]{1,0:T(1,128)}', space=vmem, size = 0x12000, scoped, tag = 'internal scratch']
  %s0 = inlined_call_operand.vmem [shape: f32[512,128], index: 0, kind: input, shape index: {}]
  %s1 = inlined_call_operand.vmem [shape: f32[1,128], index: 1, kind: input, shape index: {}]
  %s2 = inlined_call_operand.vmem [shape: f32[1,128], index: 2, kind: input, shape index: {}]
  %s3 = inlined_call_operand.vmem [shape: bf16[512,128], index: 3, kind: output, shape index: {}]
  %s4 = sld [smem:[#allocation0]]
  $region45: #{bottleneck_forward.7} parent=0
    _
  %s6 = ssub.s32 1, %s4
  %s7 = scalar_select 0, %s6, %s4
  loop: start=0, step=1, limit=4
  $region2: #{bottleneck_forward.7} parent=0 // loop_pre_header
    _
  $region3: #{bottleneck_forward.7} parent=0 // loop_header
    %s9 = sphi 0, %s13
    %p10 = scmp.ge.s32.totalorder %s9, 4
    %s16 = sphi 0, %s28
    %s17 = sphi 0, %s24
    %s18 = sphi 0, %s16
    %s19 = sphi 0, %s17
    %s20 = sphi 0, %s18
    %s21 = sphi 0, %s19
    %s33 = sphi 0, %s35
    %s36 = sphi 0, %s33
    %s37 = sphi 0, %s36
    %s53 = sphi 0, %s37
    %s59 = sphi 0, %s61
    %s62 = sphi 0, %s59
    %s63 = sphi 0, %s62
    %s79 = sphi 0, %s63
    %s85 = sphi 0, %s87
    %s88 = sphi 0, %s85
    %s89 = sphi 0, %s88
    %s105 = sphi 0, %s89
    %s113 = sphi 0, %s115
    %s116 = sphi 0, %s113
    %s117 = sphi 0, %s116
    %s133 = sphi 0, %s117
  $region4: #{bottleneck_forward.7} parent=0 // loop_header_branch
    %12 = sbr.rel (%p10) target = $region8
  $region5: #{bottleneck_forward.7} parent=0 // loop_body
    %s14 = ssub.s32 %s9, 1
    %s15 = ssub.s32 %s9, 2
    %s22 = sadd.s32 1, %s17
    %p23 = scmp.ge.s32.totalorder %s22, 1
    %s24 = scalar_select %p23, 0, %s22
    %s25 = sadd.s32 1, %s16
    %s26 = scalar_select %p23, %s25, %s16
    %p27 = scmp.ge.s32.totalorder %s26, 2
    %s28 = scalar_select %p27, 0, %s26
    %s29 = ssub.s32 %s16, %s28
    %s30 = ssub.s32 %s17, %s24
    %s31 = sor.u32 %s29, %s30
    %p32 = scmp.eq.s32.totalorder %s31, 0
    %s34 = sadd.s32 %s33, 1
    %s35 = scalar_select %p32, %s33, %s34
    %p38 = pneg %p32
    %p39 = scmp.eq.s32.totalorder %s9, 1
    %p40 = por %p38, %p39
    %p41 = scmp.ne.s32.totalorder %s33, %s36
    %p42 = scmp.eq.s32.totalorder %s9, 0
    %p43 = por %p41, %p42
    %p44 = scmp.ne.s32.totalorder %s33, %s36
    %p45 = scmp.eq.s32.totalorder %s14, 1
    %p46 = por %p44, %p45
    %p47 = scmp.ne.s32.totalorder %s36, %s37
    %p48 = scmp.eq.s32.totalorder %s14, 0
    %p49 = por %p47, %p48
    %p50 = scmp.ne.s32.totalorder %s36, %s37
    %p51 = scmp.eq.s32.totalorder %s15, 1
    %p52 = por %p50, %p51
    %p54 = scmp.ne.s32.totalorder %s37, %s53
    %p55 = scmp.eq.s32.totalorder %s15, 0
    %p56 = por %p54, %p55
    %s57 = ssub.s32 %s17, %s24
    %p58 = scmp.eq.s32.totalorder %s57, 0
    %s60 = sadd.s32 %s59, 1
    %s61 = scalar_select %p58, %s59, %s60
    %p64 = pneg %p58
    %p65 = scmp.eq.s32.totalorder %s9, 1
    %p66 = por %p64, %p65
    %p67 = scmp.ne.s32.totalorder %s59, %s62
    %p68 = scmp.eq.s32.totalorder %s9, 0
    %p69 = por %p67, %p68
    %p70 = scmp.ne.s32.totalorder %s59, %s62
    %p71 = scmp.eq.s32.totalorder %s14, 1
    %p72 = por %p70, %p71
    %p73 = scmp.ne.s32.totalorder %s62, %s63
    %p74 = scmp.eq.s32.totalorder %s14, 0
    %p75 = por %p73, %p74
    %p76 = scmp.ne.s32.totalorder %s62, %s63
    %p77 = scmp.eq.s32.totalorder %s15, 1
    %p78 = por %p76, %p77
    %p80 = scmp.ne.s32.totalorder %s63, %s79
    %p81 = scmp.eq.s32.totalorder %s15, 0
    %p82 = por %p80, %p81
    %s83 = ssub.s32 %s17, %s24
    %p84 = scmp.eq.s32.totalorder %s83, 0
    %s86 = sadd.s32 %s85, 1
    %s87 = scalar_select %p84, %s85, %s86
    %p90 = pneg %p84
    %p91 = scmp.eq.s32.totalorder %s9, 1
    %p92 = por %p90, %p91
    %p93 = scmp.ne.s32.totalorder %s85, %s88
    %p94 = scmp.eq.s32.totalorder %s9, 0
    %p95 = por %p93, %p94
    %p96 = scmp.ne.s32.totalorder %s85, %s88
    %p97 = scmp.eq.s32.totalorder %s14, 1
    %p98 = por %p96, %p97
    %p99 = scmp.ne.s32.totalorder %s88, %s89
    %p100 = scmp.eq.s32.totalorder %s14, 0
    %p101 = por %p99, %p100
    %p102 = scmp.ne.s32.totalorder %s88, %s89
    %p103 = scmp.eq.s32.totalorder %s15, 1
    %p104 = por %p102, %p103
    %p106 = scmp.ne.s32.totalorder %s89, %s105
    %p107 = scmp.eq.s32.totalorder %s15, 0
    %p108 = por %p106, %p107
    %s109 = ssub.s32 %s16, %s28
    %s110 = ssub.s32 %s17, %s24
    %s111 = sor.u32 %s109, %s110
    %p112 = scmp.eq.s32.totalorder %s111, 0
    %s114 = sadd.s32 %s113, 1
    %s115 = scalar_select %p112, %s113, %s114
    %p118 = pneg %p112
    %p119 = scmp.eq.s32.totalorder %s9, 1
    %p120 = por %p118, %p119
    %p121 = scmp.ne.s32.totalorder %s113, %s116
    %p122 = scmp.eq.s32.totalorder %s9, 0
    %p123 = por %p121, %p122
    %p124 = scmp.ne.s32.totalorder %s113, %s116
    %p125 = scmp.eq.s32.totalorder %s14, 1
    %p126 = por %p124, %p125
    %p127 = scmp.ne.s32.totalorder %s116, %s117
    %p128 = scmp.eq.s32.totalorder %s14, 0
    %p129 = por %p127, %p128
    %p130 = scmp.ne.s32.totalorder %s116, %s117
    %p131 = scmp.eq.s32.totalorder %s15, 1
    %p132 = por %p130, %p131
    %p134 = scmp.ne.s32.totalorder %s117, %s133
    %p135 = scmp.eq.s32.totalorder %s15, 0
    %p136 = por %p134, %p135
    %p137 = scmp.le.s32.totalorder 1, %s9
    %p138 = scmp.lt.s32.totalorder %s9, 3
    %p139 = pnand %p137, %p138
    %p140 = pneg %p139
    // Predicated region
    $region9: #{bottleneck_forward.7} parent=5 // pred_check
      _
    $region10: #{bottleneck_forward.7} parent=5 // pred_check_branch
      %142 = sbr.rel (%p139) target = $region12
    $region11: #{bottleneck_forward.7} parent=5 // pred_region
      %s143 = ssub.s32 %s9, 1
      // Predicated region
      $region13: #{bottleneck_forward.7} parent=11 // pred_check
        %p144 = pneg %p75
      $region14: #{bottleneck_forward.7} parent=11 // pred_check_branch
        %146 = sbr.rel (%p144) target = $region16
      $region15: #{bottleneck_forward.7} parent=11 // pred_region
        %p147 = scmp.lt.s32.totalorder %s19, 0
        %s148 = scalar_select %p147, %s19, 0
        %s149 = scalar_lea.vmem %s1, %s148
      $region16: #{bottleneck_forward.7} parent=11 // pred_fallthru
        _
      // Predicated region
      $region17: #{bottleneck_forward.7} parent=11 // pred_check
        %p150 = pneg %p101
      $region18: #{bottleneck_forward.7} parent=11 // pred_check_branch
        %152 = sbr.rel (%p150) target = $region20
      $region19: #{bottleneck_forward.7} parent=11 // pred_region
        %p153 = scmp.lt.s32.totalorder %s19, 0
        %s154 = scalar_select %p153, %s19, 0
        %s155 = scalar_lea.vmem %s2, %s154
      $region20: #{bottleneck_forward.7} parent=11 // pred_fallthru
        _
    $region12: #{bottleneck_forward.7} parent=5 // pred_fallthru
      _
    %p156 = scmp.lt.s32.totalorder %s9, 2
    // Predicated region
    $region21: #{bottleneck_forward.7} parent=5 // pred_check
      %p157 = pneg %p156
    $region22: #{bottleneck_forward.7} parent=5 // pred_check_branch
      %159 = sbr.rel (%p157) target = $region24
    $region23: #{bottleneck_forward.7} parent=5 // pred_region
      // Predicated region
      $region25: #{bottleneck_forward.7} parent=23 // pred_check
        %p160 = pneg %p43
      $region26: #{bottleneck_forward.7} parent=23 // pred_check_branch
        %162 = sbr.rel (%p160) target = $region28
      $region27: #{bottleneck_forward.7} parent=23 // pred_region
        %s163 = smul.u32 32, %s16
        %p164 = scmp.lt.s32.totalorder %s163, 63
        %s165 = scalar_select %p164, %s163, 63
        %p166 = scmp.lt.s32.totalorder %s17, 0
        %s167 = scalar_select %p166, %s17, 0
        %s168 = sadd.s32 %s167, %s165
        %s169 = smul.addr %s168, 8
        %s170 = scalar_lea.vmem %s0, %s169
        %s171 = smul.u32 32, %s16
      $region28: #{bottleneck_forward.7} parent=23 // pred_fallthru
        _
    $region24: #{bottleneck_forward.7} parent=5 // pred_fallthru
      _
    %p172 = scmp.le.s32.totalorder 1, %s9
    %p173 = scmp.lt.s32.totalorder %s9, 3
    %p174 = pnand %p172, %p173
    %p175 = pneg %p174
    // Predicated region
    $region29: #{bottleneck_forward.7} parent=5 // pred_check
      _
    $region30: #{bottleneck_forward.7} parent=5 // pred_check_branch
      %177 = sbr.rel (%p174) target = $region32
    $region31: #{bottleneck_forward.7} parent=5 // pred_region
      %s178 = ssub.s32 %s9, 1
      %s179 = smul.u32 32, %s18
      %p180 = scmp.lt.s32.totalorder %s179, 63
      %s181 = scalar_select %p180, %s179, 63
      %p182 = scmp.lt.s32.totalorder %s19, 0
      %s183 = scalar_select %p182, %s19, 0
      %s184 = sadd.s32 %s183, %s181
      %s185 = smul.addr %s184, 8
      %s186 = scalar_lea.vmem %s0, %s185
      %p187 = pneg %p49
      %p188 = pneg %p46
      %p189 = scmp.lt.s32.totalorder %s19, 0
      %s190 = scalar_select %p189, %s19, 0
      %s191 = scalar_lea.vmem %s1, %s190
      %p192 = pneg %p75
      %p193 = pneg %p72
      %p194 = scmp.lt.s32.totalorder %s19, 0
      %s195 = scalar_select %p194, %s19, 0
      %s196 = scalar_lea.vmem %s2, %s195
      %p197 = pneg %p101
      %p198 = pneg %p98
      %p199 = pneg %p129
      %p200 = pneg %p126
      %s201 = smul.u32 32, %s18
      %p202 = scmp.lt.s32.totalorder %s201, 63
      %s203 = scalar_select %p202, %s201, 63
      %p204 = scmp.lt.s32.totalorder %s19, 0
      %s205 = scalar_select %p204, %s19, 0
      %s206 = sadd.s32 %s205, %s203
      %s207 = smul.addr %s206, 4
      %s208 = scalar_lea.vmem %s3, %s207
      %s209 = smul.u32 32, %s18
      %p210 = scmp.lt.s32.totalorder %s209, 63
      %s211 = scalar_select %p210, %s209, 63
      %p212 = scmp.lt.s32.totalorder %s19, 0
      %s213 = scalar_select %p212, %s19, 0
      %s214 = sadd.s32 %s213, %s211
      %s215 = smul.addr %s214, 8
      %s216 = scalar_lea.vmem %s0, %s215
      %s217 = smul.u32 32, %s18
      %p218 = scmp.lt.s32.totalorder %s19, 0
      %s219 = scalar_select %p218, %s19, 0
      %s220 = scalar_lea.vmem %s1, %s219
      %p221 = scmp.lt.s32.totalorder %s19, 0
      %s222 = scalar_select %p221, %s19, 0
      %s223 = scalar_lea.vmem %s2, %s222
      %s224 = smul.u32 32, %s18
      %p225 = scmp.lt.s32.totalorder %s224, 63
      %s226 = scalar_select %p225, %s224, 63
      %p227 = scmp.lt.s32.totalorder %s19, 0
      %s228 = scalar_select %p227, %s19, 0
      %s229 = sadd.s32 %s228, %s226
      %s230 = smul.addr %s229, 4
      %s231 = scalar_lea.vmem %s3, %s230
      %s232 = smul.u32 32, %s18
      %v233 = vld [vmem:[%s216] sm:$0xff]
      %v234 = vld [vmem:[%s216 + $0x8] sm:$0xff]
      %v235 = vld [vmem:[%s216 + $0x10] sm:$0xff]
      %v236 = vld [vmem:[%s216 + $0x18] sm:$0xff]
      %v237 = vld [vmem:[%s216 + $0x20] sm:$0xff]
      %v238 = vld [vmem:[%s216 + $0x28] sm:$0xff]
      %v239 = vld [vmem:[%s216 + $0x30] sm:$0xff]
      %v240 = vld [vmem:[%s216 + $0x38] sm:$0xff]
      %v241 = vld [vmem:[%s216 + $0x40] sm:$0xff]
      %v242 = vld [vmem:[%s216 + $0x48] sm:$0xff]
      %v243 = vld [vmem:[%s216 + $0x50] sm:$0xff]
      %v244 = vld [vmem:[%s216 + $0x58] sm:$0xff]
      %v245 = vld [vmem:[%s216 + $0x60] sm:$0xff]
      %v246 = vld [vmem:[%s216 + $0x68] sm:$0xff]
      %v247 = vld [vmem:[%s216 + $0x70] sm:$0xff]
      %v248 = vld [vmem:[%s216 + $0x78] sm:$0xff]
      %v249 = vld [vmem:[%s216 + $0x80] sm:$0xff]
      %v250 = vld [vmem:[%s216 + $0x88] sm:$0xff]
      %v251 = vld [vmem:[%s216 + $0x90] sm:$0xff]
      %v252 = vld [vmem:[%s216 + $0x98] sm:$0xff]
      %v253 = vld [vmem:[%s216 + $0xa0] sm:$0xff]
      %v254 = vld [vmem:[%s216 + $0xa8] sm:$0xff]
      %v255 = vld [vmem:[%s216 + $0xb0] sm:$0xff]
      %v256 = vld [vmem:[%s216 + $0xb8] sm:$0xff]
      %v257 = vld [vmem:[%s216 + $0xc0] sm:$0xff]
      %v258 = vld [vmem:[%s216 + $0xc8] sm:$0xff]
      %v259 = vld [vmem:[%s216 + $0xd0] sm:$0xff]
      %v260 = vld [vmem:[%s216 + $0xd8] sm:$0xff]
      %v261 = vld [vmem:[%s216 + $0xe0] sm:$0xff]
      %v262 = vld [vmem:[%s216 + $0xe8] sm:$0xff]
      %v263 = vld [vmem:[%s216 + $0xf0] sm:$0xff]
      %v264 = vld [vmem:[%s216 + $0xf8] sm:$0xff]
      %v265 = vld [vmem:[%s220] sm:$0x1]
      %v267 = vlaneseq
      %v268 = vshrl.u32 %v267, 7
      %v269 = vsub.s32 0, %v268
      %v270 = vrot.slane %v265, %v269
      %v272 = vmul.f32 %v233, %v270
      %v273 = vmul.f32 %v234, %v270
      %v274 = vmul.f32 %v235, %v270
      %v275 = vmul.f32 %v236, %v270
      %v276 = vmul.f32 %v237, %v270
      %v277 = vmul.f32 %v238, %v270
      %v278 = vmul.f32 %v239, %v270
      %v279 = vmul.f32 %v240, %v270
      %v280 = vmul.f32 %v241, %v270
      %v281 = vmul.f32 %v242, %v270
      %v282 = vmul.f32 %v243, %v270
      %v283 = vmul.f32 %v244, %v270
      %v284 = vmul.f32 %v245, %v270
      %v285 = vmul.f32 %v246, %v270
      %v286 = vmul.f32 %v247, %v270
      %v287 = vmul.f32 %v248, %v270
      %v288 = vmul.f32 %v249, %v270
      %v289 = vmul.f32 %v250, %v270
      %v290 = vmul.f32 %v251, %v270
      %v291 = vmul.f32 %v252, %v270
      %v292 = vmul.f32 %v253, %v270
      %v293 = vmul.f32 %v254, %v270
      %v294 = vmul.f32 %v255, %v270
      %v295 = vmul.f32 %v256, %v270
      %v296 = vmul.f32 %v257, %v270
      %v297 = vmul.f32 %v258, %v270
      %v298 = vmul.f32 %v259, %v270
      %v299 = vmul.f32 %v260, %v270
      %v300 = vmul.f32 %v261, %v270
      %v301 = vmul.f32 %v262, %v270
      %v302 = vmul.f32 %v263, %v270
      %v303 = vmul.f32 %v264, %v270
      %v304 = vld [vmem:[%s223] sm:$0x1]
      %v306 = vlaneseq
      %v307 = vshrl.u32 %v306, 7
      %v308 = vsub.s32 0, %v307
      %v309 = vrot.slane %v304, %v308
      %v311 = vadd.f32 %v272, %v309
      %v312 = vadd.f32 %v273, %v309
      %v313 = vadd.f32 %v274, %v309
      %v314 = vadd.f32 %v275, %v309
      %v315 = vadd.f32 %v276, %v309
      %v316 = vadd.f32 %v277, %v309
      %v317 = vadd.f32 %v278, %v309
      %v318 = vadd.f32 %v279, %v309
      %v319 = vadd.f32 %v280, %v309
      %v320 = vadd.f32 %v281, %v309
      %v321 = vadd.f32 %v282, %v309
      %v322 = vadd.f32 %v283, %v309
      %v323 = vadd.f32 %v284, %v309
      %v324 = vadd.f32 %v285, %v309
      %v325 = vadd.f32 %v286, %v309
      %v326 = vadd.f32 %v287, %v309
      %v327 = vadd.f32 %v288, %v309
      %v328 = vadd.f32 %v289, %v309
      %v329 = vadd.f32 %v290, %v309
      %v330 = vadd.f32 %v291, %v309
      %v331 = vadd.f32 %v292, %v309
      %v332 = vadd.f32 %v293, %v309
      %v333 = vadd.f32 %v294, %v309
      %v334 = vadd.f32 %v295, %v309
      %v335 = vadd.f32 %v296, %v309
      %v336 = vadd.f32 %v297, %v309
      %v337 = vadd.f32 %v298, %v309
      %v338 = vadd.f32 %v299, %v309
      %v339 = vadd.f32 %v300, %v309
      %v340 = vadd.f32 %v301, %v309
      %v341 = vadd.f32 %v302, %v309
      %v342 = vadd.f32 %v303, %v309
      %v343 = vmax.f32 %v311, 0.0
      %v344 = vmax.f32 %v312, 0.0
      %v345 = vmax.f32 %v313, 0.0
      %v346 = vmax.f32 %v314, 0.0
      %v347 = vmax.f32 %v315, 0.0
      %v348 = vmax.f32 %v316, 0.0
      %v349 = vmax.f32 %v317, 0.0
      %v350 = vmax.f32 %v318, 0.0
      %v351 = vmax.f32 %v319, 0.0
      %v352 = vmax.f32 %v320, 0.0
      %v353 = vmax.f32 %v321, 0.0
      %v354 = vmax.f32 %v322, 0.0
      %v355 = vmax.f32 %v323, 0.0
      %v356 = vmax.f32 %v324, 0.0
      %v357 = vmax.f32 %v325, 0.0
      %v358 = vmax.f32 %v326, 0.0
      %v359 = vmax.f32 %v327, 0.0
      %v360 = vmax.f32 %v328, 0.0
      %v361 = vmax.f32 %v329, 0.0
      %v362 = vmax.f32 %v330, 0.0
      %v363 = vmax.f32 %v331, 0.0
      %v364 = vmax.f32 %v332, 0.0
      %v365 = vmax.f32 %v333, 0.0
      %v366 = vmax.f32 %v334, 0.0
      %v367 = vmax.f32 %v335, 0.0
      %v368 = vmax.f32 %v336, 0.0
      %v369 = vmax.f32 %v337, 0.0
      %v370 = vmax.f32 %v338, 0.0
      %v371 = vmax.f32 %v339, 0.0
      %v372 = vmax.f32 %v340, 0.0
      %v373 = vmax.f32 %v341, 0.0
      %v374 = vmax.f32 %v342, 0.0
      %v375 = vpack.c.bf16 %v344, %v343
      %v376 = vpack.c.bf16 %v346, %v345
      %v377 = vpack.c.bf16 %v348, %v347
      %v378 = vpack.c.bf16 %v350, %v349
      %v379 = vpack.c.bf16 %v352, %v351
      %v380 = vpack.c.bf16 %v354, %v353
      %v381 = vpack.c.bf16 %v356, %v355
      %v382 = vpack.c.bf16 %v358, %v357
      %v383 = vpack.c.bf16 %v360, %v359
      %v384 = vpack.c.bf16 %v362, %v361
      %v385 = vpack.c.bf16 %v364, %v363
      %v386 = vpack.c.bf16 %v366, %v365
      %v387 = vpack.c.bf16 %v368, %v367
      %v388 = vpack.c.bf16 %v370, %v369
      %v389 = vpack.c.bf16 %v372, %v371
      %v390 = vpack.c.bf16 %v374, %v373
      %v407 = vunpack.c.l.b16 %v375
      %v408 = vunpack.c.h.b16 %v375
      %v409 = vunpack.c.l.b16 %v376
      %v410 = vunpack.c.h.b16 %v376
      %v411 = vunpack.c.l.b16 %v377
      %v412 = vunpack.c.h.b16 %v377
      %v413 = vunpack.c.l.b16 %v378
      %v414 = vunpack.c.h.b16 %v378
      %v415 = vunpack.c.l.b16 %v379
      %v416 = vunpack.c.h.b16 %v379
      %v417 = vunpack.c.l.b16 %v380
      %v418 = vunpack.c.h.b16 %v380
      %v419 = vunpack.c.l.b16 %v381
      %v420 = vunpack.c.h.b16 %v381
      %v421 = vunpack.c.l.b16 %v382
      %v422 = vunpack.c.h.b16 %v382
      %v423 = vunpack.c.l.b16 %v383
      %v424 = vunpack.c.h.b16 %v383
      %v425 = vunpack.c.l.b16 %v384
      %v426 = vunpack.c.h.b16 %v384
      %v427 = vunpack.c.l.b16 %v385
      %v428 = vunpack.c.h.b16 %v385
      %v429 = vunpack.c.l.b16 %v386
      %v430 = vunpack.c.h.b16 %v386
      %v431 = vunpack.c.l.b16 %v387
      %v432 = vunpack.c.h.b16 %v387
      %v433 = vunpack.c.l.b16 %v388
      %v434 = vunpack.c.h.b16 %v388
      %v435 = vunpack.c.l.b16 %v389
      %v436 = vunpack.c.h.b16 %v389
      %v437 = vunpack.c.l.b16 %v390
      %v438 = vunpack.c.h.b16 %v390
      %v439 = vpack.c.b16 %v407, %v407
      %v440 = vpack.c.b16 %v408, %v408
      %v441 = vpack.c.b16 %v409, %v409
      %v442 = vpack.c.b16 %v410, %v410
      %v443 = vpack.c.b16 %v411, %v411
      %v444 = vpack.c.b16 %v412, %v412
      %v445 = vpack.c.b16 %v413, %v413
      %v446 = vpack.c.b16 %v414, %v414
      %v447 = vpack.c.b16 %v415, %v415
      %v448 = vpack.c.b16 %v416, %v416
      %v449 = vpack.c.b16 %v417, %v417
      %v450 = vpack.c.b16 %v418, %v418
      %v451 = vpack.c.b16 %v419, %v419
      %v452 = vpack.c.b16 %v420, %v420
      %v453 = vpack.c.b16 %v421, %v421
      %v454 = vpack.c.b16 %v422, %v422
      %v455 = vpack.c.b16 %v423, %v423
      %v456 = vpack.c.b16 %v424, %v424
      %v457 = vpack.c.b16 %v425, %v425
      %v458 = vpack.c.b16 %v426, %v426
      %v459 = vpack.c.b16 %v427, %v427
      %v460 = vpack.c.b16 %v428, %v428
      %v461 = vpack.c.b16 %v429, %v429
      %v462 = vpack.c.b16 %v430, %v430
      %v463 = vpack.c.b16 %v431, %v431
      %v464 = vpack.c.b16 %v432, %v432
      %v465 = vpack.c.b16 %v433, %v433
      %v466 = vpack.c.b16 %v434, %v434
      %v467 = vpack.c.b16 %v435, %v435
      %v468 = vpack.c.b16 %v436, %v436
      %v469 = vpack.c.b16 %v437, %v437
      %v470 = vpack.c.b16 %v438, %v438
      %503 = vst [vmem:[%s231] sm:$0xf] %v439
      %504 = vst [vmem:[%s231 + $0x4] sm:$0xf] %v440
      %505 = vst [vmem:[%s231 + $0x8] sm:$0xf] %v441
      %506 = vst [vmem:[%s231 + $0xc] sm:$0xf] %v442
      %507 = vst [vmem:[%s231 + $0x10] sm:$0xf] %v443
      %508 = vst [vmem:[%s231 + $0x14] sm:$0xf] %v444
      %509 = vst [vmem:[%s231 + $0x18] sm:$0xf] %v445
      %510 = vst [vmem:[%s231 + $0x1c] sm:$0xf] %v446
      %511 = vst [vmem:[%s231 + $0x20] sm:$0xf] %v447
      %512 = vst [vmem:[%s231 + $0x24] sm:$0xf] %v448
      %513 = vst [vmem:[%s231 + $0x28] sm:$0xf] %v449
      %514 = vst [vmem:[%s231 + $0x2c] sm:$0xf] %v450
      %515 = vst [vmem:[%s231 + $0x30] sm:$0xf] %v451
      %516 = vst [vmem:[%s231 + $0x34] sm:$0xf] %v452
      %517 = vst [vmem:[%s231 + $0x38] sm:$0xf] %v453
      %518 = vst [vmem:[%s231 + $0x3c] sm:$0xf] %v454
      %519 = vst [vmem:[%s231 + $0x40] sm:$0xf] %v455
      %520 = vst [vmem:[%s231 + $0x44] sm:$0xf] %v456
      %521 = vst [vmem:[%s231 + $0x48] sm:$0xf] %v457
      %522 = vst [vmem:[%s231 + $0x4c] sm:$0xf] %v458
      %523 = vst [vmem:[%s231 + $0x50] sm:$0xf] %v459
      %524 = vst [vmem:[%s231 + $0x54] sm:$0xf] %v460
      %525 = vst [vmem:[%s231 + $0x58] sm:$0xf] %v461
      %526 = vst [vmem:[%s231 + $0x5c] sm:$0xf] %v462
      %527 = vst [vmem:[%s231 + $0x60] sm:$0xf] %v463
      %528 = vst [vmem:[%s231 + $0x64] sm:$0xf] %v464
      %529 = vst [vmem:[%s231 + $0x68] sm:$0xf] %v465
      %530 = vst [vmem:[%s231 + $0x6c] sm:$0xf] %v466
      %531 = vst [vmem:[%s231 + $0x70] sm:$0xf] %v467
      %532 = vst [vmem:[%s231 + $0x74] sm:$0xf] %v468
      %533 = vst [vmem:[%s231 + $0x78] sm:$0xf] %v469
      %534 = vst [vmem:[%s231 + $0x7c] sm:$0xf] %v470
      %s535 = smul.u32 32, %s18
      %p536 = scmp.lt.s32.totalorder %s535, 63
      %s537 = scalar_select %p536, %s535, 63
      %p538 = scmp.lt.s32.totalorder %s19, 0
      %s539 = scalar_select %p538, %s19, 0
      %s540 = sadd.s32 %s539, %s537
      %s541 = smul.addr %s540, 4
      %s542 = scalar_lea.vmem %s3, %s541
      // Predicated region
      $region33: #{bottleneck_forward.7} parent=31 // pred_check
        %p543 = pneg %p126
      $region34: #{bottleneck_forward.7} parent=31 // pred_check_branch
        %545 = sbr.rel (%p543) target = $region36
      $region35: #{bottleneck_forward.7} parent=31 // pred_region
        %s546 = smul.u32 32, %s18
      $region36: #{bottleneck_forward.7} parent=31 // pred_fallthru
        _
    $region32: #{bottleneck_forward.7} parent=5 // pred_fallthru
      _
    %p547 = scmp.le.s32.totalorder 2, %s9
    // Predicated region
    $region37: #{bottleneck_forward.7} parent=5 // pred_check
      %p548 = pneg %p547
    $region38: #{bottleneck_forward.7} parent=5 // pred_check_branch
      %550 = sbr.rel (%p548) target = $region40
    $region39: #{bottleneck_forward.7} parent=5 // pred_region
      %s551 = ssub.s32 %s9, 2
      // Predicated region
      $region41: #{bottleneck_forward.7} parent=39 // pred_check
        %p552 = pneg %p132
      $region42: #{bottleneck_forward.7} parent=39 // pred_check_branch
        %554 = sbr.rel (%p552) target = $region44
      $region43: #{bottleneck_forward.7} parent=39 // pred_region
        %s555 = smul.u32 32, %s20
        %p556 = scmp.lt.s32.totalorder %s555, 63
        %s557 = scalar_select %p556, %s555, 63
        %p558 = scmp.lt.s32.totalorder %s21, 0
        %s559 = scalar_select %p558, %s21, 0
        %s560 = sadd.s32 %s559, %s557
        %s561 = smul.addr %s560, 4
        %s562 = scalar_lea.vmem %s3, %s561
      $region44: #{bottleneck_forward.7} parent=39 // pred_fallthru
        _
    $region40: #{bottleneck_forward.7} parent=5 // pred_fallthru
      _
  $region6: #{bottleneck_forward.7} parent=0 // loop_footer
    %s13 = sadd.s32 1, %s9
  $region7: #{bottleneck_forward.7} parent=0 // loop_footer_branch
    %8 = sbr.rel target = $region3
  $region8: #{bottleneck_forward.7} parent=0 // loop_exit
    _

// kernel: bottleneck_forward.6
$region0: #{bottleneck_forward.6}
  #allocation0 [shape = 'u32[]', space=smem, size = 0x4, offset = 0x4, fixed_abs, tag = 'smem constant byte address 0x4 - core index']
  #allocation1 [shape = 'u32[144,128]{1,0:T(1,128)}', space=vmem, size = 0x12000, scoped, tag = 'internal scratch']
  #allocation2 [shape = 'f32[256,128]{1,0:T(8,128)}', space=vmem, size = 0x20000, scoped, tag = 'scratch operand']
  %s0 = inlined_call_operand.vmem [shape: bf16[512,128], index: 0, kind: input, shape index: {}]
  %s1 = inlined_call_operand.vmem [shape: bf16[128,128], index: 1, kind: input, shape index: {}]
  %s2 = inlined_call_operand.vmem [shape: f32[512,128], index: 2, kind: output, shape index: {0}]
  %s3 = inlined_call_operand.vmem [shape: f32[2,2,128], index: 3, kind: output, shape index: {1}]
  %4 = xla_tuple %s2, %s3
  %s5 = sld [smem:[#allocation0]]
  $region57: #{bottleneck_forward.6} parent=0
    _
  %s7 = ssub.s32 1, %s5
  %s8 = scalar_select 0, %s7, %s5
  loop: start=0, step=1, limit=4
  $region2: #{bottleneck_forward.6} parent=0 // loop_pre_header
    _
  $region3: #{bottleneck_forward.6} parent=0 // loop_header
    %s10 = sphi 0, %s14
    %p11 = scmp.ge.s32.totalorder %s10, 4
    %s17 = sphi 0, %s36
    %s18 = sphi 0, %s32
    %s19 = sphi 0, %s28
    %s20 = sphi 0, %s17
    %s21 = sphi 0, %s18
    %s22 = sphi 0, %s19
    %s23 = sphi 0, %s20
    %s24 = sphi 0, %s21
    %s25 = sphi 0, %s22
    %s41 = sphi 0, %s43
    %s44 = sphi 0, %s41
    %s45 = sphi 0, %s44
    %s61 = sphi 0, %s45
    %s69 = sphi 0, %s71
    %s72 = sphi 0, %s69
    %s73 = sphi 0, %s72
    %s89 = sphi 0, %s73
    %s97 = sphi 0, %s99
    %s100 = sphi 0, %s97
    %s101 = sphi 0, %s100
    %s117 = sphi 0, %s101
    %s125 = sphi 0, %s127
    %s128 = sphi 0, %s125
    %s129 = sphi 0, %s128
    %s145 = sphi 0, %s129
  $region4: #{bottleneck_forward.6} parent=0 // loop_header_branch
    %13 = sbr.rel (%p11) target = $region8
  $region5: #{bottleneck_forward.6} parent=0 // loop_body
    %s15 = ssub.s32 %s10, 1
    %s16 = ssub.s32 %s10, 2
    %s26 = sadd.s32 1, %s19
    %p27 = scmp.ge.s32.totalorder %s26, 1
    %s28 = scalar_select %p27, 0, %s26
    %s29 = sadd.s32 1, %s18
    %s30 = scalar_select %p27, %s29, %s18
    %p31 = scmp.ge.s32.totalorder %s30, 1
    %s32 = scalar_select %p31, 0, %s30
    %s33 = sadd.s32 1, %s17
    %s34 = scalar_select %p31, %s33, %s17
    %p35 = scmp.ge.s32.totalorder %s34, 2
    %s36 = scalar_select %p35, 0, %s34
    %s37 = ssub.s32 %s17, %s36
    %s38 = ssub.s32 %s19, %s28
    %s39 = sor.u32 %s37, %s38
    %p40 = scmp.eq.s32.totalorder %s39, 0
    %s42 = sadd.s32 %s41, 1
    %s43 = scalar_select %p40, %s41, %s42
    %p46 = pneg %p40
    %p47 = scmp.eq.s32.totalorder %s10, 1
    %p48 = por %p46, %p47
    %p49 = scmp.ne.s32.totalorder %s41, %s44
    %p50 = scmp.eq.s32.totalorder %s10, 0
    %p51 = por %p49, %p50
    %p52 = scmp.ne.s32.totalorder %s41, %s44
    %p53 = scmp.eq.s32.totalorder %s15, 1
    %p54 = por %p52, %p53
    %p55 = scmp.ne.s32.totalorder %s44, %s45
    %p56 = scmp.eq.s32.totalorder %s15, 0
    %p57 = por %p55, %p56
    %p58 = scmp.ne.s32.totalorder %s44, %s45
    %p59 = scmp.eq.s32.totalorder %s16, 1
    %p60 = por %p58, %p59
    %p62 = scmp.ne.s32.totalorder %s45, %s61
    %p63 = scmp.eq.s32.totalorder %s16, 0
    %p64 = por %p62, %p63
    %s65 = ssub.s32 %s19, %s28
    %s66 = ssub.s32 %s18, %s32
    %s67 = sor.u32 %s65, %s66
    %p68 = scmp.eq.s32.totalorder %s67, 0
    %s70 = sadd.s32 %s69, 1
    %s71 = scalar_select %p68, %s69, %s70
    %p74 = pneg %p68
    %p75 = scmp.eq.s32.totalorder %s10, 1
    %p76 = por %p74, %p75
    %p77 = scmp.ne.s32.totalorder %s69, %s72
    %p78 = scmp.eq.s32.totalorder %s10, 0
    %p79 = por %p77, %p78
    %p80 = scmp.ne.s32.totalorder %s69, %s72
    %p81 = scmp.eq.s32.totalorder %s15, 1
    %p82 = por %p80, %p81
    %p83 = scmp.ne.s32.totalorder %s72, %s73
    %p84 = scmp.eq.s32.totalorder %s15, 0
    %p85 = por %p83, %p84
    %p86 = scmp.ne.s32.totalorder %s72, %s73
    %p87 = scmp.eq.s32.totalorder %s16, 1
    %p88 = por %p86, %p87
    %p90 = scmp.ne.s32.totalorder %s73, %s89
    %p91 = scmp.eq.s32.totalorder %s16, 0
    %p92 = por %p90, %p91
    %s93 = ssub.s32 %s17, %s36
    %s94 = ssub.s32 %s18, %s32
    %s95 = sor.u32 %s93, %s94
    %p96 = scmp.eq.s32.totalorder %s95, 0
    %s98 = sadd.s32 %s97, 1
    %s99 = scalar_select %p96, %s97, %s98
    %p102 = pneg %p96
    %p103 = scmp.eq.s32.totalorder %s10, 1
    %p104 = por %p102, %p103
    %p105 = scmp.ne.s32.totalorder %s97, %s100
    %p106 = scmp.eq.s32.totalorder %s10, 0
    %p107 = por %p105, %p106
    %p108 = scmp.ne.s32.totalorder %s97, %s100
    %p109 = scmp.eq.s32.totalorder %s15, 1
    %p110 = por %p108, %p109
    %p111 = scmp.ne.s32.totalorder %s100, %s101
    %p112 = scmp.eq.s32.totalorder %s15, 0
    %p113 = por %p111, %p112
    %p114 = scmp.ne.s32.totalorder %s100, %s101
    %p115 = scmp.eq.s32.totalorder %s16, 1
    %p116 = por %p114, %p115
    %p118 = scmp.ne.s32.totalorder %s101, %s117
    %p119 = scmp.eq.s32.totalorder %s16, 0
    %p120 = por %p118, %p119
    %s121 = ssub.s32 %s17, %s36
    %s122 = ssub.s32 %s18, %s32
    %s123 = sor.u32 %s121, %s122
    %p124 = scmp.eq.s32.totalorder %s123, 0
    %s126 = sadd.s32 %s125, 1
    %s127 = scalar_select %p124, %s125, %s126
    %p130 = pneg %p124
    %p131 = scmp.eq.s32.totalorder %s10, 1
    %p132 = por %p130, %p131
    %p133 = scmp.ne.s32.totalorder %s125, %s128
    %p134 = scmp.eq.s32.totalorder %s10, 0
    %p135 = por %p133, %p134
    %p136 = scmp.ne.s32.totalorder %s125, %s128
    %p137 = scmp.eq.s32.totalorder %s15, 1
    %p138 = por %p136, %p137
    %p139 = scmp.ne.s32.totalorder %s128, %s129
    %p140 = scmp.eq.s32.totalorder %s15, 0
    %p141 = por %p139, %p140
    %p142 = scmp.ne.s32.totalorder %s128, %s129
    %p143 = scmp.eq.s32.totalorder %s16, 1
    %p144 = por %p142, %p143
    %p146 = scmp.ne.s32.totalorder %s129, %s145
    %p147 = scmp.eq.s32.totalorder %s16, 0
    %p148 = por %p146, %p147
    %p149 = scmp.le.s32.totalorder 1, %s10
    %p150 = scmp.lt.s32.totalorder %s10, 3
    %p151 = pnand %p149, %p150
    %p152 = pneg %p151
    // Predicated region
    $region9: #{bottleneck_forward.6} parent=5 // pred_check
      _
    $region10: #{bottleneck_forward.6} parent=5 // pred_check_branch
      %154 = sbr.rel (%p151) target = $region12
    $region11: #{bottleneck_forward.6} parent=5 // pred_region
      %s155 = ssub.s32 %s10, 1
      // Predicated region
      $region13: #{bottleneck_forward.6} parent=11 // pred_check
        %p156 = pneg %p85
      $region14: #{bottleneck_forward.6} parent=11 // pred_check_branch
        %158 = sbr.rel (%p156) target = $region16
      $region15: #{bottleneck_forward.6} parent=11 // pred_region
        %s159 = smul.u32 16, %s22
        %p160 = scmp.lt.s32.totalorder %s159, 15
        %s161 = scalar_select %p160, %s159, 15
        %p162 = scmp.lt.s32.totalorder %s21, 0
        %s163 = scalar_select %p162, %s21, 0
        %s164 = sadd.s32 %s163, %s161
        %s165 = smul.addr %s164, 4
        %s166 = scalar_lea.vmem %s1, %s165
        %s167 = smul.u32 16, %s22
      $region16: #{bottleneck_forward.6} parent=11 // pred_fallthru
        _
    $region12: #{bottleneck_forward.6} parent=5 // pred_fallthru
      _
    %p168 = scmp.lt.s32.totalorder %s10, 2
    // Predicated region
    $region17: #{bottleneck_forward.6} parent=5 // pred_check
      %p169 = pneg %p168
    $region18: #{bottleneck_forward.6} parent=5 // pred_check_branch
      %171 = sbr.rel (%p169) target = $region20
    $region19: #{bottleneck_forward.6} parent=5 // pred_region
      // Predicated region
      $region21: #{bottleneck_forward.6} parent=19 // pred_check
        %p172 = pneg %p51
      $region22: #{bottleneck_forward.6} parent=19 // pred_check_branch
        %174 = sbr.rel (%p172) target = $region24
      $region23: #{bottleneck_forward.6} parent=19 // pred_region
        %s175 = smul.u32 32, %s17
        %p176 = scmp.lt.s32.totalorder %s175, 63
        %s177 = scalar_select %p176, %s175, 63
        %p178 = scmp.lt.s32.totalorder %s19, 0
        %s179 = scalar_select %p178, %s19, 0
        %s180 = sadd.s32 %s179, %s177
        %s181 = smul.addr %s180, 4
        %s182 = scalar_lea.vmem %s0, %s181
        %s183 = smul.u32 32, %s17
      $region24: #{bottleneck_forward.6} parent=19 // pred_fallthru
        _
    $region20: #{bottleneck_forward.6} parent=5 // pred_fallthru
      _
    %p184 = scmp.le.s32.totalorder 1, %s10
    %p185 = scmp.lt.s32.totalorder %s10, 3
    %p186 = pnand %p184, %p185
    %p187 = pneg %p186
    // Predicated region
    $region25: #{bottleneck_forward.6} parent=5 // pred_check
      _
    $region26: #{bottleneck_forward.6} parent=5 // pred_check_branch
      %189 = sbr.rel (%p186) target = $region28
    $region27: #{bottleneck_forward.6} parent=5 // pred_region
      %s190 = ssub.s32 %s10, 1
      %s191 = smul.u32 32, %s20
      %p192 = scmp.lt.s32.totalorder %s191, 63
      %s193 = scalar_select %p192, %s191, 63
      %p194 = scmp.lt.s32.totalorder %s22, 0
      %s195 = scalar_select %p194, %s22, 0
      %s196 = sadd.s32 %s195, %s193
      %s197 = smul.addr %s196, 4
      %s198 = scalar_lea.vmem %s0, %s197
      %p199 = pneg %p57
      %p200 = pneg %p54
      %s201 = smul.u32 16, %s22
      %p202 = scmp.lt.s32.totalorder %s201, 15
      %s203 = scalar_select %p202, %s201, 15
      %p204 = scmp.lt.s32.totalorder %s21, 0
      %s205 = scalar_select %p204, %s21, 0
      %s206 = sadd.s32 %s205, %s203
      %s207 = smul.addr %s206, 4
      %s208 = scalar_lea.vmem %s1, %s207
      %p209 = pneg %p85
      %p210 = pneg %p82
      %p211 = pneg %p113
      %p212 = pneg %p110
      %s213 = smul.u32 32, %s20
      %p214 = scmp.lt.s32.totalorder %s213, 63
      %s215 = scalar_select %p214, %s213, 63
      %p216 = scmp.lt.s32.totalorder %s21, 0
      %s217 = scalar_select %p216, %s21, 0
      %s218 = sadd.s32 %s217, %s215
      %s219 = smul.addr %s218, 8
      %s220 = scalar_lea.vmem %s2, %s219
      %p221 = pneg %p141
      %p222 = pneg %p138
      %p223 = scmp.lt.s32.totalorder %s20, 1
      %s224 = scalar_select %p223, %s20, 1
      %p225 = scmp.lt.s32.totalorder %s21, 0
      %s226 = scalar_select %p225, %s21, 0
      %s227 = sadd.s32 %s226, %s224
      %s228 = smul.addr %s227, 2
      %s229 = scalar_lea.vmem %s3, %s228
      %s230 = smul.u32 32, %s20
      %p231 = scmp.lt.s32.totalorder %s230, 63
      %s232 = scalar_select %p231, %s230, 63
      %p233 = scmp.lt.s32.totalorder %s22, 0
      %s234 = scalar_select %p233, %s22, 0
      %s235 = sadd.s32 %s234, %s232
      %s236 = smul.addr %s235, 4
      %s237 = scalar_lea.vmem %s0, %s236
      %s238 = smul.u32 32, %s20
      %s239 = smul.u32 16, %s22
      %p240 = scmp.lt.s32.totalorder %s239, 15
      %s241 = scalar_select %p240, %s239, 15
      %p242 = scmp.lt.s32.totalorder %s21, 0
      %s243 = scalar_select %p242, %s21, 0
      %s244 = sadd.s32 %s243, %s241
      %s245 = smul.addr %s244, 4
      %s246 = scalar_lea.vmem %s1, %s245
      %s247 = smul.u32 16, %s22
      %s248 = smul.u32 32, %s20
      %p249 = scmp.lt.s32.totalorder %s248, 63
      %s250 = scalar_select %p249, %s248, 63
      %p251 = scmp.lt.s32.totalorder %s21, 0
      %s252 = scalar_select %p251, %s21, 0
      %s253 = sadd.s32 %s252, %s250
      %s254 = smul.addr %s253, 8
      %s255 = scalar_lea.vmem %s2, %s254
      %s256 = smul.u32 32, %s20
      %p257 = scmp.lt.s32.totalorder %s20, 1
      %s258 = scalar_select %p257, %s20, 1
      %p259 = scmp.lt.s32.totalorder %s21, 0
      %s260 = scalar_select %p259, %s21, 0
      %s261 = sadd.s32 %s260, %s258
      %s262 = smul.addr %s261, 2
      %s263 = scalar_lea.vmem %s3, %s262
      %p265 = scmp.eq.s32.totalorder %s22, 0
      // Predicated region
      $region29: #{bottleneck_forward.6} parent=27 // pred_check
        %p266 = pneg %p265
      $region30: #{bottleneck_forward.6} parent=27 // pred_check_branch
        %268 = sbr.rel (%p266) target = $region32
      $region31: #{bottleneck_forward.6} parent=27 // pred_region
        %269 = vst [vmem:[#allocation2] sm:$0xff] 0.0
        %270 = vst [vmem:[#allocation2 + $0x8] sm:$0xff] 0.0
        %271 = vst [vmem:[#allocation2 + $0x10] sm:$0xff] 0.0
        %272 = vst [vmem:[#allocation2 + $0x18] sm:$0xff] 0.0
        %273 = vst [vmem:[#allocation2 + $0x20] sm:$0xff] 0.0
        %274 = vst [vmem:[#allocation2 + $0x28] sm:$0xff] 0.0
        %275 = vst [vmem:[#allocation2 + $0x30] sm:$0xff] 0.0
        %276 = vst [vmem:[#allocation2 + $0x38] sm:$0xff] 0.0
        %277 = vst [vmem:[#allocation2 + $0x40] sm:$0xff] 0.0
        %278 = vst [vmem:[#allocation2 + $0x48] sm:$0xff] 0.0
        %279 = vst [vmem:[#allocation2 + $0x50] sm:$0xff] 0.0
        %280 = vst [vmem:[#allocation2 + $0x58] sm:$0xff] 0.0
        %281 = vst [vmem:[#allocation2 + $0x60] sm:$0xff] 0.0
        %282 = vst [vmem:[#allocation2 + $0x68] sm:$0xff] 0.0
        %283 = vst [vmem:[#allocation2 + $0x70] sm:$0xff] 0.0
        %284 = vst [vmem:[#allocation2 + $0x78] sm:$0xff] 0.0
        %285 = vst [vmem:[#allocation2 + $0x80] sm:$0xff] 0.0
        %286 = vst [vmem:[#allocation2 + $0x88] sm:$0xff] 0.0
        %287 = vst [vmem:[#allocation2 + $0x90] sm:$0xff] 0.0
        %288 = vst [vmem:[#allocation2 + $0x98] sm:$0xff] 0.0
        %289 = vst [vmem:[#allocation2 + $0xa0] sm:$0xff] 0.0
        %290 = vst [vmem:[#allocation2 + $0xa8] sm:$0xff] 0.0
        %291 = vst [vmem:[#allocation2 + $0xb0] sm:$0xff] 0.0
        %292 = vst [vmem:[#allocation2 + $0xb8] sm:$0xff] 0.0
        %293 = vst [vmem:[#allocation2 + $0xc0] sm:$0xff] 0.0
        %294 = vst [vmem:[#allocation2 + $0xc8] sm:$0xff] 0.0
        %295 = vst [vmem:[#allocation2 + $0xd0] sm:$0xff] 0.0
        %296 = vst [vmem:[#allocation2 + $0xd8] sm:$0xff] 0.0
        %297 = vst [vmem:[#allocation2 + $0xe0] sm:$0xff] 0.0
        %298 = vst [vmem:[#allocation2 + $0xe8] sm:$0xff] 0.0
        %299 = vst [vmem:[#allocation2 + $0xf0] sm:$0xff] 0.0
        %300 = vst [vmem:[#allocation2 + $0xf8] sm:$0xff] 0.0
      $region32: #{bottleneck_forward.6} parent=27 // pred_fallthru
        _
      %v301 = vld [vmem:[#allocation2] sm:$0xff]
      %v302 = vld [vmem:[#allocation2 + $0x8] sm:$0xff]
      %v303 = vld [vmem:[#allocation2 + $0x10] sm:$0xff]
      %v304 = vld [vmem:[#allocation2 + $0x18] sm:$0xff]
      %v305 = vld [vmem:[#allocation2 + $0x20] sm:$0xff]
      %v306 = vld [vmem:[#allocation2 + $0x28] sm:$0xff]
      %v307 = vld [vmem:[#allocation2 + $0x30] sm:$0xff]
      %v308 = vld [vmem:[#allocation2 + $0x38] sm:$0xff]
      %v309 = vld [vmem:[#allocation2 + $0x40] sm:$0xff]
      %v310 = vld [vmem:[#allocation2 + $0x48] sm:$0xff]
      %v311 = vld [vmem:[#allocation2 + $0x50] sm:$0xff]
      %v312 = vld [vmem:[#allocation2 + $0x58] sm:$0xff]
      %v313 = vld [vmem:[#allocation2 + $0x60] sm:$0xff]
      %v314 = vld [vmem:[#allocation2 + $0x68] sm:$0xff]
      %v315 = vld [vmem:[#allocation2 + $0x70] sm:$0xff]
      %v316 = vld [vmem:[#allocation2 + $0x78] sm:$0xff]
      %v317 = vld [vmem:[#allocation2 + $0x80] sm:$0xff]
      %v318 = vld [vmem:[#allocation2 + $0x88] sm:$0xff]
      %v319 = vld [vmem:[#allocation2 + $0x90] sm:$0xff]
      %v320 = vld [vmem:[#allocation2 + $0x98] sm:$0xff]
      %v321 = vld [vmem:[#allocation2 + $0xa0] sm:$0xff]
      %v322 = vld [vmem:[#allocation2 + $0xa8] sm:$0xff]
      %v323 = vld [vmem:[#allocation2 + $0xb0] sm:$0xff]
      %v324 = vld [vmem:[#allocation2 + $0xb8] sm:$0xff]
      %v325 = vld [vmem:[#allocation2 + $0xc0] sm:$0xff]
      %v326 = vld [vmem:[#allocation2 + $0xc8] sm:$0xff]
      %v327 = vld [vmem:[#allocation2 + $0xd0] sm:$0xff]
      %v328 = vld [vmem:[#allocation2 + $0xd8] sm:$0xff]
      %v329 = vld [vmem:[#allocation2 + $0xe0] sm:$0xff]
      %v330 = vld [vmem:[#allocation2 + $0xe8] sm:$0xff]
      %v331 = vld [vmem:[#allocation2 + $0xf0] sm:$0xff]
      %v332 = vld [vmem:[#allocation2 + $0xf8] sm:$0xff]
      %v333 = vld [vmem:[%s237] sm:$0xf]
      %v334 = vld [vmem:[%s237 + $0x4] sm:$0xf]
      %v335 = vld [vmem:[%s237 + $0x8] sm:$0xf]
      %v336 = vld [vmem:[%s237 + $0xc] sm:$0xf]
      %v337 = vld [vmem:[%s237 + $0x10] sm:$0xf]
      %v338 = vld [vmem:[%s237 + $0x14] sm:$0xf]
      %v339 = vld [vmem:[%s237 + $0x18] sm:$0xf]
      %v340 = vld [vmem:[%s237 + $0x1c] sm:$0xf]
      %v341 = vld [vmem:[%s237 + $0x20] sm:$0xf]
      %v342 = vld [vmem:[%s237 + $0x24] sm:$0xf]
      %v343 = vld [vmem:[%s237 + $0x28] sm:$0xf]
      %v344 = vld [vmem:[%s237 + $0x2c] sm:$0xf]
      %v345 = vld [vmem:[%s237 + $0x30] sm:$0xf]
      %v346 = vld [vmem:[%s237 + $0x34] sm:$0xf]
      %v347 = vld [vmem:[%s237 + $0x38] sm:$0xf]
      %v348 = vld [vmem:[%s237 + $0x3c] sm:$0xf]
      %v349 = vld [vmem:[%s237 + $0x40] sm:$0xf]
      %v350 = vld [vmem:[%s237 + $0x44] sm:$0xf]
      %v351 = vld [vmem:[%s237 + $0x48] sm:$0xf]
      %v352 = vld [vmem:[%s237 + $0x4c] sm:$0xf]
      %v353 = vld [vmem:[%s237 + $0x50] sm:$0xf]
      %v354 = vld [vmem:[%s237 + $0x54] sm:$0xf]
      %v355 = vld [vmem:[%s237 + $0x58] sm:$0xf]
      %v356 = vld [vmem:[%s237 + $0x5c] sm:$0xf]
      %v357 = vld [vmem:[%s237 + $0x60] sm:$0xf]
      %v358 = vld [vmem:[%s237 + $0x64] sm:$0xf]
      %v359 = vld [vmem:[%s237 + $0x68] sm:$0xf]
      %v360 = vld [vmem:[%s237 + $0x6c] sm:$0xf]
      %v361 = vld [vmem:[%s237 + $0x70] sm:$0xf]
      %v362 = vld [vmem:[%s237 + $0x74] sm:$0xf]
      %v363 = vld [vmem:[%s237 + $0x78] sm:$0xf]
      %v364 = vld [vmem:[%s237 + $0x7c] sm:$0xf]
      %v365 = vld [vmem:[%s246] sm:$0xf]
      %v366 = vld [vmem:[%s246 + $0x4] sm:$0xf]
      %v367 = vld [vmem:[%s246 + $0x8] sm:$0xf]
      %v368 = vld [vmem:[%s246 + $0xc] sm:$0xf]
      %v369 = vld [vmem:[%s246 + $0x10] sm:$0xf]
      %v370 = vld [vmem:[%s246 + $0x14] sm:$0xf]
      %v371 = vld [vmem:[%s246 + $0x18] sm:$0xf]
      %v372 = vld [vmem:[%s246 + $0x1c] sm:$0xf]
      %v373 = vld [vmem:[%s246 + $0x20] sm:$0xf]
      %v374 = vld [vmem:[%s246 + $0x24] sm:$0xf]
      %v375 = vld [vmem:[%s246 + $0x28] sm:$0xf]
      %v376 = vld [vmem:[%s246 + $0x2c] sm:$0xf]
      %v377 = vld [vmem:[%s246 + $0x30] sm:$0xf]
      %v378 = vld [vmem:[%s246 + $0x34] sm:$0xf]
      %v379 = vld [vmem:[%s246 + $0x38] sm:$0xf]
      %v380 = vld [vmem:[%s246 + $0x3c] sm:$0xf]
      %v413 = vunpack.c.l.b16 %v333
      %v414 = vunpack.c.l.b16 %v334
      %v415 = vunpack.c.l.b16 %v335
      %v416 = vunpack.c.l.b16 %v336
      %v417 = vunpack.c.l.b16 %v337
      %v418 = vunpack.c.l.b16 %v338
      %v419 = vunpack.c.l.b16 %v339
      %v420 = vunpack.c.l.b16 %v340
      %v421 = vunpack.c.l.b16 %v341
      %v422 = vunpack.c.l.b16 %v342
      %v423 = vunpack.c.l.b16 %v343
      %v424 = vunpack.c.l.b16 %v344
      %v425 = vunpack.c.l.b16 %v345
      %v426 = vunpack.c.l.b16 %v346
      %v427 = vunpack.c.l.b16 %v347
      %v428 = vunpack.c.l.b16 %v348
      %v429 = vunpack.c.l.b16 %v349
      %v430 = vunpack.c.l.b16 %v350
      %v431 = vunpack.c.l.b16 %v351
      %v432 = vunpack.c.l.b16 %v352
      %v433 = vunpack.c.l.b16 %v353
      %v434 = vunpack.c.l.b16 %v354
      %v435 = vunpack.c.l.b16 %v355
      %v436 = vunpack.c.l.b16 %v356
      %v437 = vunpack.c.l.b16 %v357
      %v438 = vunpack.c.l.b16 %v358
      %v439 = vunpack.c.l.b16 %v359
      %v440 = vunpack.c.l.b16 %v360
      %v441 = vunpack.c.l.b16 %v361
      %v442 = vunpack.c.l.b16 %v362
      %v443 = vunpack.c.l.b16 %v363
      %v444 = vunpack.c.l.b16 %v364
      %v445 = vpack.c.b16 %v414, %v413
      %v446 = vpack.c.b16 %v416, %v415
      %v447 = vpack.c.b16 %v418, %v417
      %v448 = vpack.c.b16 %v420, %v419
      %v449 = vpack.c.b16 %v422, %v421
      %v450 = vpack.c.b16 %v424, %v423
      %v451 = vpack.c.b16 %v426, %v425
      %v452 = vpack.c.b16 %v428, %v427
      %v453 = vpack.c.b16 %v430, %v429
      %v454 = vpack.c.b16 %v432, %v431
      %v455 = vpack.c.b16 %v434, %v433
      %v456 = vpack.c.b16 %v436, %v435
      %v457 = vpack.c.b16 %v438, %v437
      %v458 = vpack.c.b16 %v440, %v439
      %v459 = vpack.c.b16 %v442, %v441
      %v460 = vpack.c.b16 %v444, %v443
      %v493 = vunpack.c.l.b16 %v365
      %v494 = vunpack.c.l.b16 %v366
      %v495 = vunpack.c.l.b16 %v367
      %v496 = vunpack.c.l.b16 %v368
      %v497 = vunpack.c.l.b16 %v369
      %v498 = vunpack.c.l.b16 %v370
      %v499 = vunpack.c.l.b16 %v371
      %v500 = vunpack.c.l.b16 %v372
      %v501 = vunpack.c.l.b16 %v373
      %v502 = vunpack.c.l.b16 %v374
      %v503 = vunpack.c.l.b16 %v375
      %v504 = vunpack.c.l.b16 %v376
      %v505 = vunpack.c.l.b16 %v377
      %v506 = vunpack.c.l.b16 %v378
      %v507 = vunpack.c.l.b16 %v379
      %v508 = vunpack.c.l.b16 %v380
      %v509 = vpack.c.b16 %v494, %v493
      %v510 = vpack.c.b16 %v496, %v495
      %v511 = vpack.c.b16 %v498, %v497
      %v512 = vpack.c.b16 %v500, %v499
      %v513 = vpack.c.b16 %v502, %v501
      %v514 = vpack.c.b16 %v504, %v503
      %v515 = vpack.c.b16 %v506, %v505
      %v516 = vpack.c.b16 %v508, %v507
      %525 = vmatprep.subr.bf16.mxu0 0
      %526 = vmatpush1.bf16.msra.mxu0 %v509
      %527 = vmatprep.subr.bf16.mxu0 0
      %528 = vmatpush1.bf16.msra.mxu0 %v510
      %529 = vmatprep.subr.bf16.mxu0 0
      %530 = vmatpush1.bf16.msra.mxu0 %v511
      %531 = vmatprep.subr.bf16.mxu0 0
      %532 = vmatpush1.bf16.msra.mxu0 %v512
      %533 = vmatprep.subr.bf16.mxu0 0
      %534 = vmatpush1.bf16.msra.mxu0 %v513
      %535 = vmatprep.subr.bf16.mxu0 0
      %536 = vmatpush1.bf16.msra.mxu0 %v514
      %537 = vmatprep.subr.bf16.mxu0 0
      %538 = vmatpush1.bf16.msra.mxu0 %v515
      %539 = vmatprep.subr.bf16.mxu0 0
      %540 = vmatpush1.bf16.msra.mxu0 %v516
      %541 = vmatprep.subr.bf16.mxu0 0
      %542 = vmatpush1.bf16.msra.mxu0 0
      %543 = vmatprep.subr.bf16.mxu0 0
      %544 = vmatpush1.bf16.msra.mxu0 0
      %545 = vmatprep.subr.bf16.mxu0 0
      %546 = vmatpush1.bf16.msra.mxu0 0
      %547 = vmatprep.subr.bf16.mxu0 0
      %548 = vmatpush1.bf16.msra.mxu0 0
      %549 = vmatprep.subr.bf16.mxu0 0
      %550 = vmatpush1.bf16.msra.mxu0 0
      %551 = vmatprep.subr.bf16.mxu0 0
      %552 = vmatpush1.bf16.msra.mxu0 0
      %553 = vmatprep.subr.bf16.mxu0 0
      %554 = vmatpush1.bf16.msra.mxu0 0
      %555 = vmatprep.subr.bf16.mxu0 0
      %556 = vmatpush1.bf16.msra.mxu0 0
      %557 = vmatprep.mubr.bf16.mxu0 0
      %558 = vmatmul.mubr.bf16.gmra.mrb[0].mxu0 %v445
      %v559 = vpop.f32.mrb[0].mxu0
      %v560 = vadd.f32 0.0, %v559
      %v561 = vpop.f32.mrb[0].mxu0
      %v562 = vpop.f32.mrb[0].mxu0
      %v563 = vadd.f32 0.0, %v562
      %v564 = vpop.f32.mrb[0].mxu0
      %565 = vmatprep.mubr.bf16.mxu0 0
      %566 = vmatmul.mubr.bf16.gmra.mrb[0].mxu0 %v446
      %v567 = vpop.f32.mrb[0].mxu0
      %v568 = vadd.f32 0.0, %v567
      %v569 = vpop.f32.mrb[0].mxu0
      %v570 = vpop.f32.mrb[0].mxu0
      %v571 = vadd.f32 0.0, %v570
      %v572 = vpop.f32.mrb[0].mxu0
      %573 = vmatprep.mubr.bf16.mxu0 0
      %574 = vmatmul.mubr.bf16.gmra.mrb[0].mxu0 %v447
      %v575 = vpop.f32.mrb[0].mxu0
      %v576 = vadd.f32 0.0, %v575
      %v577 = vpop.f32.mrb[0].mxu0
      %v578 = vpop.f32.mrb[0].mxu0
      %v579 = vadd.f32 0.0, %v578
      %v580 = vpop.f32.mrb[0].mxu0
      %581 = vmatprep.mubr.bf16.mxu0 0
      %582 = vmatmul.mubr.bf16.gmra.mrb[0].mxu0 %v448
      %v583 = vpop.f32.mrb[0].mxu0
      %v584 = vadd.f32 0.0, %v583
      %v585 = vpop.f32.mrb[0].mxu0
      %v586 = vpop.f32.mrb[0].mxu0
      %v587 = vadd.f32 0.0, %v586
      %v588 = vpop.f32.mrb[0].mxu0
      %589 = vmatprep.mubr.bf16.mxu0 0
      %590 = vmatmul.mubr.bf16.gmra.mrb[0].mxu0 %v449
      %v591 = vpop.f32.mrb[0].mxu0
      %v592 = vadd.f32 0.0, %v591
      %v593 = vpop.f32.mrb[0].mxu0
      %v594 = vpop.f32.mrb[0].mxu0
      %v595 = vadd.f32 0.0, %v594
      %v596 = vpop.f32.mrb[0].mxu0
      %597 = vmatprep.mubr.bf16.mxu0 0
      %598 = vmatmul.mubr.bf16.gmra.mrb[0].mxu0 %v450
      %v599 = vpop.f32.mrb[0].mxu0
      %v600 = vadd.f32 0.0, %v599
      %v601 = vpop.f32.mrb[0].mxu0
      %v602 = vpop.f32.mrb[0].mxu0
      %v603 = vadd.f32 0.0, %v602
      %v604 = vpop.f32.mrb[0].mxu0
      %605 = vmatprep.mubr.bf16.mxu0 0
      %606 = vmatmul.mubr.bf16.gmra.mrb[0].mxu0 %v451
      %v607 = vpop.f32.mrb[0].mxu0
      %v608 = vadd.f32 0.0, %v607
      %v609 = vpop.f32.mrb[0].mxu0
      %v610 = vpop.f32.mrb[0].mxu0
      %v611 = vadd.f32 0.0, %v610
      %v612 = vpop.f32.mrb[0].mxu0
      %613 = vmatprep.mubr.bf16.mxu0 0
      %614 = vmatmul.mubr.bf16.gmra.mrb[0].mxu0 %v452
      %v615 = vpop.f32.mrb[0].mxu0
      %v616 = vadd.f32 0.0, %v615
      %v617 = vpop.f32.mrb[0].mxu0
      %v618 = vpop.f32.mrb[0].mxu0
      %v619 = vadd.f32 0.0, %v618
      %v620 = vpop.f32.mrb[0].mxu0
      %621 = vmatprep.mubr.bf16.mxu0 0
      %622 = vmatmul.mubr.bf16.gmra.mrb[0].mxu0 %v453
      %v623 = vpop.f32.mrb[0].mxu0
      %v624 = vadd.f32 0.0, %v623
      %v625 = vpop.f32.mrb[0].mxu0
      %v626 = vpop.f32.mrb[0].mxu0
      %v627 = vadd.f32 0.0, %v626
      %v628 = vpop.f32.mrb[0].mxu0
      %629 = vmatprep.mubr.bf16.mxu0 0
      %630 = vmatmul.mubr.bf16.gmra.mrb[0].mxu0 %v454
      %v631 = vpop.f32.mrb[0].mxu0
      %v632 = vadd.f32 0.0, %v631
      %v633 = vpop.f32.mrb[0].mxu0
      %v634 = vpop.f32.mrb[0].mxu0
      %v635 = vadd.f32 0.0, %v634
      %v636 = vpop.f32.mrb[0].mxu0
      %637 = vmatprep.mubr.bf16.mxu0 0
      %638 = vmatmul.mubr.bf16.gmra.mrb[0].mxu0 %v455
      %v639 = vpop.f32.mrb[0].mxu0
      %v640 = vadd.f32 0.0, %v639
      %v641 = vpop.f32.mrb[0].mxu0
      %v642 = vpop.f32.mrb[0].mxu0
      %v643 = vadd.f32 0.0, %v642
      %v644 = vpop.f32.mrb[0].mxu0
      %645 = vmatprep.mubr.bf16.mxu0 0
      %646 = vmatmul.mubr.bf16.gmra.mrb[0].mxu0 %v456
      %v647 = vpop.f32.mrb[0].mxu0
      %v648 = vadd.f32 0.0, %v647
      %v649 = vpop.f32.mrb[0].mxu0
      %v650 = vpop.f32.mrb[0].mxu0
      %v651 = vadd.f32 0.0, %v650
      %v652 = vpop.f32.mrb[0].mxu0
      %653 = vmatprep.mubr.bf16.mxu0 0
      %654 = vmatmul.mubr.bf16.gmra.mrb[0].mxu0 %v457
      %v655 = vpop.f32.mrb[0].mxu0
      %v656 = vadd.f32 0.0, %v655
      %v657 = vpop.f32.mrb[0].mxu0
      %v658 = vpop.f32.mrb[0].mxu0
      %v659 = vadd.f32 0.0, %v658
      %v660 = vpop.f32.mrb[0].mxu0
      %661 = vmatprep.mubr.bf16.mxu0 0
      %662 = vmatmul.mubr.bf16.gmra.mrb[0].mxu0 %v458
      %v663 = vpop.f32.mrb[0].mxu0
      %v664 = vadd.f32 0.0, %v663
      %v665 = vpop.f32.mrb[0].mxu0
      %v666 = vpop.f32.mrb[0].mxu0
      %v667 = vadd.f32 0.0, %v666
      %v668 = vpop.f32.mrb[0].mxu0
      %669 = vmatprep.mubr.bf16.mxu0 0
      %670 = vmatmul.mubr.bf16.gmra.mrb[0].mxu0 %v459
      %v671 = vpop.f32.mrb[0].mxu0
      %v672 = vadd.f32 0.0, %v671
      %v673 = vpop.f32.mrb[0].mxu0
      %v674 = vpop.f32.mrb[0].mxu0
      %v675 = vadd.f32 0.0, %v674
      %v676 = vpop.f32.mrb[0].mxu0
      %677 = vmatprep.mubr.bf16.mxu0 0
      %678 = vmatmul.mubr.bf16.gmra.mrb[0].mxu0 %v460
      %v679 = vpop.f32.mrb[0].mxu0
      %v680 = vadd.f32 0.0, %v679
      %v681 = vpop.f32.mrb[0].mxu0
      %v682 = vpop.f32.mrb[0].mxu0
      %v683 = vadd.f32 0.0, %v682
      %v684 = vpop.f32.mrb[0].mxu0
      %685 = vdwg.mxu0
      %v686 = vadd.f32 %v301, %v560
      %v687 = vadd.f32 %v302, %v563
      %v688 = vadd.f32 %v303, %v568
      %v689 = vadd.f32 %v304, %v571
      %v690 = vadd.f32 %v305, %v576
      %v691 = vadd.f32 %v306, %v579
      %v692 = vadd.f32 %v307, %v584
      %v693 = vadd.f32 %v308, %v587
      %v694 = vadd.f32 %v309, %v592
      %v695 = vadd.f32 %v310, %v595
      %v696 = vadd.f32 %v311, %v600
      %v697 = vadd.f32 %v312, %v603
      %v698 = vadd.f32 %v313, %v608
      %v699 = vadd.f32 %v314, %v611
      %v700 = vadd.f32 %v315, %v616
      %v701 = vadd.f32 %v316, %v619
      %v702 = vadd.f32 %v317, %v624
      %v703 = vadd.f32 %v318, %v627
      %v704 = vadd.f32 %v319, %v632
      %v705 = vadd.f32 %v320, %v635
      %v706 = vadd.f32 %v321, %v640
      %v707 = vadd.f32 %v322, %v643
      %v708 = vadd.f32 %v323, %v648
      %v709 = vadd.f32 %v324, %v651
      %v710 = vadd.f32 %v325, %v656
      %v711 = vadd.f32 %v326, %v659
      %v712 = vadd.f32 %v327, %v664
      %v713 = vadd.f32 %v328, %v667
      %v714 = vadd.f32 %v329, %v672
      %v715 = vadd.f32 %v330, %v675
      %v716 = vadd.f32 %v331, %v680
      %v717 = vadd.f32 %v332, %v683
      %718 = vst [vmem:[#allocation2] sm:$0xff] %v686
      %719 = vst [vmem:[#allocation2 + $0x8] sm:$0xff] %v687
      %720 = vst [vmem:[#allocation2 + $0x10] sm:$0xff] %v688
      %721 = vst [vmem:[#allocation2 + $0x18] sm:$0xff] %v689
      %722 = vst [vmem:[#allocation2 + $0x20] sm:$0xff] %v690
      %723 = vst [vmem:[#allocation2 + $0x28] sm:$0xff] %v691
      %724 = vst [vmem:[#allocation2 + $0x30] sm:$0xff] %v692
      %725 = vst [vmem:[#allocation2 + $0x38] sm:$0xff] %v693
      %726 = vst [vmem:[#allocation2 + $0x40] sm:$0xff] %v694
      %727 = vst [vmem:[#allocation2 + $0x48] sm:$0xff] %v695
      %728 = vst [vmem:[#allocation2 + $0x50] sm:$0xff] %v696
      %729 = vst [vmem:[#allocation2 + $0x58] sm:$0xff] %v697
      %730 = vst [vmem:[#allocation2 + $0x60] sm:$0xff] %v698
      %731 = vst [vmem:[#allocation2 + $0x68] sm:$0xff] %v699
      %732 = vst [vmem:[#allocation2 + $0x70] sm:$0xff] %v700
      %733 = vst [vmem:[#allocation2 + $0x78] sm:$0xff] %v701
      %734 = vst [vmem:[#allocation2 + $0x80] sm:$0xff] %v702
      %735 = vst [vmem:[#allocation2 + $0x88] sm:$0xff] %v703
      %736 = vst [vmem:[#allocation2 + $0x90] sm:$0xff] %v704
      %737 = vst [vmem:[#allocation2 + $0x98] sm:$0xff] %v705
      %738 = vst [vmem:[#allocation2 + $0xa0] sm:$0xff] %v706
      %739 = vst [vmem:[#allocation2 + $0xa8] sm:$0xff] %v707
      %740 = vst [vmem:[#allocation2 + $0xb0] sm:$0xff] %v708
      %741 = vst [vmem:[#allocation2 + $0xb8] sm:$0xff] %v709
      %742 = vst [vmem:[#allocation2 + $0xc0] sm:$0xff] %v710
      %743 = vst [vmem:[#allocation2 + $0xc8] sm:$0xff] %v711
      %744 = vst [vmem:[#allocation2 + $0xd0] sm:$0xff] %v712
      %745 = vst [vmem:[#allocation2 + $0xd8] sm:$0xff] %v713
      %746 = vst [vmem:[#allocation2 + $0xe0] sm:$0xff] %v714
      %747 = vst [vmem:[#allocation2 + $0xe8] sm:$0xff] %v715
      %748 = vst [vmem:[#allocation2 + $0xf0] sm:$0xff] %v716
      %749 = vst [vmem:[#allocation2 + $0xf8] sm:$0xff] %v717
      // Predicated region
      $region33: #{bottleneck_forward.6} parent=27 // pred_check
        %p750 = pneg %p265
      $region34: #{bottleneck_forward.6} parent=27 // pred_check_branch
        %752 = sbr.rel (%p750) target = $region36
      $region35: #{bottleneck_forward.6} parent=27 // pred_region
        %v753 = vld [vmem:[#allocation2] sm:$0xff]
        %v754 = vld [vmem:[#allocation2 + $0x8] sm:$0xff]
        %v755 = vld [vmem:[#allocation2 + $0x10] sm:$0xff]
        %v756 = vld [vmem:[#allocation2 + $0x18] sm:$0xff]
        %v757 = vld [vmem:[#allocation2 + $0x20] sm:$0xff]
        %v758 = vld [vmem:[#allocation2 + $0x28] sm:$0xff]
        %v759 = vld [vmem:[#allocation2 + $0x30] sm:$0xff]
        %v760 = vld [vmem:[#allocation2 + $0x38] sm:$0xff]
        %v761 = vld [vmem:[#allocation2 + $0x40] sm:$0xff]
        %v762 = vld [vmem:[#allocation2 + $0x48] sm:$0xff]
        %v763 = vld [vmem:[#allocation2 + $0x50] sm:$0xff]
        %v764 = vld [vmem:[#allocation2 + $0x58] sm:$0xff]
        %v765 = vld [vmem:[#allocation2 + $0x60] sm:$0xff]
        %v766 = vld [vmem:[#allocation2 + $0x68] sm:$0xff]
        %v767 = vld [vmem:[#allocation2 + $0x70] sm:$0xff]
        %v768 = vld [vmem:[#allocation2 + $0x78] sm:$0xff]
        %v769 = vld [vmem:[#allocation2 + $0x80] sm:$0xff]
        %v770 = vld [vmem:[#allocation2 + $0x88] sm:$0xff]
        %v771 = vld [vmem:[#allocation2 + $0x90] sm:$0xff]
        %v772 = vld [vmem:[#allocation2 + $0x98] sm:$0xff]
        %v773 = vld [vmem:[#allocation2 + $0xa0] sm:$0xff]
        %v774 = vld [vmem:[#allocation2 + $0xa8] sm:$0xff]
        %v775 = vld [vmem:[#allocation2 + $0xb0] sm:$0xff]
        %v776 = vld [vmem:[#allocation2 + $0xb8] sm:$0xff]
        %v777 = vld [vmem:[#allocation2 + $0xc0] sm:$0xff]
        %v778 = vld [vmem:[#allocation2 + $0xc8] sm:$0xff]
        %v779 = vld [vmem:[#allocation2 + $0xd0] sm:$0xff]
        %v780 = vld [vmem:[#allocation2 + $0xd8] sm:$0xff]
        %v781 = vld [vmem:[#allocation2 + $0xe0] sm:$0xff]
        %v782 = vld [vmem:[#allocation2 + $0xe8] sm:$0xff]
        %v783 = vld [vmem:[#allocation2 + $0xf0] sm:$0xff]
        %v784 = vld [vmem:[#allocation2 + $0xf8] sm:$0xff]
        %785 = vst [vmem:[%s255] sm:$0xff] %v753
        %786 = vst [vmem:[%s255 + $0x8] sm:$0xff] %v754
        %787 = vst [vmem:[%s255 + $0x10] sm:$0xff] %v755
        %788 = vst [vmem:[%s255 + $0x18] sm:$0xff] %v756
        %789 = vst [vmem:[%s255 + $0x20] sm:$0xff] %v757
        %790 = vst [vmem:[%s255 + $0x28] sm:$0xff] %v758
        %791 = vst [vmem:[%s255 + $0x30] sm:$0xff] %v759
        %792 = vst [vmem:[%s255 + $0x38] sm:$0xff] %v760
        %793 = vst [vmem:[%s255 + $0x40] sm:$0xff] %v761
        %794 = vst [vmem:[%s255 + $0x48] sm:$0xff] %v762
        %795 = vst [vmem:[%s255 + $0x50] sm:$0xff] %v763
        %796 = vst [vmem:[%s255 + $0x58] sm:$0xff] %v764
        %797 = vst [vmem:[%s255 + $0x60] sm:$0xff] %v765
        %798 = vst [vmem:[%s255 + $0x68] sm:$0xff] %v766
        %799 = vst [vmem:[%s255 + $0x70] sm:$0xff] %v767
        %800 = vst [vmem:[%s255 + $0x78] sm:$0xff] %v768
        %801 = vst [vmem:[%s255 + $0x80] sm:$0xff] %v769
        %802 = vst [vmem:[%s255 + $0x88] sm:$0xff] %v770
        %803 = vst [vmem:[%s255 + $0x90] sm:$0xff] %v771
        %804 = vst [vmem:[%s255 + $0x98] sm:$0xff] %v772
        %805 = vst [vmem:[%s255 + $0xa0] sm:$0xff] %v773
        %806 = vst [vmem:[%s255 + $0xa8] sm:$0xff] %v774
        %807 = vst [vmem:[%s255 + $0xb0] sm:$0xff] %v775
        %808 = vst [vmem:[%s255 + $0xb8] sm:$0xff] %v776
        %809 = vst [vmem:[%s255 + $0xc0] sm:$0xff] %v777
        %810 = vst [vmem:[%s255 + $0xc8] sm:$0xff] %v778
        %811 = vst [vmem:[%s255 + $0xd0] sm:$0xff] %v779
        %812 = vst [vmem:[%s255 + $0xd8] sm:$0xff] %v780
        %813 = vst [vmem:[%s255 + $0xe0] sm:$0xff] %v781
        %814 = vst [vmem:[%s255 + $0xe8] sm:$0xff] %v782
        %815 = vst [vmem:[%s255 + $0xf0] sm:$0xff] %v783
        %816 = vst [vmem:[%s255 + $0xf8] sm:$0xff] %v784
        %v817 = vadd.f32 %v753, %v754
        %v818 = vadd.f32 %v817, %v755
        %v819 = vadd.f32 %v818, %v756
        %v820 = vadd.f32 %v819, %v757
        %v821 = vadd.f32 %v820, %v758
        %v822 = vadd.f32 %v821, %v759
        %v823 = vadd.f32 %v822, %v760
        %v824 = vadd.f32 %v823, %v761
        %v825 = vadd.f32 %v824, %v762
        %v826 = vadd.f32 %v825, %v763
        %v827 = vadd.f32 %v826, %v764
        %v828 = vadd.f32 %v827, %v765
        %v829 = vadd.f32 %v828, %v766
        %v830 = vadd.f32 %v829, %v767
        %v831 = vadd.f32 %v830, %v768
        %v832 = vadd.f32 %v831, %v769
        %v833 = vadd.f32 %v832, %v770
        %v834 = vadd.f32 %v833, %v771
        %v835 = vadd.f32 %v834, %v772
        %v836 = vadd.f32 %v835, %v773
        %v837 = vadd.f32 %v836, %v774
        %v838 = vadd.f32 %v837, %v775
        %v839 = vadd.f32 %v838, %v776
        %v840 = vadd.f32 %v839, %v777
        %v841 = vadd.f32 %v840, %v778
        %v842 = vadd.f32 %v841, %v779
        %v843 = vadd.f32 %v842, %v780
        %v844 = vadd.f32 %v843, %v781
        %v845 = vadd.f32 %v844, %v782
        %v846 = vadd.f32 %v845, %v783
        %v847 = vadd.f32 %v846, %v784
        %v848 = vrot.slane %v847, 4
        %v849 = vadd.f32 %v847, %v848
        %v850 = vrot.slane %v849, 2
        %v851 = vadd.f32 %v849, %v850
        %v852 = vrot.slane %v851, 1
        %v853 = vadd.f32 %v851, %v852
        %v854 = vmul.f32 %v753, %v753
        %v855 = vmul.f32 %v754, %v754
        %v856 = vmul.f32 %v755, %v755
        %v857 = vmul.f32 %v756, %v756
        %v858 = vmul.f32 %v757, %v757
        %v859 = vmul.f32 %v758, %v758
        %v860 = vmul.f32 %v759, %v759
        %v861 = vmul.f32 %v760, %v760
        %v862 = vmul.f32 %v761, %v761
        %v863 = vmul.f32 %v762, %v762
        %v864 = vmul.f32 %v763, %v763
        %v865 = vmul.f32 %v764, %v764
        %v866 = vmul.f32 %v765, %v765
        %v867 = vmul.f32 %v766, %v766
        %v868 = vmul.f32 %v767, %v767
        %v869 = vmul.f32 %v768, %v768
        %v870 = vmul.f32 %v769, %v769
        %v871 = vmul.f32 %v770, %v770
        %v872 = vmul.f32 %v771, %v771
        %v873 = vmul.f32 %v772, %v772
        %v874 = vmul.f32 %v773, %v773
        %v875 = vmul.f32 %v774, %v774
        %v876 = vmul.f32 %v775, %v775
        %v877 = vmul.f32 %v776, %v776
        %v878 = vmul.f32 %v777, %v777
        %v879 = vmul.f32 %v778, %v778
        %v880 = vmul.f32 %v779, %v779
        %v881 = vmul.f32 %v780, %v780
        %v882 = vmul.f32 %v781, %v781
        %v883 = vmul.f32 %v782, %v782
        %v884 = vmul.f32 %v783, %v783
        %v885 = vmul.f32 %v784, %v784
        %v886 = vadd.f32 %v854, %v855
        %v887 = vadd.f32 %v886, %v856
        %v888 = vadd.f32 %v887, %v857
        %v889 = vadd.f32 %v888, %v858
        %v890 = vadd.f32 %v889, %v859
        %v891 = vadd.f32 %v890, %v860
        %v892 = vadd.f32 %v891, %v861
        %v893 = vadd.f32 %v892, %v862
        %v894 = vadd.f32 %v893, %v863
        %v895 = vadd.f32 %v894, %v864
        %v896 = vadd.f32 %v895, %v865
        %v897 = vadd.f32 %v896, %v866
        %v898 = vadd.f32 %v897, %v867
        %v899 = vadd.f32 %v898, %v868
        %v900 = vadd.f32 %v899, %v869
        %v901 = vadd.f32 %v900, %v870
        %v902 = vadd.f32 %v901, %v871
        %v903 = vadd.f32 %v902, %v872
        %v904 = vadd.f32 %v903, %v873
        %v905 = vadd.f32 %v904, %v874
        %v906 = vadd.f32 %v905, %v875
        %v907 = vadd.f32 %v906, %v876
        %v908 = vadd.f32 %v907, %v877
        %v909 = vadd.f32 %v908, %v878
        %v910 = vadd.f32 %v909, %v879
        %v911 = vadd.f32 %v910, %v880
        %v912 = vadd.f32 %v911, %v881
        %v913 = vadd.f32 %v912, %v882
        %v914 = vadd.f32 %v913, %v883
        %v915 = vadd.f32 %v914, %v884
        %v916 = vadd.f32 %v915, %v885
        %v917 = vrot.slane %v916, 4
        %v918 = vadd.f32 %v916, %v917
        %v919 = vrot.slane %v918, 2
        %v920 = vadd.f32 %v918, %v919
        %v921 = vrot.slane %v920, 1
        %v922 = vadd.f32 %v920, %v921
        %vm923 = vcmask 1040384
        %v924 = vsel %vm923, %v853, %v922
        %925 = vst [vmem:[%s263] sm:$0x3] %v924
      $region36: #{bottleneck_forward.6} parent=27 // pred_fallthru
        _
      %s926 = smul.u32 32, %s20
      %p927 = scmp.lt.s32.totalorder %s926, 63
      %s928 = scalar_select %p927, %s926, 63
      %p929 = scmp.lt.s32.totalorder %s21, 0
      %s930 = scalar_select %p929, %s21, 0
      %s931 = sadd.s32 %s930, %s928
      %s932 = smul.addr %s931, 8
      %s933 = scalar_lea.vmem %s2, %s932
      %p934 = scmp.lt.s32.totalorder %s20, 1
      %s935 = scalar_select %p934, %s20, 1
      %p936 = scmp.lt.s32.totalorder %s21, 0
      %s937 = scalar_select %p936, %s21, 0
      %s938 = sadd.s32 %s937, %s935
      %s939 = smul.addr %s938, 2
      %s940 = scalar_lea.vmem %s3, %s939
      // Predicated region
      $region37: #{bottleneck_forward.6} parent=27 // pred_check
        %p941 = pneg %p110
      $region38: #{bottleneck_forward.6} parent=27 // pred_check_branch
        %943 = sbr.rel (%p941) target = $region40
      $region39: #{bottleneck_forward.6} parent=27 // pred_region
        %s944 = smul.u32 32, %s20
      $region40: #{bottleneck_forward.6} parent=27 // pred_fallthru
        _
      // Predicated region
      $region41: #{bottleneck_forward.6} parent=27 // pred_check
        %p945 = pneg %p138
      $region42: #{bottleneck_forward.6} parent=27 // pred_check_branch
        %947 = sbr.rel (%p945) target = $region44
      $region43: #{bottleneck_forward.6} parent=27 // pred_region
        _
      $region44: #{bottleneck_forward.6} parent=27 // pred_fallthru
        _
    $region28: #{bottleneck_forward.6} parent=5 // pred_fallthru
      _
    %p948 = scmp.le.s32.totalorder 2, %s10
    // Predicated region
    $region45: #{bottleneck_forward.6} parent=5 // pred_check
      %p949 = pneg %p948
    $region46: #{bottleneck_forward.6} parent=5 // pred_check_branch
      %951 = sbr.rel (%p949) target = $region48
    $region47: #{bottleneck_forward.6} parent=5 // pred_region
      %s952 = ssub.s32 %s10, 2
      // Predicated region
      $region49: #{bottleneck_forward.6} parent=47 // pred_check
        %p953 = pneg %p116
      $region50: #{bottleneck_forward.6} parent=47 // pred_check_branch
        %955 = sbr.rel (%p953) target = $region52
      $region51: #{bottleneck_forward.6} parent=47 // pred_region
        %s956 = smul.u32 32, %s23
        %p957 = scmp.lt.s32.totalorder %s956, 63
        %s958 = scalar_select %p957, %s956, 63
        %p959 = scmp.lt.s32.totalorder %s24, 0
        %s960 = scalar_select %p959, %s24, 0
        %s961 = sadd.s32 %s960, %s958
        %s962 = smul.addr %s961, 8
        %s963 = scalar_lea.vmem %s2, %s962
      $region52: #{bottleneck_forward.6} parent=47 // pred_fallthru
        _
      // Predicated region
      $region53: #{bottleneck_forward.6} parent=47 // pred_check
        %p964 = pneg %p144
      $region54: #{bottleneck_forward.6} parent=47 // pred_check_branch
        %966 = sbr.rel (%p964) target = $region56
      $region55: #{bottleneck_forward.6} parent=47 // pred_region
        %p967 = scmp.lt.s32.totalorder %s23, 1
        %s968 = scalar_select %p967, %s23, 1
        %p969 = scmp.lt.s32.totalorder %s24, 0
        %s970 = scalar_select %p969, %s24, 0
        %s971 = sadd.s32 %s970, %s968
        %s972 = smul.addr %s971, 2
        %s973 = scalar_lea.vmem %s3, %s972
      $region56: #{bottleneck_forward.6} parent=47 // pred_fallthru
        _
    $region48: #{bottleneck_forward.6} parent=5 // pred_fallthru
      _
  $region6: #{bottleneck_forward.6} parent=0 // loop_footer
    %s14 = sadd.s32 1, %s10
  $region7: #{bottleneck_forward.6} parent=0 // loop_footer_branch
    %9 = sbr.rel target = $region3
  $region8: #{bottleneck_forward.6} parent=0 // loop_exit
    _

// kernel: bottleneck_forward.11
$region0: #{bottleneck_forward.11}
  #allocation0 [shape = 'u32[]', space=smem, size = 0x4, offset = 0x4, fixed_abs, tag = 'smem constant byte address 0x4 - core index']
  #allocation1 [shape = 'u32[144,128]{1,0:T(1,128)}', space=vmem, size = 0x12000, scoped, tag = 'internal scratch']
  %s0 = inlined_call_operand.vmem [shape: f32[512,128], index: 0, kind: input, shape index: {}]
  %s1 = inlined_call_operand.vmem [shape: f32[1,128], index: 1, kind: input, shape index: {}]
  %s2 = inlined_call_operand.vmem [shape: f32[1,128], index: 2, kind: input, shape index: {}]
  %s3 = inlined_call_operand.vmem [shape: f32[512,128], index: 3, kind: input, shape index: {}]
  %s4 = inlined_call_operand.vmem [shape: f32[512,128], index: 4, kind: output, shape index: {}]
  %s5 = sld [smem:[#allocation0]]
  $region49: #{bottleneck_forward.11} parent=0
    _
  %s7 = ssub.s32 1, %s5
  %s8 = scalar_select 0, %s7, %s5
  loop: start=0, step=1, limit=4
  $region2: #{bottleneck_forward.11} parent=0 // loop_pre_header
    _
  $region3: #{bottleneck_forward.11} parent=0 // loop_header
    %s10 = sphi 0, %s14
    %p11 = scmp.ge.s32.totalorder %s10, 4
    %s17 = sphi 0, %s29
    %s18 = sphi 0, %s25
    %s19 = sphi 0, %s17
    %s20 = sphi 0, %s18
    %s21 = sphi 0, %s19
    %s22 = sphi 0, %s20
    %s34 = sphi 0, %s36
    %s37 = sphi 0, %s34
    %s38 = sphi 0, %s37
    %s54 = sphi 0, %s38
    %s60 = sphi 0, %s62
    %s63 = sphi 0, %s60
    %s64 = sphi 0, %s63
    %s80 = sphi 0, %s64
    %s86 = sphi 0, %s88
    %s89 = sphi 0, %s86
    %s90 = sphi 0, %s89
    %s106 = sphi 0, %s90
    %s114 = sphi 0, %s116
    %s117 = sphi 0, %s114
    %s118 = sphi 0, %s117
    %s134 = sphi 0, %s118
    %s142 = sphi 0, %s144
    %s145 = sphi 0, %s142
    %s146 = sphi 0, %s145
    %s162 = sphi 0, %s146
  $region4: #{bottleneck_forward.11} parent=0 // loop_header_branch
    %13 = sbr.rel (%p11) target = $region8
  $region5: #{bottleneck_forward.11} parent=0 // loop_body
    %s15 = ssub.s32 %s10, 1
    %s16 = ssub.s32 %s10, 2
    %s23 = sadd.s32 1, %s18
    %p24 = scmp.ge.s32.totalorder %s23, 1
    %s25 = scalar_select %p24, 0, %s23
    %s26 = sadd.s32 1, %s17
    %s27 = scalar_select %p24, %s26, %s17
    %p28 = scmp.ge.s32.totalorder %s27, 2
    %s29 = scalar_select %p28, 0, %s27
    %s30 = ssub.s32 %s17, %s29
    %s31 = ssub.s32 %s18, %s25
    %s32 = sor.u32 %s30, %s31
    %p33 = scmp.eq.s32.totalorder %s32, 0
    %s35 = sadd.s32 %s34, 1
    %s36 = scalar_select %p33, %s34, %s35
    %p39 = pneg %p33
    %p40 = scmp.eq.s32.totalorder %s10, 1
    %p41 = por %p39, %p40
    %p42 = scmp.ne.s32.totalorder %s34, %s37
    %p43 = scmp.eq.s32.totalorder %s10, 0
    %p44 = por %p42, %p43
    %p45 = scmp.ne.s32.totalorder %s34, %s37
    %p46 = scmp.eq.s32.totalorder %s15, 1
    %p47 = por %p45, %p46
    %p48 = scmp.ne.s32.totalorder %s37, %s38
    %p49 = scmp.eq.s32.totalorder %s15, 0
    %p50 = por %p48, %p49
    %p51 = scmp.ne.s32.totalorder %s37, %s38
    %p52 = scmp.eq.s32.totalorder %s16, 1
    %p53 = por %p51, %p52
    %p55 = scmp.ne.s32.totalorder %s38, %s54
    %p56 = scmp.eq.s32.totalorder %s16, 0
    %p57 = por %p55, %p56
    %s58 = ssub.s32 %s18, %s25
    %p59 = scmp.eq.s32.totalorder %s58, 0
    %s61 = sadd.s32 %s60, 1
    %s62 = scalar_select %p59, %s60, %s61
    %p65 = pneg %p59
    %p66 = scmp.eq.s32.totalorder %s10, 1
    %p67 = por %p65, %p66
    %p68 = scmp.ne.s32.totalorder %s60, %s63
    %p69 = scmp.eq.s32.totalorder %s10, 0
    %p70 = por %p68, %p69
    %p71 = scmp.ne.s32.totalorder %s60, %s63
    %p72 = scmp.eq.s32.totalorder %s15, 1
    %p73 = por %p71, %p72
    %p74 = scmp.ne.s32.totalorder %s63, %s64
    %p75 = scmp.eq.s32.totalorder %s15, 0
    %p76 = por %p74, %p75
    %p77 = scmp.ne.s32.totalorder %s63, %s64
    %p78 = scmp.eq.s32.totalorder %s16, 1
    %p79 = por %p77, %p78
    %p81 = scmp.ne.s32.totalorder %s64, %s80
    %p82 = scmp.eq.s32.totalorder %s16, 0
    %p83 = por %p81, %p82
    %s84 = ssub.s32 %s18, %s25
    %p85 = scmp.eq.s32.totalorder %s84, 0
    %s87 = sadd.s32 %s86, 1
    %s88 = scalar_select %p85, %s86, %s87
    %p91 = pneg %p85
    %p92 = scmp.eq.s32.totalorder %s10, 1
    %p93 = por %p91, %p92
    %p94 = scmp.ne.s32.totalorder %s86, %s89
    %p95 = scmp.eq.s32.totalorder %s10, 0
    %p96 = por %p94, %p95
    %p97 = scmp.ne.s32.totalorder %s86, %s89
    %p98 = scmp.eq.s32.totalorder %s15, 1
    %p99 = por %p97, %p98
    %p100 = scmp.ne.s32.totalorder %s89, %s90
    %p101 = scmp.eq.s32.totalorder %s15, 0
    %p102 = por %p100, %p101
    %p103 = scmp.ne.s32.totalorder %s89, %s90
    %p104 = scmp.eq.s32.totalorder %s16, 1
    %p105 = por %p103, %p104
    %p107 = scmp.ne.s32.totalorder %s90, %s106
    %p108 = scmp.eq.s32.totalorder %s16, 0
    %p109 = por %p107, %p108
    %s110 = ssub.s32 %s17, %s29
    %s111 = ssub.s32 %s18, %s25
    %s112 = sor.u32 %s110, %s111
    %p113 = scmp.eq.s32.totalorder %s112, 0
    %s115 = sadd.s32 %s114, 1
    %s116 = scalar_select %p113, %s114, %s115
    %p119 = pneg %p113
    %p120 = scmp.eq.s32.totalorder %s10, 1
    %p121 = por %p119, %p120
    %p122 = scmp.ne.s32.totalorder %s114, %s117
    %p123 = scmp.eq.s32.totalorder %s10, 0
    %p124 = por %p122, %p123
    %p125 = scmp.ne.s32.totalorder %s114, %s117
    %p126 = scmp.eq.s32.totalorder %s15, 1
    %p127 = por %p125, %p126
    %p128 = scmp.ne.s32.totalorder %s117, %s118
    %p129 = scmp.eq.s32.totalorder %s15, 0
    %p130 = por %p128, %p129
    %p131 = scmp.ne.s32.totalorder %s117, %s118
    %p132 = scmp.eq.s32.totalorder %s16, 1
    %p133 = por %p131, %p132
    %p135 = scmp.ne.s32.totalorder %s118, %s134
    %p136 = scmp.eq.s32.totalorder %s16, 0
    %p137 = por %p135, %p136
    %s138 = ssub.s32 %s17, %s29
    %s139 = ssub.s32 %s18, %s25
    %s140 = sor.u32 %s138, %s139
    %p141 = scmp.eq.s32.totalorder %s140, 0
    %s143 = sadd.s32 %s142, 1
    %s144 = scalar_select %p141, %s142, %s143
    %p147 = pneg %p141
    %p148 = scmp.eq.s32.totalorder %s10, 1
    %p149 = por %p147, %p148
    %p150 = scmp.ne.s32.totalorder %s142, %s145
    %p151 = scmp.eq.s32.totalorder %s10, 0
    %p152 = por %p150, %p151
    %p153 = scmp.ne.s32.totalorder %s142, %s145
    %p154 = scmp.eq.s32.totalorder %s15, 1
    %p155 = por %p153, %p154
    %p156 = scmp.ne.s32.totalorder %s145, %s146
    %p157 = scmp.eq.s32.totalorder %s15, 0
    %p158 = por %p156, %p157
    %p159 = scmp.ne.s32.totalorder %s145, %s146
    %p160 = scmp.eq.s32.totalorder %s16, 1
    %p161 = por %p159, %p160
    %p163 = scmp.ne.s32.totalorder %s146, %s162
    %p164 = scmp.eq.s32.totalorder %s16, 0
    %p165 = por %p163, %p164
    %p166 = scmp.le.s32.totalorder 1, %s10
    %p167 = scmp.lt.s32.totalorder %s10, 3
    %p168 = pnand %p166, %p167
    %p169 = pneg %p168
    // Predicated region
    $region9: #{bottleneck_forward.11} parent=5 // pred_check
      _
    $region10: #{bottleneck_forward.11} parent=5 // pred_check_branch
      %171 = sbr.rel (%p168) target = $region12
    $region11: #{bottleneck_forward.11} parent=5 // pred_region
      %s172 = ssub.s32 %s10, 1
      // Predicated region
      $region13: #{bottleneck_forward.11} parent=11 // pred_check
        %p173 = pneg %p76
      $region14: #{bottleneck_forward.11} parent=11 // pred_check_branch
        %175 = sbr.rel (%p173) target = $region16
      $region15: #{bottleneck_forward.11} parent=11 // pred_region
        %p176 = scmp.lt.s32.totalorder %s20, 0
        %s177 = scalar_select %p176, %s20, 0
        %s178 = scalar_lea.vmem %s1, %s177
      $region16: #{bottleneck_forward.11} parent=11 // pred_fallthru
        _
      // Predicated region
      $region17: #{bottleneck_forward.11} parent=11 // pred_check
        %p179 = pneg %p102
      $region18: #{bottleneck_forward.11} parent=11 // pred_check_branch
        %181 = sbr.rel (%p179) target = $region20
      $region19: #{bottleneck_forward.11} parent=11 // pred_region
        %p182 = scmp.lt.s32.totalorder %s20, 0
        %s183 = scalar_select %p182, %s20, 0
        %s184 = scalar_lea.vmem %s2, %s183
      $region20: #{bottleneck_forward.11} parent=11 // pred_fallthru
        _
    $region12: #{bottleneck_forward.11} parent=5 // pred_fallthru
      _
    %p185 = scmp.lt.s32.totalorder %s10, 2
    // Predicated region
    $region21: #{bottleneck_forward.11} parent=5 // pred_check
      %p186 = pneg %p185
    $region22: #{bottleneck_forward.11} parent=5 // pred_check_branch
      %188 = sbr.rel (%p186) target = $region24
    $region23: #{bottleneck_forward.11} parent=5 // pred_region
      // Predicated region
      $region25: #{bottleneck_forward.11} parent=23 // pred_check
        %p189 = pneg %p44
      $region26: #{bottleneck_forward.11} parent=23 // pred_check_branch
        %191 = sbr.rel (%p189) target = $region28
      $region27: #{bottleneck_forward.11} parent=23 // pred_region
        %s192 = smul.u32 32, %s17
        %p193 = scmp.lt.s32.totalorder %s192, 63
        %s194 = scalar_select %p193, %s192, 63
        %p195 = scmp.lt.s32.totalorder %s18, 0
        %s196 = scalar_select %p195, %s18, 0
        %s197 = sadd.s32 %s196, %s194
        %s198 = smul.addr %s197, 8
        %s199 = scalar_lea.vmem %s0, %s198
        %s200 = smul.u32 32, %s17
      $region28: #{bottleneck_forward.11} parent=23 // pred_fallthru
        _
      // Predicated region
      $region29: #{bottleneck_forward.11} parent=23 // pred_check
        %p201 = pneg %p124
      $region30: #{bottleneck_forward.11} parent=23 // pred_check_branch
        %203 = sbr.rel (%p201) target = $region32
      $region31: #{bottleneck_forward.11} parent=23 // pred_region
        %s204 = smul.u32 32, %s17
        %p205 = scmp.lt.s32.totalorder %s204, 63
        %s206 = scalar_select %p205, %s204, 63
        %p207 = scmp.lt.s32.totalorder %s18, 0
        %s208 = scalar_select %p207, %s18, 0
        %s209 = sadd.s32 %s208, %s206
        %s210 = smul.addr %s209, 8
        %s211 = scalar_lea.vmem %s3, %s210
        %s212 = smul.u32 32, %s17
      $region32: #{bottleneck_forward.11} parent=23 // pred_fallthru
        _
    $region24: #{bottleneck_forward.11} parent=5 // pred_fallthru
      _
    %p213 = scmp.le.s32.totalorder 1, %s10
    %p214 = scmp.lt.s32.totalorder %s10, 3
    %p215 = pnand %p213, %p214
    %p216 = pneg %p215
    // Predicated region
    $region33: #{bottleneck_forward.11} parent=5 // pred_check
      _
    $region34: #{bottleneck_forward.11} parent=5 // pred_check_branch
      %218 = sbr.rel (%p215) target = $region36
    $region35: #{bottleneck_forward.11} parent=5 // pred_region
      %s219 = ssub.s32 %s10, 1
      %s220 = smul.u32 32, %s19
      %p221 = scmp.lt.s32.totalorder %s220, 63
      %s222 = scalar_select %p221, %s220, 63
      %p223 = scmp.lt.s32.totalorder %s20, 0
      %s224 = scalar_select %p223, %s20, 0
      %s225 = sadd.s32 %s224, %s222
      %s226 = smul.addr %s225, 8
      %s227 = scalar_lea.vmem %s0, %s226
      %p228 = pneg %p50
      %p229 = pneg %p47
      %p230 = scmp.lt.s32.totalorder %s20, 0
      %s231 = scalar_select %p230, %s20, 0
      %s232 = scalar_lea.vmem %s1, %s231
      %p233 = pneg %p76
      %p234 = pneg %p73
      %p235 = scmp.lt.s32.totalorder %s20, 0
      %s236 = scalar_select %p235, %s20, 0
      %s237 = scalar_lea.vmem %s2, %s236
      %p238 = pneg %p102
      %p239 = pneg %p99
      %s240 = smul.u32 32, %s19
      %p241 = scmp.lt.s32.totalorder %s240, 63
      %s242 = scalar_select %p241, %s240, 63
      %p243 = scmp.lt.s32.totalorder %s20, 0
      %s244 = scalar_select %p243, %s20, 0
      %s245 = sadd.s32 %s244, %s242
      %s246 = smul.addr %s245, 8
      %s247 = scalar_lea.vmem %s3, %s246
      %p248 = pneg %p130
      %p249 = pneg %p127
      %p250 = pneg %p158
      %p251 = pneg %p155
      %s252 = smul.u32 32, %s19
      %p253 = scmp.lt.s32.totalorder %s252, 63
      %s254 = scalar_select %p253, %s252, 63
      %p255 = scmp.lt.s32.totalorder %s20, 0
      %s256 = scalar_select %p255, %s20, 0
      %s257 = sadd.s32 %s256, %s254
      %s258 = smul.addr %s257, 8
      %s259 = scalar_lea.vmem %s4, %s258
      %s260 = smul.u32 32, %s19
      %p261 = scmp.lt.s32.totalorder %s260, 63
      %s262 = scalar_select %p261, %s260, 63
      %p263 = scmp.lt.s32.totalorder %s20, 0
      %s264 = scalar_select %p263, %s20, 0
      %s265 = sadd.s32 %s264, %s262
      %s266 = smul.addr %s265, 8
      %s267 = scalar_lea.vmem %s0, %s266
      %s268 = smul.u32 32, %s19
      %p269 = scmp.lt.s32.totalorder %s20, 0
      %s270 = scalar_select %p269, %s20, 0
      %s271 = scalar_lea.vmem %s1, %s270
      %p272 = scmp.lt.s32.totalorder %s20, 0
      %s273 = scalar_select %p272, %s20, 0
      %s274 = scalar_lea.vmem %s2, %s273
      %s275 = smul.u32 32, %s19
      %p276 = scmp.lt.s32.totalorder %s275, 63
      %s277 = scalar_select %p276, %s275, 63
      %p278 = scmp.lt.s32.totalorder %s20, 0
      %s279 = scalar_select %p278, %s20, 0
      %s280 = sadd.s32 %s279, %s277
      %s281 = smul.addr %s280, 8
      %s282 = scalar_lea.vmem %s3, %s281
      %s283 = smul.u32 32, %s19
      %s284 = smul.u32 32, %s19
      %p285 = scmp.lt.s32.totalorder %s284, 63
      %s286 = scalar_select %p285, %s284, 63
      %p287 = scmp.lt.s32.totalorder %s20, 0
      %s288 = scalar_select %p287, %s20, 0
      %s289 = sadd.s32 %s288, %s286
      %s290 = smul.addr %s289, 8
      %s291 = scalar_lea.vmem %s4, %s290
      %s292 = smul.u32 32, %s19
      %v293 = vld [vmem:[%s267] sm:$0xff]
      %v294 = vld [vmem:[%s267 + $0x8] sm:$0xff]
      %v295 = vld [vmem:[%s267 + $0x10] sm:$0xff]
      %v296 = vld [vmem:[%s267 + $0x18] sm:$0xff]
      %v297 = vld [vmem:[%s267 + $0x20] sm:$0xff]
      %v298 = vld [vmem:[%s267 + $0x28] sm:$0xff]
      %v299 = vld [vmem:[%s267 + $0x30] sm:$0xff]
      %v300 = vld [vmem:[%s267 + $0x38] sm:$0xff]
      %v301 = vld [vmem:[%s267 + $0x40] sm:$0xff]
      %v302 = vld [vmem:[%s267 + $0x48] sm:$0xff]
      %v303 = vld [vmem:[%s267 + $0x50] sm:$0xff]
      %v304 = vld [vmem:[%s267 + $0x58] sm:$0xff]
      %v305 = vld [vmem:[%s267 + $0x60] sm:$0xff]
      %v306 = vld [vmem:[%s267 + $0x68] sm:$0xff]
      %v307 = vld [vmem:[%s267 + $0x70] sm:$0xff]
      %v308 = vld [vmem:[%s267 + $0x78] sm:$0xff]
      %v309 = vld [vmem:[%s267 + $0x80] sm:$0xff]
      %v310 = vld [vmem:[%s267 + $0x88] sm:$0xff]
      %v311 = vld [vmem:[%s267 + $0x90] sm:$0xff]
      %v312 = vld [vmem:[%s267 + $0x98] sm:$0xff]
      %v313 = vld [vmem:[%s267 + $0xa0] sm:$0xff]
      %v314 = vld [vmem:[%s267 + $0xa8] sm:$0xff]
      %v315 = vld [vmem:[%s267 + $0xb0] sm:$0xff]
      %v316 = vld [vmem:[%s267 + $0xb8] sm:$0xff]
      %v317 = vld [vmem:[%s267 + $0xc0] sm:$0xff]
      %v318 = vld [vmem:[%s267 + $0xc8] sm:$0xff]
      %v319 = vld [vmem:[%s267 + $0xd0] sm:$0xff]
      %v320 = vld [vmem:[%s267 + $0xd8] sm:$0xff]
      %v321 = vld [vmem:[%s267 + $0xe0] sm:$0xff]
      %v322 = vld [vmem:[%s267 + $0xe8] sm:$0xff]
      %v323 = vld [vmem:[%s267 + $0xf0] sm:$0xff]
      %v324 = vld [vmem:[%s267 + $0xf8] sm:$0xff]
      %v325 = vld [vmem:[%s271] sm:$0x1]
      %v327 = vlaneseq
      %v328 = vshrl.u32 %v327, 7
      %v329 = vsub.s32 0, %v328
      %v330 = vrot.slane %v325, %v329
      %v332 = vmul.f32 %v293, %v330
      %v333 = vmul.f32 %v294, %v330
      %v334 = vmul.f32 %v295, %v330
      %v335 = vmul.f32 %v296, %v330
      %v336 = vmul.f32 %v297, %v330
      %v337 = vmul.f32 %v298, %v330
      %v338 = vmul.f32 %v299, %v330
      %v339 = vmul.f32 %v300, %v330
      %v340 = vmul.f32 %v301, %v330
      %v341 = vmul.f32 %v302, %v330
      %v342 = vmul.f32 %v303, %v330
      %v343 = vmul.f32 %v304, %v330
      %v344 = vmul.f32 %v305, %v330
      %v345 = vmul.f32 %v306, %v330
      %v346 = vmul.f32 %v307, %v330
      %v347 = vmul.f32 %v308, %v330
      %v348 = vmul.f32 %v309, %v330
      %v349 = vmul.f32 %v310, %v330
      %v350 = vmul.f32 %v311, %v330
      %v351 = vmul.f32 %v312, %v330
      %v352 = vmul.f32 %v313, %v330
      %v353 = vmul.f32 %v314, %v330
      %v354 = vmul.f32 %v315, %v330
      %v355 = vmul.f32 %v316, %v330
      %v356 = vmul.f32 %v317, %v330
      %v357 = vmul.f32 %v318, %v330
      %v358 = vmul.f32 %v319, %v330
      %v359 = vmul.f32 %v320, %v330
      %v360 = vmul.f32 %v321, %v330
      %v361 = vmul.f32 %v322, %v330
      %v362 = vmul.f32 %v323, %v330
      %v363 = vmul.f32 %v324, %v330
      %v364 = vld [vmem:[%s274] sm:$0x1]
      %v366 = vlaneseq
      %v367 = vshrl.u32 %v366, 7
      %v368 = vsub.s32 0, %v367
      %v369 = vrot.slane %v364, %v368
      %v371 = vadd.f32 %v332, %v369
      %v372 = vadd.f32 %v333, %v369
      %v373 = vadd.f32 %v334, %v369
      %v374 = vadd.f32 %v335, %v369
      %v375 = vadd.f32 %v336, %v369
      %v376 = vadd.f32 %v337, %v369
      %v377 = vadd.f32 %v338, %v369
      %v378 = vadd.f32 %v339, %v369
      %v379 = vadd.f32 %v340, %v369
      %v380 = vadd.f32 %v341, %v369
      %v381 = vadd.f32 %v342, %v369
      %v382 = vadd.f32 %v343, %v369
      %v383 = vadd.f32 %v344, %v369
      %v384 = vadd.f32 %v345, %v369
      %v385 = vadd.f32 %v346, %v369
      %v386 = vadd.f32 %v347, %v369
      %v387 = vadd.f32 %v348, %v369
      %v388 = vadd.f32 %v349, %v369
      %v389 = vadd.f32 %v350, %v369
      %v390 = vadd.f32 %v351, %v369
      %v391 = vadd.f32 %v352, %v369
      %v392 = vadd.f32 %v353, %v369
      %v393 = vadd.f32 %v354, %v369
      %v394 = vadd.f32 %v355, %v369
      %v395 = vadd.f32 %v356, %v369
      %v396 = vadd.f32 %v357, %v369
      %v397 = vadd.f32 %v358, %v369
      %v398 = vadd.f32 %v359, %v369
      %v399 = vadd.f32 %v360, %v369
      %v400 = vadd.f32 %v361, %v369
      %v401 = vadd.f32 %v362, %v369
      %v402 = vadd.f32 %v363, %v369
      %v403 = vld [vmem:[%s282] sm:$0xff]
      %v404 = vld [vmem:[%s282 + $0x8] sm:$0xff]
      %v405 = vld [vmem:[%s282 + $0x10] sm:$0xff]
      %v406 = vld [vmem:[%s282 + $0x18] sm:$0xff]
      %v407 = vld [vmem:[%s282 + $0x20] sm:$0xff]
      %v408 = vld [vmem:[%s282 + $0x28] sm:$0xff]
      %v409 = vld [vmem:[%s282 + $0x30] sm:$0xff]
      %v410 = vld [vmem:[%s282 + $0x38] sm:$0xff]
      %v411 = vld [vmem:[%s282 + $0x40] sm:$0xff]
      %v412 = vld [vmem:[%s282 + $0x48] sm:$0xff]
      %v413 = vld [vmem:[%s282 + $0x50] sm:$0xff]
      %v414 = vld [vmem:[%s282 + $0x58] sm:$0xff]
      %v415 = vld [vmem:[%s282 + $0x60] sm:$0xff]
      %v416 = vld [vmem:[%s282 + $0x68] sm:$0xff]
      %v417 = vld [vmem:[%s282 + $0x70] sm:$0xff]
      %v418 = vld [vmem:[%s282 + $0x78] sm:$0xff]
      %v419 = vld [vmem:[%s282 + $0x80] sm:$0xff]
      %v420 = vld [vmem:[%s282 + $0x88] sm:$0xff]
      %v421 = vld [vmem:[%s282 + $0x90] sm:$0xff]
      %v422 = vld [vmem:[%s282 + $0x98] sm:$0xff]
      %v423 = vld [vmem:[%s282 + $0xa0] sm:$0xff]
      %v424 = vld [vmem:[%s282 + $0xa8] sm:$0xff]
      %v425 = vld [vmem:[%s282 + $0xb0] sm:$0xff]
      %v426 = vld [vmem:[%s282 + $0xb8] sm:$0xff]
      %v427 = vld [vmem:[%s282 + $0xc0] sm:$0xff]
      %v428 = vld [vmem:[%s282 + $0xc8] sm:$0xff]
      %v429 = vld [vmem:[%s282 + $0xd0] sm:$0xff]
      %v430 = vld [vmem:[%s282 + $0xd8] sm:$0xff]
      %v431 = vld [vmem:[%s282 + $0xe0] sm:$0xff]
      %v432 = vld [vmem:[%s282 + $0xe8] sm:$0xff]
      %v433 = vld [vmem:[%s282 + $0xf0] sm:$0xff]
      %v434 = vld [vmem:[%s282 + $0xf8] sm:$0xff]
      %v435 = vadd.f32 %v371, %v403
      %v436 = vadd.f32 %v372, %v404
      %v437 = vadd.f32 %v373, %v405
      %v438 = vadd.f32 %v374, %v406
      %v439 = vadd.f32 %v375, %v407
      %v440 = vadd.f32 %v376, %v408
      %v441 = vadd.f32 %v377, %v409
      %v442 = vadd.f32 %v378, %v410
      %v443 = vadd.f32 %v379, %v411
      %v444 = vadd.f32 %v380, %v412
      %v445 = vadd.f32 %v381, %v413
      %v446 = vadd.f32 %v382, %v414
      %v447 = vadd.f32 %v383, %v415
      %v448 = vadd.f32 %v384, %v416
      %v449 = vadd.f32 %v385, %v417
      %v450 = vadd.f32 %v386, %v418
      %v451 = vadd.f32 %v387, %v419
      %v452 = vadd.f32 %v388, %v420
      %v453 = vadd.f32 %v389, %v421
      %v454 = vadd.f32 %v390, %v422
      %v455 = vadd.f32 %v391, %v423
      %v456 = vadd.f32 %v392, %v424
      %v457 = vadd.f32 %v393, %v425
      %v458 = vadd.f32 %v394, %v426
      %v459 = vadd.f32 %v395, %v427
      %v460 = vadd.f32 %v396, %v428
      %v461 = vadd.f32 %v397, %v429
      %v462 = vadd.f32 %v398, %v430
      %v463 = vadd.f32 %v399, %v431
      %v464 = vadd.f32 %v400, %v432
      %v465 = vadd.f32 %v401, %v433
      %v466 = vadd.f32 %v402, %v434
      %v467 = vmax.f32 %v435, 0.0
      %v468 = vmax.f32 %v436, 0.0
      %v469 = vmax.f32 %v437, 0.0
      %v470 = vmax.f32 %v438, 0.0
      %v471 = vmax.f32 %v439, 0.0
      %v472 = vmax.f32 %v440, 0.0
      %v473 = vmax.f32 %v441, 0.0
      %v474 = vmax.f32 %v442, 0.0
      %v475 = vmax.f32 %v443, 0.0
      %v476 = vmax.f32 %v444, 0.0
      %v477 = vmax.f32 %v445, 0.0
      %v478 = vmax.f32 %v446, 0.0
      %v479 = vmax.f32 %v447, 0.0
      %v480 = vmax.f32 %v448, 0.0
      %v481 = vmax.f32 %v449, 0.0
      %v482 = vmax.f32 %v450, 0.0
      %v483 = vmax.f32 %v451, 0.0
      %v484 = vmax.f32 %v452, 0.0
      %v485 = vmax.f32 %v453, 0.0
      %v486 = vmax.f32 %v454, 0.0
      %v487 = vmax.f32 %v455, 0.0
      %v488 = vmax.f32 %v456, 0.0
      %v489 = vmax.f32 %v457, 0.0
      %v490 = vmax.f32 %v458, 0.0
      %v491 = vmax.f32 %v459, 0.0
      %v492 = vmax.f32 %v460, 0.0
      %v493 = vmax.f32 %v461, 0.0
      %v494 = vmax.f32 %v462, 0.0
      %v495 = vmax.f32 %v463, 0.0
      %v496 = vmax.f32 %v464, 0.0
      %v497 = vmax.f32 %v465, 0.0
      %v498 = vmax.f32 %v466, 0.0
      %499 = vst [vmem:[%s291] sm:$0xff] %v467
      %500 = vst [vmem:[%s291 + $0x8] sm:$0xff] %v468
      %501 = vst [vmem:[%s291 + $0x10] sm:$0xff] %v469
      %502 = vst [vmem:[%s291 + $0x18] sm:$0xff] %v470
      %503 = vst [vmem:[%s291 + $0x20] sm:$0xff] %v471
      %504 = vst [vmem:[%s291 + $0x28] sm:$0xff] %v472
      %505 = vst [vmem:[%s291 + $0x30] sm:$0xff] %v473
      %506 = vst [vmem:[%s291 + $0x38] sm:$0xff] %v474
      %507 = vst [vmem:[%s291 + $0x40] sm:$0xff] %v475
      %508 = vst [vmem:[%s291 + $0x48] sm:$0xff] %v476
      %509 = vst [vmem:[%s291 + $0x50] sm:$0xff] %v477
      %510 = vst [vmem:[%s291 + $0x58] sm:$0xff] %v478
      %511 = vst [vmem:[%s291 + $0x60] sm:$0xff] %v479
      %512 = vst [vmem:[%s291 + $0x68] sm:$0xff] %v480
      %513 = vst [vmem:[%s291 + $0x70] sm:$0xff] %v481
      %514 = vst [vmem:[%s291 + $0x78] sm:$0xff] %v482
      %515 = vst [vmem:[%s291 + $0x80] sm:$0xff] %v483
      %516 = vst [vmem:[%s291 + $0x88] sm:$0xff] %v484
      %517 = vst [vmem:[%s291 + $0x90] sm:$0xff] %v485
      %518 = vst [vmem:[%s291 + $0x98] sm:$0xff] %v486
      %519 = vst [vmem:[%s291 + $0xa0] sm:$0xff] %v487
      %520 = vst [vmem:[%s291 + $0xa8] sm:$0xff] %v488
      %521 = vst [vmem:[%s291 + $0xb0] sm:$0xff] %v489
      %522 = vst [vmem:[%s291 + $0xb8] sm:$0xff] %v490
      %523 = vst [vmem:[%s291 + $0xc0] sm:$0xff] %v491
      %524 = vst [vmem:[%s291 + $0xc8] sm:$0xff] %v492
      %525 = vst [vmem:[%s291 + $0xd0] sm:$0xff] %v493
      %526 = vst [vmem:[%s291 + $0xd8] sm:$0xff] %v494
      %527 = vst [vmem:[%s291 + $0xe0] sm:$0xff] %v495
      %528 = vst [vmem:[%s291 + $0xe8] sm:$0xff] %v496
      %529 = vst [vmem:[%s291 + $0xf0] sm:$0xff] %v497
      %530 = vst [vmem:[%s291 + $0xf8] sm:$0xff] %v498
      %s531 = smul.u32 32, %s19
      %p532 = scmp.lt.s32.totalorder %s531, 63
      %s533 = scalar_select %p532, %s531, 63
      %p534 = scmp.lt.s32.totalorder %s20, 0
      %s535 = scalar_select %p534, %s20, 0
      %s536 = sadd.s32 %s535, %s533
      %s537 = smul.addr %s536, 8
      %s538 = scalar_lea.vmem %s4, %s537
      // Predicated region
      $region37: #{bottleneck_forward.11} parent=35 // pred_check
        %p539 = pneg %p155
      $region38: #{bottleneck_forward.11} parent=35 // pred_check_branch
        %541 = sbr.rel (%p539) target = $region40
      $region39: #{bottleneck_forward.11} parent=35 // pred_region
        %s542 = smul.u32 32, %s19
      $region40: #{bottleneck_forward.11} parent=35 // pred_fallthru
        _
    $region36: #{bottleneck_forward.11} parent=5 // pred_fallthru
      _
    %p543 = scmp.le.s32.totalorder 2, %s10
    // Predicated region
    $region41: #{bottleneck_forward.11} parent=5 // pred_check
      %p544 = pneg %p543
    $region42: #{bottleneck_forward.11} parent=5 // pred_check_branch
      %546 = sbr.rel (%p544) target = $region44
    $region43: #{bottleneck_forward.11} parent=5 // pred_region
      %s547 = ssub.s32 %s10, 2
      // Predicated region
      $region45: #{bottleneck_forward.11} parent=43 // pred_check
        %p548 = pneg %p161
      $region46: #{bottleneck_forward.11} parent=43 // pred_check_branch
        %550 = sbr.rel (%p548) target = $region48
      $region47: #{bottleneck_forward.11} parent=43 // pred_region
        %s551 = smul.u32 32, %s21
        %p552 = scmp.lt.s32.totalorder %s551, 63
        %s553 = scalar_select %p552, %s551, 63
        %p554 = scmp.lt.s32.totalorder %s22, 0
        %s555 = scalar_select %p554, %s22, 0
        %s556 = sadd.s32 %s555, %s553
        %s557 = smul.addr %s556, 8
        %s558 = scalar_lea.vmem %s4, %s557
      $region48: #{bottleneck_forward.11} parent=43 // pred_fallthru
        _
    $region44: #{bottleneck_forward.11} parent=5 // pred_fallthru
      _
  $region6: #{bottleneck_forward.11} parent=0 // loop_footer
    %s14 = sadd.s32 1, %s10
  $region7: #{bottleneck_forward.11} parent=0 // loop_footer_branch
    %9 = sbr.rel target = $region3
  $region8: #{bottleneck_forward.11} parent=0 // loop_exit
    _

// kernel: bottleneck_forward.8
$region0: #{bottleneck_forward.8}
  #allocation0 [shape = 'u32[]', space=smem, size = 0x4, offset = 0x4, fixed_abs, tag = 'smem constant byte address 0x4 - core index']
  #allocation1 [shape = 'u32[144,128]{1,0:T(1,128)}', space=vmem, size = 0x12000, scoped, tag = 'internal scratch']
  #allocation2 [shape = 'f32[256,128]{1,0:T(8,128)}', space=vmem, size = 0x20000, scoped, tag = 'scratch operand']
  %s0 = inlined_call_operand.vmem [shape: bf16[512,1152], index: 0, kind: input, shape index: {}]
  %s1 = inlined_call_operand.vmem [shape: bf16[1152,128], index: 1, kind: input, shape index: {}]
  %s2 = inlined_call_operand.vmem [shape: f32[512,128], index: 2, kind: output, shape index: {0}]
  %s3 = inlined_call_operand.vmem [shape: f32[2,2,128], index: 3, kind: output, shape index: {1}]
  %4 = xla_tuple %s2, %s3
  %s5 = sld [smem:[#allocation0]]
  $region98: #{bottleneck_forward.8} parent=0
    _
  %s7 = ssub.s32 1, %s5
  %s8 = scalar_select 0, %s7, %s5
  $region1: #{bottleneck_forward.8} parent=0
    #allocation3 [shape = 'u8[131072]{0}', space=vmem, size = 0x20000, scoped, tag = 'input window, operand 0']
    loop: start=0, step=1, limit=20
    $region2: #{bottleneck_forward.8} parent=1 // loop_pre_header
      _
    $region3: #{bottleneck_forward.8} parent=1 // loop_header
      %s10 = sphi 0, %s14
      %p11 = scmp.ge.s32.totalorder %s10, 20
      %s17 = sphi 0, %s36
      %s18 = sphi 0, %s32
      %s19 = sphi 0, %s28
      %s20 = sphi 0, %s17
      %s21 = sphi 0, %s18
      %s22 = sphi 0, %s19
      %s23 = sphi 0, %s20
      %s24 = sphi 0, %s21
      %s25 = sphi 0, %s22
      %s41 = sphi 0, %s43
      %s44 = sphi 0, %s41
      %s45 = sphi 0, %s44
      %s61 = sphi 0, %s45
      %s69 = sphi 0, %s71
      %s72 = sphi 0, %s69
      %s73 = sphi 0, %s72
      %s89 = sphi 0, %s73
      %s97 = sphi 0, %s99
      %s100 = sphi 0, %s97
      %s101 = sphi 0, %s100
      %s117 = sphi 0, %s101
      %s125 = sphi 0, %s127
      %s128 = sphi 0, %s125
      %s129 = sphi 0, %s128
      %s145 = sphi 0, %s129
    $region4: #{bottleneck_forward.8} parent=1 // loop_header_branch
      %13 = sbr.rel (%p11) target = $region8
    $region5: #{bottleneck_forward.8} parent=1 // loop_body
      %s15 = ssub.s32 %s10, 1
      %s16 = ssub.s32 %s10, 2
      %s26 = sadd.s32 1, %s19
      %p27 = scmp.ge.s32.totalorder %s26, 9
      %s28 = scalar_select %p27, 0, %s26
      %s29 = sadd.s32 1, %s18
      %s30 = scalar_select %p27, %s29, %s18
      %p31 = scmp.ge.s32.totalorder %s30, 1
      %s32 = scalar_select %p31, 0, %s30
      %s33 = sadd.s32 1, %s17
      %s34 = scalar_select %p31, %s33, %s17
      %p35 = scmp.ge.s32.totalorder %s34, 2
      %s36 = scalar_select %p35, 0, %s34
      %s37 = ssub.s32 %s17, %s36
      %s38 = ssub.s32 %s19, %s28
      %s39 = sor.u32 %s37, %s38
      %p40 = scmp.eq.s32.totalorder %s39, 0
      %s42 = sadd.s32 %s41, 1
      %s43 = scalar_select %p40, %s41, %s42
      %p46 = pneg %p40
      %p47 = scmp.eq.s32.totalorder %s10, 17
      %p48 = por %p46, %p47
      %p49 = scmp.ne.s32.totalorder %s41, %s44
      %p50 = scmp.eq.s32.totalorder %s10, 0
      %p51 = por %p49, %p50
      %p52 = scmp.ne.s32.totalorder %s41, %s44
      %p53 = scmp.eq.s32.totalorder %s15, 17
      %p54 = por %p52, %p53
      %p55 = scmp.ne.s32.totalorder %s44, %s45
      %p56 = scmp.eq.s32.totalorder %s15, 0
      %p57 = por %p55, %p56
      %p58 = scmp.ne.s32.totalorder %s44, %s45
      %p59 = scmp.eq.s32.totalorder %s16, 17
      %p60 = por %p58, %p59
      %p62 = scmp.ne.s32.totalorder %s45, %s61
      %p63 = scmp.eq.s32.totalorder %s16, 0
      %p64 = por %p62, %p63
      %s65 = ssub.s32 %s19, %s28
      %s66 = ssub.s32 %s18, %s32
      %s67 = sor.u32 %s65, %s66
      %p68 = scmp.eq.s32.totalorder %s67, 0
      %s70 = sadd.s32 %s69, 1
      %s71 = scalar_select %p68, %s69, %s70
      %p74 = pneg %p68
      %p75 = scmp.eq.s32.totalorder %s10, 17
      %p76 = por %p74, %p75
      %p77 = scmp.ne.s32.totalorder %s69, %s72
      %p78 = scmp.eq.s32.totalorder %s10, 0
      %p79 = por %p77, %p78
      %p80 = scmp.ne.s32.totalorder %s69, %s72
      %p81 = scmp.eq.s32.totalorder %s15, 17
      %p82 = por %p80, %p81
      %p83 = scmp.ne.s32.totalorder %s72, %s73
      %p84 = scmp.eq.s32.totalorder %s15, 0
      %p85 = por %p83, %p84
      %p86 = scmp.ne.s32.totalorder %s72, %s73
      %p87 = scmp.eq.s32.totalorder %s16, 17
      %p88 = por %p86, %p87
      %p90 = scmp.ne.s32.totalorder %s73, %s89
      %p91 = scmp.eq.s32.totalorder %s16, 0
      %p92 = por %p90, %p91
      %s93 = ssub.s32 %s17, %s36
      %s94 = ssub.s32 %s18, %s32
      %s95 = sor.u32 %s93, %s94
      %p96 = scmp.eq.s32.totalorder %s95, 0
      %s98 = sadd.s32 %s97, 1
      %s99 = scalar_select %p96, %s97, %s98
      %p102 = pneg %p96
      %p103 = scmp.eq.s32.totalorder %s10, 17
      %p104 = por %p102, %p103
      %p105 = scmp.ne.s32.totalorder %s97, %s100
      %p106 = scmp.eq.s32.totalorder %s10, 0
      %p107 = por %p105, %p106
      %p108 = scmp.ne.s32.totalorder %s97, %s100
      %p109 = scmp.eq.s32.totalorder %s15, 17
      %p110 = por %p108, %p109
      %p111 = scmp.ne.s32.totalorder %s100, %s101
      %p112 = scmp.eq.s32.totalorder %s15, 0
      %p113 = por %p111, %p112
      %p114 = scmp.ne.s32.totalorder %s100, %s101
      %p115 = scmp.eq.s32.totalorder %s16, 17
      %p116 = por %p114, %p115
      %p118 = scmp.ne.s32.totalorder %s101, %s117
      %p119 = scmp.eq.s32.totalorder %s16, 0
      %p120 = por %p118, %p119
      %s121 = ssub.s32 %s17, %s36
      %s122 = ssub.s32 %s18, %s32
      %s123 = sor.u32 %s121, %s122
      %p124 = scmp.eq.s32.totalorder %s123, 0
      %s126 = sadd.s32 %s125, 1
      %s127 = scalar_select %p124, %s125, %s126
      %p130 = pneg %p124
      %p131 = scmp.eq.s32.totalorder %s10, 17
      %p132 = por %p130, %p131
      %p133 = scmp.ne.s32.totalorder %s125, %s128
      %p134 = scmp.eq.s32.totalorder %s10, 0
      %p135 = por %p133, %p134
      %p136 = scmp.ne.s32.totalorder %s125, %s128
      %p137 = scmp.eq.s32.totalorder %s15, 17
      %p138 = por %p136, %p137
      %p139 = scmp.ne.s32.totalorder %s128, %s129
      %p140 = scmp.eq.s32.totalorder %s15, 0
      %p141 = por %p139, %p140
      %p142 = scmp.ne.s32.totalorder %s128, %s129
      %p143 = scmp.eq.s32.totalorder %s16, 17
      %p144 = por %p142, %p143
      %p146 = scmp.ne.s32.totalorder %s129, %s145
      %p147 = scmp.eq.s32.totalorder %s16, 0
      %p148 = por %p146, %p147
      %p149 = scmp.le.s32.totalorder 1, %s10
      %p150 = scmp.lt.s32.totalorder %s10, 19
      %p151 = pnand %p149, %p150
      %p152 = pneg %p151
      // Predicated region
      $region9: #{bottleneck_forward.8} parent=5 // pred_check
        _
      $region10: #{bottleneck_forward.8} parent=5 // pred_check_branch
        %154 = sbr.rel (%p151) target = $region12
      $region11: #{bottleneck_forward.8} parent=5 // pred_region
        %s155 = ssub.s32 %s10, 1
      $region12: #{bottleneck_forward.8} parent=5 // pred_fallthru
        _
      %p156 = scmp.lt.s32.totalorder %s10, 18
      // Predicated region
      $region13: #{bottleneck_forward.8} parent=5 // pred_check
        %p157 = pneg %p156
      $region14: #{bottleneck_forward.8} parent=5 // pred_check_branch
        %159 = sbr.rel (%p157) target = $region16
      $region15: #{bottleneck_forward.8} parent=5 // pred_region
        // Predicated region
        $region17: #{bottleneck_forward.8} parent=15 // pred_check
          %p160 = pneg %p51
        $region18: #{bottleneck_forward.8} parent=15 // pred_check_branch
          %162 = sbr.rel (%p160) target = $region20
        $region19: #{bottleneck_forward.8} parent=15 // pred_region
          %s163 = sand.u32 %s41, 1
          %s164 = sand.u32 %s41, 1
          %s165 = smul.addr %s164, 128
          %s166 = scalar_lea.vmem [#allocation3], %s165
          %s167 = smul.u32 32, %s17
          %s168 = smul.addr %s167, 9
          %s169 = sadd.s32 %s19, %s168
          %s170 = smul.addr %s169, 4
          %s171 = scalar_lea.vmem %s0, %s170
          // Predicated region
          $region21: #{bottleneck_forward.8} parent=19 // pred_check
            _
          $region22: #{bottleneck_forward.8} parent=19 // pred_check_branch
            %173 = sbr.rel (0) target = $region24
          $region23: #{bottleneck_forward.8} parent=19 // pred_region
            // Predicated region
            $region25: #{bottleneck_forward.8} parent=23 // pred_check
              _
            $region26: #{bottleneck_forward.8} parent=23 // pred_check_branch
              %175 = sbr.rel target = $region28
            $region27: #{bottleneck_forward.8} parent=23 // pred_region
              // Predicated region
              $region40: #{bottleneck_forward.8} parent=27 // pred_check
                _
              $region41: #{bottleneck_forward.8} parent=27 // pred_check_branch
                %252 = sbr.rel (0) target = $region43
              $region42: #{bottleneck_forward.8} parent=27 // pred_region
                loop: start=0, step=1, limit=1
                $region44: #{bottleneck_forward.8} parent=42 // loop_pre_header
                  _
                $region45: #{bottleneck_forward.8} parent=42 // loop_header
                  %s254 = sphi 0, %s258
                  %p255 = scmp.ge.s32.totalorder %s254, 1
                  %s259 = sphi %s171, %s171
                  %s260 = sphi %s166, %s166
                $region46: #{bottleneck_forward.8} parent=42 // loop_header_branch
                  %257 = sbr.rel (%p255) target = $region50
                $region47: #{bottleneck_forward.8} parent=42 // loop_body
                  _
                $region48: #{bottleneck_forward.8} parent=42 // loop_footer
                  %s258 = sadd.s32 1, %s254
                $region49: #{bottleneck_forward.8} parent=42 // loop_footer_branch
                  %253 = sbr.rel target = $region45
                $region50: #{bottleneck_forward.8} parent=42 // loop_exit
                  _
                loop: start=0, step=1, limit=1
                $region51: #{bottleneck_forward.8} parent=42 // loop_pre_header
                  _
                $region52: #{bottleneck_forward.8} parent=42 // loop_header
                  %s263 = sphi 0, %s267
                  %p264 = scmp.ge.s32.totalorder %s263, 1
                  %s268 = sphi %s171, %s171
                  %s269 = sphi %s166, %s166
                $region53: #{bottleneck_forward.8} parent=42 // loop_header_branch
                  %266 = sbr.rel (%p264) target = $region57
                $region54: #{bottleneck_forward.8} parent=42 // loop_body
                  %v270 = vld [vmem:[%s268] sm:$0xf]
                  %271 = vst [vmem:[%s269] sm:$0xf] %v270
                  %v272 = vld [vmem:[%s268 + $0x24] sm:$0xf]
                  %273 = vst [vmem:[%s269 + $0x4] sm:$0xf] %v272
                  %v274 = vld [vmem:[%s268 + $0x48] sm:$0xf]
                  %275 = vst [vmem:[%s269 + $0x8] sm:$0xf] %v274
                  %v276 = vld [vmem:[%s268 + $0x6c] sm:$0xf]
                  %277 = vst [vmem:[%s269 + $0xc] sm:$0xf] %v276
                  %v278 = vld [vmem:[%s268 + $0x90] sm:$0xf]
                  %279 = vst [vmem:[%s269 + $0x10] sm:$0xf] %v278
                  %v280 = vld [vmem:[%s268 + $0xb4] sm:$0xf]
                  %281 = vst [vmem:[%s269 + $0x14] sm:$0xf] %v280
                  %v282 = vld [vmem:[%s268 + $0xd8] sm:$0xf]
                  %283 = vst [vmem:[%s269 + $0x18] sm:$0xf] %v282
                  %v284 = vld [vmem:[%s268 + $0xfc] sm:$0xf]
                  %285 = vst [vmem:[%s269 + $0x1c] sm:$0xf] %v284
                  %v286 = vld [vmem:[%s268 + $0x120] sm:$0xf]
                  %287 = vst [vmem:[%s269 + $0x20] sm:$0xf] %v286
                  %v288 = vld [vmem:[%s268 + $0x144] sm:$0xf]
                  %289 = vst [vmem:[%s269 + $0x24] sm:$0xf] %v288
                  %v290 = vld [vmem:[%s268 + $0x168] sm:$0xf]
                  %291 = vst [vmem:[%s269 + $0x28] sm:$0xf] %v290
                  %v292 = vld [vmem:[%s268 + $0x18c] sm:$0xf]
                  %293 = vst [vmem:[%s269 + $0x2c] sm:$0xf] %v292
                  %v294 = vld [vmem:[%s268 + $0x1b0] sm:$0xf]
                  %295 = vst [vmem:[%s269 + $0x30] sm:$0xf] %v294
                  %v296 = vld [vmem:[%s268 + $0x1d4] sm:$0xf]
                  %297 = vst [vmem:[%s269 + $0x34] sm:$0xf] %v296
                  %v298 = vld [vmem:[%s268 + $0x1f8] sm:$0xf]
                  %299 = vst [vmem:[%s269 + $0x38] sm:$0xf] %v298
                  %v300 = vld [vmem:[%s268 + $0x21c] sm:$0xf]
                  %301 = vst [vmem:[%s269 + $0x3c] sm:$0xf] %v300
                  %v302 = vld [vmem:[%s268 + $0x240] sm:$0xf]
                  %303 = vst [vmem:[%s269 + $0x40] sm:$0xf] %v302
                  %v304 = vld [vmem:[%s268 + $0x264] sm:$0xf]
                  %305 = vst [vmem:[%s269 + $0x44] sm:$0xf] %v304
                  %v306 = vld [vmem:[%s268 + $0x288] sm:$0xf]
                  %307 = vst [vmem:[%s269 + $0x48] sm:$0xf] %v306
                  %v308 = vld [vmem:[%s268 + $0x2ac] sm:$0xf]
                  %309 = vst [vmem:[%s269 + $0x4c] sm:$0xf] %v308
                  %v310 = vld [vmem:[%s268 + $0x2d0] sm:$0xf]
                  %311 = vst [vmem:[%s269 + $0x50] sm:$0xf] %v310
                  %v312 = vld [vmem:[%s268 + $0x2f4] sm:$0xf]
                  %313 = vst [vmem:[%s269 + $0x54] sm:$0xf] %v312
                  %v314 = vld [vmem:[%s268 + $0x318] sm:$0xf]
                  %315 = vst [vmem:[%s269 + $0x58] sm:$0xf] %v314
                  %v316 = vld [vmem:[%s268 + $0x33c] sm:$0xf]
                  %317 = vst [vmem:[%s269 + $0x5c] sm:$0xf] %v316
                  %v318 = vld [vmem:[%s268 + $0x360] sm:$0xf]
                  %319 = vst [vmem:[%s269 + $0x60] sm:$0xf] %v318
                  %v320 = vld [vmem:[%s268 + $0x384] sm:$0xf]
                  %321 = vst [vmem:[%s269 + $0x64] sm:$0xf] %v320
                  %v322 = vld [vmem:[%s268 + $0x3a8] sm:$0xf]
                  %323 = vst [vmem:[%s269 + $0x68] sm:$0xf] %v322
                  %v324 = vld [vmem:[%s268 + $0x3cc] sm:$0xf]
                  %325 = vst [vmem:[%s269 + $0x6c] sm:$0xf] %v324
                  %v326 = vld [vmem:[%s268 + $0x3f0] sm:$0xf]
                  %327 = vst [vmem:[%s269 + $0x70] sm:$0xf] %v326
                  %v328 = vld [vmem:[%s268 + $0x414] sm:$0xf]
                  %329 = vst [vmem:[%s269 + $0x74] sm:$0xf] %v328
                  %v330 = vld [vmem:[%s268 + $0x438] sm:$0xf]
                  %331 = vst [vmem:[%s269 + $0x78] sm:$0xf] %v330
                  %v332 = vld [vmem:[%s268 + $0x45c] sm:$0xf]
                  %333 = vst [vmem:[%s269 + $0x7c] sm:$0xf] %v332
                $region55: #{bottleneck_forward.8} parent=42 // loop_footer
                  %s267 = sadd.s32 1, %s263
                $region56: #{bottleneck_forward.8} parent=42 // loop_footer_branch
                  %262 = sbr.rel target = $region52
                $region57: #{bottleneck_forward.8} parent=42 // loop_exit
                  _
              $region43: #{bottleneck_forward.8} parent=27 // pred_fallthru
                _
            $region28: #{bottleneck_forward.8} parent=23 // pred_fallthru
              _
            // Predicated region
            $region29: #{bottleneck_forward.8} parent=23 // pred_check
              _
            $region30: #{bottleneck_forward.8} parent=23 // pred_check_branch
              %177 = sbr.rel (0) target = $region32
            $region31: #{bottleneck_forward.8} parent=23 // pred_region
              loop: start=0, step=1, limit=1
              $region33: #{bottleneck_forward.8} parent=31 // loop_pre_header
                _
              $region34: #{bottleneck_forward.8} parent=31 // loop_header
                %s180 = sphi 0, %s184
                %p181 = scmp.ge.s32.totalorder %s180, 1
                %s185 = sphi %s171, %s171
                %s186 = sphi %s166, %s166
              $region35: #{bottleneck_forward.8} parent=31 // loop_header_branch
                %183 = sbr.rel (%p181) target = $region39
              $region36: #{bottleneck_forward.8} parent=31 // loop_body
                %v187 = vld [vmem:[%s185] sm:$0xf]
                %188 = vst [vmem:[%s186] sm:$0xf] %v187
                %v189 = vld [vmem:[%s185 + $0x24] sm:$0xf]
                %190 = vst [vmem:[%s186 + $0x4] sm:$0xf] %v189
                %v191 = vld [vmem:[%s185 + $0x48] sm:$0xf]
                %192 = vst [vmem:[%s186 + $0x8] sm:$0xf] %v191
                %v193 = vld [vmem:[%s185 + $0x6c] sm:$0xf]
                %194 = vst [vmem:[%s186 + $0xc] sm:$0xf] %v193
                %v195 = vld [vmem:[%s185 + $0x90] sm:$0xf]
                %196 = vst [vmem:[%s186 + $0x10] sm:$0xf] %v195
                %v197 = vld [vmem:[%s185 + $0xb4] sm:$0xf]
                %198 = vst [vmem:[%s186 + $0x14] sm:$0xf] %v197
                %v199 = vld [vmem:[%s185 + $0xd8] sm:$0xf]
                %200 = vst [vmem:[%s186 + $0x18] sm:$0xf] %v199
                %v201 = vld [vmem:[%s185 + $0xfc] sm:$0xf]
                %202 = vst [vmem:[%s186 + $0x1c] sm:$0xf] %v201
                %v203 = vld [vmem:[%s185 + $0x120] sm:$0xf]
                %204 = vst [vmem:[%s186 + $0x20] sm:$0xf] %v203
                %v205 = vld [vmem:[%s185 + $0x144] sm:$0xf]
                %206 = vst [vmem:[%s186 + $0x24] sm:$0xf] %v205
                %v207 = vld [vmem:[%s185 + $0x168] sm:$0xf]
                %208 = vst [vmem:[%s186 + $0x28] sm:$0xf] %v207
                %v209 = vld [vmem:[%s185 + $0x18c] sm:$0xf]
                %210 = vst [vmem:[%s186 + $0x2c] sm:$0xf] %v209
                %v211 = vld [vmem:[%s185 + $0x1b0] sm:$0xf]
                %212 = vst [vmem:[%s186 + $0x30] sm:$0xf] %v211
                %v213 = vld [vmem:[%s185 + $0x1d4] sm:$0xf]
                %214 = vst [vmem:[%s186 + $0x34] sm:$0xf] %v213
                %v215 = vld [vmem:[%s185 + $0x1f8] sm:$0xf]
                %216 = vst [vmem:[%s186 + $0x38] sm:$0xf] %v215
                %v217 = vld [vmem:[%s185 + $0x21c] sm:$0xf]
                %218 = vst [vmem:[%s186 + $0x3c] sm:$0xf] %v217
                %v219 = vld [vmem:[%s185 + $0x240] sm:$0xf]
                %220 = vst [vmem:[%s186 + $0x40] sm:$0xf] %v219
                %v221 = vld [vmem:[%s185 + $0x264] sm:$0xf]
                %222 = vst [vmem:[%s186 + $0x44] sm:$0xf] %v221
                %v223 = vld [vmem:[%s185 + $0x288] sm:$0xf]
                %224 = vst [vmem:[%s186 + $0x48] sm:$0xf] %v223
                %v225 = vld [vmem:[%s185 + $0x2ac] sm:$0xf]
                %226 = vst [vmem:[%s186 + $0x4c] sm:$0xf] %v225
                %v227 = vld [vmem:[%s185 + $0x2d0] sm:$0xf]
                %228 = vst [vmem:[%s186 + $0x50] sm:$0xf] %v227
                %v229 = vld [vmem:[%s185 + $0x2f4] sm:$0xf]
                %230 = vst [vmem:[%s186 + $0x54] sm:$0xf] %v229
                %v231 = vld [vmem:[%s185 + $0x318] sm:$0xf]
                %232 = vst [vmem:[%s186 + $0x58] sm:$0xf] %v231
                %v233 = vld [vmem:[%s185 + $0x33c] sm:$0xf]
                %234 = vst [vmem:[%s186 + $0x5c] sm:$0xf] %v233
                %v235 = vld [vmem:[%s185 + $0x360] sm:$0xf]
                %236 = vst [vmem:[%s186 + $0x60] sm:$0xf] %v235
                %v237 = vld [vmem:[%s185 + $0x384] sm:$0xf]
                %238 = vst [vmem:[%s186 + $0x64] sm:$0xf] %v237
                %v239 = vld [vmem:[%s185 + $0x3a8] sm:$0xf]
                %240 = vst [vmem:[%s186 + $0x68] sm:$0xf] %v239
                %v241 = vld [vmem:[%s185 + $0x3cc] sm:$0xf]
                %242 = vst [vmem:[%s186 + $0x6c] sm:$0xf] %v241
                %v243 = vld [vmem:[%s185 + $0x3f0] sm:$0xf]
                %244 = vst [vmem:[%s186 + $0x70] sm:$0xf] %v243
                %v245 = vld [vmem:[%s185 + $0x414] sm:$0xf]
                %246 = vst [vmem:[%s186 + $0x74] sm:$0xf] %v245
                %v247 = vld [vmem:[%s185 + $0x438] sm:$0xf]
                %248 = vst [vmem:[%s186 + $0x78] sm:$0xf] %v247
                %v249 = vld [vmem:[%s185 + $0x45c] sm:$0xf]
                %250 = vst [vmem:[%s186 + $0x7c] sm:$0xf] %v249
              $region37: #{bottleneck_forward.8} parent=31 // loop_footer
                %s184 = sadd.s32 1, %s180
              $region38: #{bottleneck_forward.8} parent=31 // loop_footer_branch
                %179 = sbr.rel target = $region34
              $region39: #{bottleneck_forward.8} parent=31 // loop_exit
                _
            $region32: #{bottleneck_forward.8} parent=23 // pred_fallthru
              _
          $region24: #{bottleneck_forward.8} parent=19 // pred_fallthru
            _
          %334 = vnop
        $region20: #{bottleneck_forward.8} parent=15 // pred_fallthru
          _
        // Predicated region
        $region58: #{bottleneck_forward.8} parent=15 // pred_check
          %p335 = pneg %p79
        $region59: #{bottleneck_forward.8} parent=15 // pred_check_branch
          %337 = sbr.rel (%p335) target = $region61
        $region60: #{bottleneck_forward.8} parent=15 // pred_region
          %s338 = smul.u32 16, %s19
          %p339 = scmp.lt.s32.totalorder %s338, 143
          %s340 = scalar_select %p339, %s338, 143
          %p341 = scmp.lt.s32.totalorder %s18, 0
          %s342 = scalar_select %p341, %s18, 0
          %s343 = sadd.s32 %s342, %s340
          %s344 = smul.addr %s343, 4
          %s345 = scalar_lea.vmem %s1, %s344
          %s346 = smul.u32 16, %s19
        $region61: #{bottleneck_forward.8} parent=15 // pred_fallthru
          _
      $region16: #{bottleneck_forward.8} parent=5 // pred_fallthru
        _
      %p347 = scmp.le.s32.totalorder 1, %s10
      %p348 = scmp.lt.s32.totalorder %s10, 19
      %p349 = pnand %p347, %p348
      %p350 = pneg %p349
      // Predicated region
      $region62: #{bottleneck_forward.8} parent=5 // pred_check
        _
      $region63: #{bottleneck_forward.8} parent=5 // pred_check_branch
        %352 = sbr.rel (%p349) target = $region65
      $region64: #{bottleneck_forward.8} parent=5 // pred_region
        %s353 = ssub.s32 %s10, 1
        %s354 = sand.u32 %s44, 1
        %s355 = sand.u32 %s44, 1
        %s356 = smul.addr %s355, 128
        %s357 = scalar_lea.vmem [#allocation3], %s356
        // Predicated region
        $region66: #{bottleneck_forward.8} parent=64 // pred_check
          %p358 = pneg %p57
        $region67: #{bottleneck_forward.8} parent=64 // pred_check_branch
          %360 = sbr.rel (%p358) target = $region69
        $region68: #{bottleneck_forward.8} parent=64 // pred_region
          _
        $region69: #{bottleneck_forward.8} parent=64 // pred_fallthru
          _
        %s361 = sand.u32 %s44, 1
        %s362 = sand.u32 %s44, 1
        %s363 = smul.addr %s362, 128
        %s364 = scalar_lea.vmem [#allocation3], %s363
        %p365 = pneg %p57
        %p366 = pneg %p54
        %s367 = smul.u32 16, %s22
        %p368 = scmp.lt.s32.totalorder %s367, 143
        %s369 = scalar_select %p368, %s367, 143
        %p370 = scmp.lt.s32.totalorder %s21, 0
        %s371 = scalar_select %p370, %s21, 0
        %s372 = sadd.s32 %s371, %s369
        %s373 = smul.addr %s372, 4
        %s374 = scalar_lea.vmem %s1, %s373
        %p375 = pneg %p85
        %p376 = pneg %p82
        %p377 = pneg %p113
        %p378 = pneg %p110
        %s379 = smul.u32 32, %s20
        %p380 = scmp.lt.s32.totalorder %s379, 63
        %s381 = scalar_select %p380, %s379, 63
        %p382 = scmp.lt.s32.totalorder %s21, 0
        %s383 = scalar_select %p382, %s21, 0
        %s384 = sadd.s32 %s383, %s381
        %s385 = smul.addr %s384, 8
        %s386 = scalar_lea.vmem %s2, %s385
        %p387 = pneg %p141
        %p388 = pneg %p138
        %p389 = scmp.lt.s32.totalorder %s20, 1
        %s390 = scalar_select %p389, %s20, 1
        %p391 = scmp.lt.s32.totalorder %s21, 0
        %s392 = scalar_select %p391, %s21, 0
        %s393 = sadd.s32 %s392, %s390
        %s394 = smul.addr %s393, 2
        %s395 = scalar_lea.vmem %s3, %s394
        %s396 = smul.u32 32, %s20
        %s397 = smul.u32 16, %s22
        %p398 = scmp.lt.s32.totalorder %s397, 143
        %s399 = scalar_select %p398, %s397, 143
        %p400 = scmp.lt.s32.totalorder %s21, 0
        %s401 = scalar_select %p400, %s21, 0
        %s402 = sadd.s32 %s401, %s399
        %s403 = smul.addr %s402, 4
        %s404 = scalar_lea.vmem %s1, %s403
        %s405 = smul.u32 16, %s22
        %s406 = smul.u32 32, %s20
        %p407 = scmp.lt.s32.totalorder %s406, 63
        %s408 = scalar_select %p407, %s406, 63
        %p409 = scmp.lt.s32.totalorder %s21, 0
        %s410 = scalar_select %p409, %s21, 0
        %s411 = sadd.s32 %s410, %s408
        %s412 = smul.addr %s411, 8
        %s413 = scalar_lea.vmem %s2, %s412
        %s414 = smul.u32 32, %s20
        %p415 = scmp.lt.s32.totalorder %s20, 1
        %s416 = scalar_select %p415, %s20, 1
        %p417 = scmp.lt.s32.totalorder %s21, 0
        %s418 = scalar_select %p417, %s21, 0
        %s419 = sadd.s32 %s418, %s416
        %s420 = smul.addr %s419, 2
        %s421 = scalar_lea.vmem %s3, %s420
        %p423 = scmp.eq.s32.totalorder %s22, 0
        // Predicated region
        $region70: #{bottleneck_forward.8} parent=64 // pred_check
          %p424 = pneg %p423
        $region71: #{bottleneck_forward.8} parent=64 // pred_check_branch
          %426 = sbr.rel (%p424) target = $region73
        $region72: #{bottleneck_forward.8} parent=64 // pred_region
          %427 = vst [vmem:[#allocation2] sm:$0xff] 0.0
          %428 = vst [vmem:[#allocation2 + $0x8] sm:$0xff] 0.0
          %429 = vst [vmem:[#allocation2 + $0x10] sm:$0xff] 0.0
          %430 = vst [vmem:[#allocation2 + $0x18] sm:$0xff] 0.0
          %431 = vst [vmem:[#allocation2 + $0x20] sm:$0xff] 0.0
          %432 = vst [vmem:[#allocation2 + $0x28] sm:$0xff] 0.0
          %433 = vst [vmem:[#allocation2 + $0x30] sm:$0xff] 0.0
          %434 = vst [vmem:[#allocation2 + $0x38] sm:$0xff] 0.0
          %435 = vst [vmem:[#allocation2 + $0x40] sm:$0xff] 0.0
          %436 = vst [vmem:[#allocation2 + $0x48] sm:$0xff] 0.0
          %437 = vst [vmem:[#allocation2 + $0x50] sm:$0xff] 0.0
          %438 = vst [vmem:[#allocation2 + $0x58] sm:$0xff] 0.0
          %439 = vst [vmem:[#allocation2 + $0x60] sm:$0xff] 0.0
          %440 = vst [vmem:[#allocation2 + $0x68] sm:$0xff] 0.0
          %441 = vst [vmem:[#allocation2 + $0x70] sm:$0xff] 0.0
          %442 = vst [vmem:[#allocation2 + $0x78] sm:$0xff] 0.0
          %443 = vst [vmem:[#allocation2 + $0x80] sm:$0xff] 0.0
          %444 = vst [vmem:[#allocation2 + $0x88] sm:$0xff] 0.0
          %445 = vst [vmem:[#allocation2 + $0x90] sm:$0xff] 0.0
          %446 = vst [vmem:[#allocation2 + $0x98] sm:$0xff] 0.0
          %447 = vst [vmem:[#allocation2 + $0xa0] sm:$0xff] 0.0
          %448 = vst [vmem:[#allocation2 + $0xa8] sm:$0xff] 0.0
          %449 = vst [vmem:[#allocation2 + $0xb0] sm:$0xff] 0.0
          %450 = vst [vmem:[#allocation2 + $0xb8] sm:$0xff] 0.0
          %451 = vst [vmem:[#allocation2 + $0xc0] sm:$0xff] 0.0
          %452 = vst [vmem:[#allocation2 + $0xc8] sm:$0xff] 0.0
          %453 = vst [vmem:[#allocation2 + $0xd0] sm:$0xff] 0.0
          %454 = vst [vmem:[#allocation2 + $0xd8] sm:$0xff] 0.0
          %455 = vst [vmem:[#allocation2 + $0xe0] sm:$0xff] 0.0
          %456 = vst [vmem:[#allocation2 + $0xe8] sm:$0xff] 0.0
          %457 = vst [vmem:[#allocation2 + $0xf0] sm:$0xff] 0.0
          %458 = vst [vmem:[#allocation2 + $0xf8] sm:$0xff] 0.0
        $region73: #{bottleneck_forward.8} parent=64 // pred_fallthru
          _
        %v459 = vld [vmem:[#allocation2] sm:$0xff]
        %v460 = vld [vmem:[#allocation2 + $0x8] sm:$0xff]
        %v461 = vld [vmem:[#allocation2 + $0x10] sm:$0xff]
        %v462 = vld [vmem:[#allocation2 + $0x18] sm:$0xff]
        %v463 = vld [vmem:[#allocation2 + $0x20] sm:$0xff]
        %v464 = vld [vmem:[#allocation2 + $0x28] sm:$0xff]
        %v465 = vld [vmem:[#allocation2 + $0x30] sm:$0xff]
        %v466 = vld [vmem:[#allocation2 + $0x38] sm:$0xff]
        %v467 = vld [vmem:[#allocation2 + $0x40] sm:$0xff]
        %v468 = vld [vmem:[#allocation2 + $0x48] sm:$0xff]
        %v469 = vld [vmem:[#allocation2 + $0x50] sm:$0xff]
        %v470 = vld [vmem:[#allocation2 + $0x58] sm:$0xff]
        %v471 = vld [vmem:[#allocation2 + $0x60] sm:$0xff]
        %v472 = vld [vmem:[#allocation2 + $0x68] sm:$0xff]
        %v473 = vld [vmem:[#allocation2 + $0x70] sm:$0xff]
        %v474 = vld [vmem:[#allocation2 + $0x78] sm:$0xff]
        %v475 = vld [vmem:[#allocation2 + $0x80] sm:$0xff]
        %v476 = vld [vmem:[#allocation2 + $0x88] sm:$0xff]
        %v477 = vld [vmem:[#allocation2 + $0x90] sm:$0xff]
        %v478 = vld [vmem:[#allocation2 + $0x98] sm:$0xff]
        %v479 = vld [vmem:[#allocation2 + $0xa0] sm:$0xff]
        %v480 = vld [vmem:[#allocation2 + $0xa8] sm:$0xff]
        %v481 = vld [vmem:[#allocation2 + $0xb0] sm:$0xff]
        %v482 = vld [vmem:[#allocation2 + $0xb8] sm:$0xff]
        %v483 = vld [vmem:[#allocation2 + $0xc0] sm:$0xff]
        %v484 = vld [vmem:[#allocation2 + $0xc8] sm:$0xff]
        %v485 = vld [vmem:[#allocation2 + $0xd0] sm:$0xff]
        %v486 = vld [vmem:[#allocation2 + $0xd8] sm:$0xff]
        %v487 = vld [vmem:[#allocation2 + $0xe0] sm:$0xff]
        %v488 = vld [vmem:[#allocation2 + $0xe8] sm:$0xff]
        %v489 = vld [vmem:[#allocation2 + $0xf0] sm:$0xff]
        %v490 = vld [vmem:[#allocation2 + $0xf8] sm:$0xff]
        %v491 = vld [vmem:[%s357] sm:$0xf]
        %v492 = vld [vmem:[%s357 + $0x4] sm:$0xf]
        %v493 = vld [vmem:[%s357 + $0x8] sm:$0xf]
        %v494 = vld [vmem:[%s357 + $0xc] sm:$0xf]
        %v495 = vld [vmem:[%s357 + $0x10] sm:$0xf]
        %v496 = vld [vmem:[%s357 + $0x14] sm:$0xf]
        %v497 = vld [vmem:[%s357 + $0x18] sm:$0xf]
        %v498 = vld [vmem:[%s357 + $0x1c] sm:$0xf]
        %v499 = vld [vmem:[%s357 + $0x20] sm:$0xf]
        %v500 = vld [vmem:[%s357 + $0x24] sm:$0xf]
        %v501 = vld [vmem:[%s357 + $0x28] sm:$0xf]
        %v502 = vld [vmem:[%s357 + $0x2c] sm:$0xf]
        %v503 = vld [vmem:[%s357 + $0x30] sm:$0xf]
        %v504 = vld [vmem:[%s357 + $0x34] sm:$0xf]
        %v505 = vld [vmem:[%s357 + $0x38] sm:$0xf]
        %v506 = vld [vmem:[%s357 + $0x3c] sm:$0xf]
        %v507 = vld [vmem:[%s357 + $0x40] sm:$0xf]
        %v508 = vld [vmem:[%s357 + $0x44] sm:$0xf]
        %v509 = vld [vmem:[%s357 + $0x48] sm:$0xf]
        %v510 = vld [vmem:[%s357 + $0x4c] sm:$0xf]
        %v511 = vld [vmem:[%s357 + $0x50] sm:$0xf]
        %v512 = vld [vmem:[%s357 + $0x54] sm:$0xf]
        %v513 = vld [vmem:[%s357 + $0x58] sm:$0xf]
        %v514 = vld [vmem:[%s357 + $0x5c] sm:$0xf]
        %v515 = vld [vmem:[%s357 + $0x60] sm:$0xf]
        %v516 = vld [vmem:[%s357 + $0x64] sm:$0xf]
        %v517 = vld [vmem:[%s357 + $0x68] sm:$0xf]
        %v518 = vld [vmem:[%s357 + $0x6c] sm:$0xf]
        %v519 = vld [vmem:[%s357 + $0x70] sm:$0xf]
        %v520 = vld [vmem:[%s357 + $0x74] sm:$0xf]
        %v521 = vld [vmem:[%s357 + $0x78] sm:$0xf]
        %v522 = vld [vmem:[%s357 + $0x7c] sm:$0xf]
        %v523 = vld [vmem:[%s404] sm:$0xf]
        %v524 = vld [vmem:[%s404 + $0x4] sm:$0xf]
        %v525 = vld [vmem:[%s404 + $0x8] sm:$0xf]
        %v526 = vld [vmem:[%s404 + $0xc] sm:$0xf]
        %v527 = vld [vmem:[%s404 + $0x10] sm:$0xf]
        %v528 = vld [vmem:[%s404 + $0x14] sm:$0xf]
        %v529 = vld [vmem:[%s404 + $0x18] sm:$0xf]
        %v530 = vld [vmem:[%s404 + $0x1c] sm:$0xf]
        %v531 = vld [vmem:[%s404 + $0x20] sm:$0xf]
        %v532 = vld [vmem:[%s404 + $0x24] sm:$0xf]
        %v533 = vld [vmem:[%s404 + $0x28] sm:$0xf]
        %v534 = vld [vmem:[%s404 + $0x2c] sm:$0xf]
        %v535 = vld [vmem:[%s404 + $0x30] sm:$0xf]
        %v536 = vld [vmem:[%s404 + $0x34] sm:$0xf]
        %v537 = vld [vmem:[%s404 + $0x38] sm:$0xf]
        %v538 = vld [vmem:[%s404 + $0x3c] sm:$0xf]
        %v571 = vunpack.c.l.b16 %v491
        %v572 = vunpack.c.l.b16 %v492
        %v573 = vunpack.c.l.b16 %v493
        %v574 = vunpack.c.l.b16 %v494
        %v575 = vunpack.c.l.b16 %v495
        %v576 = vunpack.c.l.b16 %v496
        %v577 = vunpack.c.l.b16 %v497
        %v578 = vunpack.c.l.b16 %v498
        %v579 = vunpack.c.l.b16 %v499
        %v580 = vunpack.c.l.b16 %v500
        %v581 = vunpack.c.l.b16 %v501
        %v582 = vunpack.c.l.b16 %v502
        %v583 = vunpack.c.l.b16 %v503
        %v584 = vunpack.c.l.b16 %v504
        %v585 = vunpack.c.l.b16 %v505
        %v586 = vunpack.c.l.b16 %v506
        %v587 = vunpack.c.l.b16 %v507
        %v588 = vunpack.c.l.b16 %v508
        %v589 = vunpack.c.l.b16 %v509
        %v590 = vunpack.c.l.b16 %v510
        %v591 = vunpack.c.l.b16 %v511
        %v592 = vunpack.c.l.b16 %v512
        %v593 = vunpack.c.l.b16 %v513
        %v594 = vunpack.c.l.b16 %v514
        %v595 = vunpack.c.l.b16 %v515
        %v596 = vunpack.c.l.b16 %v516
        %v597 = vunpack.c.l.b16 %v517
        %v598 = vunpack.c.l.b16 %v518
        %v599 = vunpack.c.l.b16 %v519
        %v600 = vunpack.c.l.b16 %v520
        %v601 = vunpack.c.l.b16 %v521
        %v602 = vunpack.c.l.b16 %v522
        %v603 = vpack.c.b16 %v572, %v571
        %v604 = vpack.c.b16 %v574, %v573
        %v605 = vpack.c.b16 %v576, %v575
        %v606 = vpack.c.b16 %v578, %v577
        %v607 = vpack.c.b16 %v580, %v579
        %v608 = vpack.c.b16 %v582, %v581
        %v609 = vpack.c.b16 %v584, %v583
        %v610 = vpack.c.b16 %v586, %v585
        %v611 = vpack.c.b16 %v588, %v587
        %v612 = vpack.c.b16 %v590, %v589
        %v613 = vpack.c.b16 %v592, %v591
        %v614 = vpack.c.b16 %v594, %v593
        %v615 = vpack.c.b16 %v596, %v595
        %v616 = vpack.c.b16 %v598, %v597
        %v617 = vpack.c.b16 %v600, %v599
        %v618 = vpack.c.b16 %v602, %v601
        %v651 = vunpack.c.l.b16 %v523
        %v652 = vunpack.c.l.b16 %v524
        %v653 = vunpack.c.l.b16 %v525
        %v654 = vunpack.c.l.b16 %v526
        %v655 = vunpack.c.l.b16 %v527
        %v656 = vunpack.c.l.b16 %v528
        %v657 = vunpack.c.l.b16 %v529
        %v658 = vunpack.c.l.b16 %v530
        %v659 = vunpack.c.l.b16 %v531
        %v660 = vunpack.c.l.b16 %v532
        %v661 = vunpack.c.l.b16 %v533
        %v662 = vunpack.c.l.b16 %v534
        %v663 = vunpack.c.l.b16 %v535
        %v664 = vunpack.c.l.b16 %v536
        %v665 = vunpack.c.l.b16 %v537
        %v666 = vunpack.c.l.b16 %v538
        %v667 = vpack.c.b16 %v652, %v651
        %v668 = vpack.c.b16 %v654, %v653
        %v669 = vpack.c.b16 %v656, %v655
        %v670 = vpack.c.b16 %v658, %v657
        %v671 = vpack.c.b16 %v660, %v659
        %v672 = vpack.c.b16 %v662, %v661
        %v673 = vpack.c.b16 %v664, %v663
        %v674 = vpack.c.b16 %v666, %v665
        %683 = vmatprep.subr.bf16.mxu0 0
        %684 = vmatpush1.bf16.msra.mxu0 %v667
        %685 = vmatprep.subr.bf16.mxu0 0
        %686 = vmatpush1.bf16.msra.mxu0 %v668
        %687 = vmatprep.subr.bf16.mxu0 0
        %688 = vmatpush1.bf16.msra.mxu0 %v669
        %689 = vmatprep.subr.bf16.mxu0 0
        %690 = vmatpush1.bf16.msra.mxu0 %v670
        %691 = vmatprep.subr.bf16.mxu0 0
        %692 = vmatpush1.bf16.msra.mxu0 %v671
        %693 = vmatprep.subr.bf16.mxu0 0
        %694 = vmatpush1.bf16.msra.mxu0 %v672
        %695 = vmatprep.subr.bf16.mxu0 0
        %696 = vmatpush1.bf16.msra.mxu0 %v673
        %697 = vmatprep.subr.bf16.mxu0 0
        %698 = vmatpush1.bf16.msra.mxu0 %v674
        %699 = vmatprep.subr.bf16.mxu0 0
        %700 = vmatpush1.bf16.msra.mxu0 0
        %701 = vmatprep.subr.bf16.mxu0 0
        %702 = vmatpush1.bf16.msra.mxu0 0
        %703 = vmatprep.subr.bf16.mxu0 0
        %704 = vmatpush1.bf16.msra.mxu0 0
        %705 = vmatprep.subr.bf16.mxu0 0
        %706 = vmatpush1.bf16.msra.mxu0 0
        %707 = vmatprep.subr.bf16.mxu0 0
        %708 = vmatpush1.bf16.msra.mxu0 0
        %709 = vmatprep.subr.bf16.mxu0 0
        %710 = vmatpush1.bf16.msra.mxu0 0
        %711 = vmatprep.subr.bf16.mxu0 0
        %712 = vmatpush1.bf16.msra.mxu0 0
        %713 = vmatprep.subr.bf16.mxu0 0
        %714 = vmatpush1.bf16.msra.mxu0 0
        %715 = vmatprep.mubr.bf16.mxu0 0
        %716 = vmatmul.mubr.bf16.gmra.mrb[0].mxu0 %v603
        %v717 = vpop.f32.mrb[0].mxu0
        %v718 = vadd.f32 0.0, %v717
        %v719 = vpop.f32.mrb[0].mxu0
        %v720 = vpop.f32.mrb[0].mxu0
        %v721 = vadd.f32 0.0, %v720
        %v722 = vpop.f32.mrb[0].mxu0
        %723 = vmatprep.mubr.bf16.mxu0 0
        %724 = vmatmul.mubr.bf16.gmra.mrb[0].mxu0 %v604
        %v725 = vpop.f32.mrb[0].mxu0
        %v726 = vadd.f32 0.0, %v725
        %v727 = vpop.f32.mrb[0].mxu0
        %v728 = vpop.f32.mrb[0].mxu0
        %v729 = vadd.f32 0.0, %v728
        %v730 = vpop.f32.mrb[0].mxu0
        %731 = vmatprep.mubr.bf16.mxu0 0
        %732 = vmatmul.mubr.bf16.gmra.mrb[0].mxu0 %v605
        %v733 = vpop.f32.mrb[0].mxu0
        %v734 = vadd.f32 0.0, %v733
        %v735 = vpop.f32.mrb[0].mxu0
        %v736 = vpop.f32.mrb[0].mxu0
        %v737 = vadd.f32 0.0, %v736
        %v738 = vpop.f32.mrb[0].mxu0
        %739 = vmatprep.mubr.bf16.mxu0 0
        %740 = vmatmul.mubr.bf16.gmra.mrb[0].mxu0 %v606
        %v741 = vpop.f32.mrb[0].mxu0
        %v742 = vadd.f32 0.0, %v741
        %v743 = vpop.f32.mrb[0].mxu0
        %v744 = vpop.f32.mrb[0].mxu0
        %v745 = vadd.f32 0.0, %v744
        %v746 = vpop.f32.mrb[0].mxu0
        %747 = vmatprep.mubr.bf16.mxu0 0
        %748 = vmatmul.mubr.bf16.gmra.mrb[0].mxu0 %v607
        %v749 = vpop.f32.mrb[0].mxu0
        %v750 = vadd.f32 0.0, %v749
        %v751 = vpop.f32.mrb[0].mxu0
        %v752 = vpop.f32.mrb[0].mxu0
        %v753 = vadd.f32 0.0, %v752
        %v754 = vpop.f32.mrb[0].mxu0
        %755 = vmatprep.mubr.bf16.mxu0 0
        %756 = vmatmul.mubr.bf16.gmra.mrb[0].mxu0 %v608
        %v757 = vpop.f32.mrb[0].mxu0
        %v758 = vadd.f32 0.0, %v757
        %v759 = vpop.f32.mrb[0].mxu0
        %v760 = vpop.f32.mrb[0].mxu0
        %v761 = vadd.f32 0.0, %v760
        %v762 = vpop.f32.mrb[0].mxu0
        %763 = vmatprep.mubr.bf16.mxu0 0
        %764 = vmatmul.mubr.bf16.gmra.mrb[0].mxu0 %v609
        %v765 = vpop.f32.mrb[0].mxu0
        %v766 = vadd.f32 0.0, %v765
        %v767 = vpop.f32.mrb[0].mxu0
        %v768 = vpop.f32.mrb[0].mxu0
        %v769 = vadd.f32 0.0, %v768
        %v770 = vpop.f32.mrb[0].mxu0
        %771 = vmatprep.mubr.bf16.mxu0 0
        %772 = vmatmul.mubr.bf16.gmra.mrb[0].mxu0 %v610
        %v773 = vpop.f32.mrb[0].mxu0
        %v774 = vadd.f32 0.0, %v773
        %v775 = vpop.f32.mrb[0].mxu0
        %v776 = vpop.f32.mrb[0].mxu0
        %v777 = vadd.f32 0.0, %v776
        %v778 = vpop.f32.mrb[0].mxu0
        %779 = vmatprep.mubr.bf16.mxu0 0
        %780 = vmatmul.mubr.bf16.gmra.mrb[0].mxu0 %v611
        %v781 = vpop.f32.mrb[0].mxu0
        %v782 = vadd.f32 0.0, %v781
        %v783 = vpop.f32.mrb[0].mxu0
        %v784 = vpop.f32.mrb[0].mxu0
        %v785 = vadd.f32 0.0, %v784
        %v786 = vpop.f32.mrb[0].mxu0
        %787 = vmatprep.mubr.bf16.mxu0 0
        %788 = vmatmul.mubr.bf16.gmra.mrb[0].mxu0 %v612
        %v789 = vpop.f32.mrb[0].mxu0
        %v790 = vadd.f32 0.0, %v789
        %v791 = vpop.f32.mrb[0].mxu0
        %v792 = vpop.f32.mrb[0].mxu0
        %v793 = vadd.f32 0.0, %v792
        %v794 = vpop.f32.mrb[0].mxu0
        %795 = vmatprep.mubr.bf16.mxu0 0
        %796 = vmatmul.mubr.bf16.gmra.mrb[0].mxu0 %v613
        %v797 = vpop.f32.mrb[0].mxu0
        %v798 = vadd.f32 0.0, %v797
        %v799 = vpop.f32.mrb[0].mxu0
        %v800 = vpop.f32.mrb[0].mxu0
        %v801 = vadd.f32 0.0, %v800
        %v802 = vpop.f32.mrb[0].mxu0
        %803 = vmatprep.mubr.bf16.mxu0 0
        %804 = vmatmul.mubr.bf16.gmra.mrb[0].mxu0 %v614
        %v805 = vpop.f32.mrb[0].mxu0
        %v806 = vadd.f32 0.0, %v805
        %v807 = vpop.f32.mrb[0].mxu0
        %v808 = vpop.f32.mrb[0].mxu0
        %v809 = vadd.f32 0.0, %v808
        %v810 = vpop.f32.mrb[0].mxu0
        %811 = vmatprep.mubr.bf16.mxu0 0
        %812 = vmatmul.mubr.bf16.gmra.mrb[0].mxu0 %v615
        %v813 = vpop.f32.mrb[0].mxu0
        %v814 = vadd.f32 0.0, %v813
        %v815 = vpop.f32.mrb[0].mxu0
        %v816 = vpop.f32.mrb[0].mxu0
        %v817 = vadd.f32 0.0, %v816
        %v818 = vpop.f32.mrb[0].mxu0
        %819 = vmatprep.mubr.bf16.mxu0 0
        %820 = vmatmul.mubr.bf16.gmra.mrb[0].mxu0 %v616
        %v821 = vpop.f32.mrb[0].mxu0
        %v822 = vadd.f32 0.0, %v821
        %v823 = vpop.f32.mrb[0].mxu0
        %v824 = vpop.f32.mrb[0].mxu0
        %v825 = vadd.f32 0.0, %v824
        %v826 = vpop.f32.mrb[0].mxu0
        %827 = vmatprep.mubr.bf16.mxu0 0
        %828 = vmatmul.mubr.bf16.gmra.mrb[0].mxu0 %v617
        %v829 = vpop.f32.mrb[0].mxu0
        %v830 = vadd.f32 0.0, %v829
        %v831 = vpop.f32.mrb[0].mxu0
        %v832 = vpop.f32.mrb[0].mxu0
        %v833 = vadd.f32 0.0, %v832
        %v834 = vpop.f32.mrb[0].mxu0
        %835 = vmatprep.mubr.bf16.mxu0 0
        %836 = vmatmul.mubr.bf16.gmra.mrb[0].mxu0 %v618
        %v837 = vpop.f32.mrb[0].mxu0
        %v838 = vadd.f32 0.0, %v837
        %v839 = vpop.f32.mrb[0].mxu0
        %v840 = vpop.f32.mrb[0].mxu0
        %v841 = vadd.f32 0.0, %v840
        %v842 = vpop.f32.mrb[0].mxu0
        %843 = vdwg.mxu0
        %v844 = vadd.f32 %v459, %v718
        %v845 = vadd.f32 %v460, %v721
        %v846 = vadd.f32 %v461, %v726
        %v847 = vadd.f32 %v462, %v729
        %v848 = vadd.f32 %v463, %v734
        %v849 = vadd.f32 %v464, %v737
        %v850 = vadd.f32 %v465, %v742
        %v851 = vadd.f32 %v466, %v745
        %v852 = vadd.f32 %v467, %v750
        %v853 = vadd.f32 %v468, %v753
        %v854 = vadd.f32 %v469, %v758
        %v855 = vadd.f32 %v470, %v761
        %v856 = vadd.f32 %v471, %v766
        %v857 = vadd.f32 %v472, %v769
        %v858 = vadd.f32 %v473, %v774
        %v859 = vadd.f32 %v474, %v777
        %v860 = vadd.f32 %v475, %v782
        %v861 = vadd.f32 %v476, %v785
        %v862 = vadd.f32 %v477, %v790
        %v863 = vadd.f32 %v478, %v793
        %v864 = vadd.f32 %v479, %v798
        %v865 = vadd.f32 %v480, %v801
        %v866 = vadd.f32 %v481, %v806
        %v867 = vadd.f32 %v482, %v809
        %v868 = vadd.f32 %v483, %v814
        %v869 = vadd.f32 %v484, %v817
        %v870 = vadd.f32 %v485, %v822
        %v871 = vadd.f32 %v486, %v825
        %v872 = vadd.f32 %v487, %v830
        %v873 = vadd.f32 %v488, %v833
        %v874 = vadd.f32 %v489, %v838
        %v875 = vadd.f32 %v490, %v841
        %876 = vst [vmem:[#allocation2] sm:$0xff] %v844
        %877 = vst [vmem:[#allocation2 + $0x8] sm:$0xff] %v845
        %878 = vst [vmem:[#allocation2 + $0x10] sm:$0xff] %v846
        %879 = vst [vmem:[#allocation2 + $0x18] sm:$0xff] %v847
        %880 = vst [vmem:[#allocation2 + $0x20] sm:$0xff] %v848
        %881 = vst [vmem:[#allocation2 + $0x28] sm:$0xff] %v849
        %882 = vst [vmem:[#allocation2 + $0x30] sm:$0xff] %v850
        %883 = vst [vmem:[#allocation2 + $0x38] sm:$0xff] %v851
        %884 = vst [vmem:[#allocation2 + $0x40] sm:$0xff] %v852
        %885 = vst [vmem:[#allocation2 + $0x48] sm:$0xff] %v853
        %886 = vst [vmem:[#allocation2 + $0x50] sm:$0xff] %v854
        %887 = vst [vmem:[#allocation2 + $0x58] sm:$0xff] %v855
        %888 = vst [vmem:[#allocation2 + $0x60] sm:$0xff] %v856
        %889 = vst [vmem:[#allocation2 + $0x68] sm:$0xff] %v857
        %890 = vst [vmem:[#allocation2 + $0x70] sm:$0xff] %v858
        %891 = vst [vmem:[#allocation2 + $0x78] sm:$0xff] %v859
        %892 = vst [vmem:[#allocation2 + $0x80] sm:$0xff] %v860
        %893 = vst [vmem:[#allocation2 + $0x88] sm:$0xff] %v861
        %894 = vst [vmem:[#allocation2 + $0x90] sm:$0xff] %v862
        %895 = vst [vmem:[#allocation2 + $0x98] sm:$0xff] %v863
        %896 = vst [vmem:[#allocation2 + $0xa0] sm:$0xff] %v864
        %897 = vst [vmem:[#allocation2 + $0xa8] sm:$0xff] %v865
        %898 = vst [vmem:[#allocation2 + $0xb0] sm:$0xff] %v866
        %899 = vst [vmem:[#allocation2 + $0xb8] sm:$0xff] %v867
        %900 = vst [vmem:[#allocation2 + $0xc0] sm:$0xff] %v868
        %901 = vst [vmem:[#allocation2 + $0xc8] sm:$0xff] %v869
        %902 = vst [vmem:[#allocation2 + $0xd0] sm:$0xff] %v870
        %903 = vst [vmem:[#allocation2 + $0xd8] sm:$0xff] %v871
        %904 = vst [vmem:[#allocation2 + $0xe0] sm:$0xff] %v872
        %905 = vst [vmem:[#allocation2 + $0xe8] sm:$0xff] %v873
        %906 = vst [vmem:[#allocation2 + $0xf0] sm:$0xff] %v874
        %907 = vst [vmem:[#allocation2 + $0xf8] sm:$0xff] %v875
        %p908 = scmp.eq.s32.totalorder %s22, 8
        // Predicated region
        $region74: #{bottleneck_forward.8} parent=64 // pred_check
          %p909 = pneg %p908
        $region75: #{bottleneck_forward.8} parent=64 // pred_check_branch
          %911 = sbr.rel (%p909) target = $region77
        $region76: #{bottleneck_forward.8} parent=64 // pred_region
          %v912 = vld [vmem:[#allocation2] sm:$0xff]
          %v913 = vld [vmem:[#allocation2 + $0x8] sm:$0xff]
          %v914 = vld [vmem:[#allocation2 + $0x10] sm:$0xff]
          %v915 = vld [vmem:[#allocation2 + $0x18] sm:$0xff]
          %v916 = vld [vmem:[#allocation2 + $0x20] sm:$0xff]
          %v917 = vld [vmem:[#allocation2 + $0x28] sm:$0xff]
          %v918 = vld [vmem:[#allocation2 + $0x30] sm:$0xff]
          %v919 = vld [vmem:[#allocation2 + $0x38] sm:$0xff]
          %v920 = vld [vmem:[#allocation2 + $0x40] sm:$0xff]
          %v921 = vld [vmem:[#allocation2 + $0x48] sm:$0xff]
          %v922 = vld [vmem:[#allocation2 + $0x50] sm:$0xff]
          %v923 = vld [vmem:[#allocation2 + $0x58] sm:$0xff]
          %v924 = vld [vmem:[#allocation2 + $0x60] sm:$0xff]
          %v925 = vld [vmem:[#allocation2 + $0x68] sm:$0xff]
          %v926 = vld [vmem:[#allocation2 + $0x70] sm:$0xff]
          %v927 = vld [vmem:[#allocation2 + $0x78] sm:$0xff]
          %v928 = vld [vmem:[#allocation2 + $0x80] sm:$0xff]
          %v929 = vld [vmem:[#allocation2 + $0x88] sm:$0xff]
          %v930 = vld [vmem:[#allocation2 + $0x90] sm:$0xff]
          %v931 = vld [vmem:[#allocation2 + $0x98] sm:$0xff]
          %v932 = vld [vmem:[#allocation2 + $0xa0] sm:$0xff]
          %v933 = vld [vmem:[#allocation2 + $0xa8] sm:$0xff]
          %v934 = vld [vmem:[#allocation2 + $0xb0] sm:$0xff]
          %v935 = vld [vmem:[#allocation2 + $0xb8] sm:$0xff]
          %v936 = vld [vmem:[#allocation2 + $0xc0] sm:$0xff]
          %v937 = vld [vmem:[#allocation2 + $0xc8] sm:$0xff]
          %v938 = vld [vmem:[#allocation2 + $0xd0] sm:$0xff]
          %v939 = vld [vmem:[#allocation2 + $0xd8] sm:$0xff]
          %v940 = vld [vmem:[#allocation2 + $0xe0] sm:$0xff]
          %v941 = vld [vmem:[#allocation2 + $0xe8] sm:$0xff]
          %v942 = vld [vmem:[#allocation2 + $0xf0] sm:$0xff]
          %v943 = vld [vmem:[#allocation2 + $0xf8] sm:$0xff]
          %944 = vst [vmem:[%s413] sm:$0xff] %v912
          %945 = vst [vmem:[%s413 + $0x8] sm:$0xff] %v913
          %946 = vst [vmem:[%s413 + $0x10] sm:$0xff] %v914
          %947 = vst [vmem:[%s413 + $0x18] sm:$0xff] %v915
          %948 = vst [vmem:[%s413 + $0x20] sm:$0xff] %v916
          %949 = vst [vmem:[%s413 + $0x28] sm:$0xff] %v917
          %950 = vst [vmem:[%s413 + $0x30] sm:$0xff] %v918
          %951 = vst [vmem:[%s413 + $0x38] sm:$0xff] %v919
          %952 = vst [vmem:[%s413 + $0x40] sm:$0xff] %v920
          %953 = vst [vmem:[%s413 + $0x48] sm:$0xff] %v921
          %954 = vst [vmem:[%s413 + $0x50] sm:$0xff] %v922
          %955 = vst [vmem:[%s413 + $0x58] sm:$0xff] %v923
          %956 = vst [vmem:[%s413 + $0x60] sm:$0xff] %v924
          %957 = vst [vmem:[%s413 + $0x68] sm:$0xff] %v925
          %958 = vst [vmem:[%s413 + $0x70] sm:$0xff] %v926
          %959 = vst [vmem:[%s413 + $0x78] sm:$0xff] %v927
          %960 = vst [vmem:[%s413 + $0x80] sm:$0xff] %v928
          %961 = vst [vmem:[%s413 + $0x88] sm:$0xff] %v929
          %962 = vst [vmem:[%s413 + $0x90] sm:$0xff] %v930
          %963 = vst [vmem:[%s413 + $0x98] sm:$0xff] %v931
          %964 = vst [vmem:[%s413 + $0xa0] sm:$0xff] %v932
          %965 = vst [vmem:[%s413 + $0xa8] sm:$0xff] %v933
          %966 = vst [vmem:[%s413 + $0xb0] sm:$0xff] %v934
          %967 = vst [vmem:[%s413 + $0xb8] sm:$0xff] %v935
          %968 = vst [vmem:[%s413 + $0xc0] sm:$0xff] %v936
          %969 = vst [vmem:[%s413 + $0xc8] sm:$0xff] %v937
          %970 = vst [vmem:[%s413 + $0xd0] sm:$0xff] %v938
          %971 = vst [vmem:[%s413 + $0xd8] sm:$0xff] %v939
          %972 = vst [vmem:[%s413 + $0xe0] sm:$0xff] %v940
          %973 = vst [vmem:[%s413 + $0xe8] sm:$0xff] %v941
          %974 = vst [vmem:[%s413 + $0xf0] sm:$0xff] %v942
          %975 = vst [vmem:[%s413 + $0xf8] sm:$0xff] %v943
          %v976 = vadd.f32 %v912, %v913
          %v977 = vadd.f32 %v976, %v914
          %v978 = vadd.f32 %v977, %v915
          %v979 = vadd.f32 %v978, %v916
          %v980 = vadd.f32 %v979, %v917
          %v981 = vadd.f32 %v980, %v918
          %v982 = vadd.f32 %v981, %v919
          %v983 = vadd.f32 %v982, %v920
          %v984 = vadd.f32 %v983, %v921
          %v985 = vadd.f32 %v984, %v922
          %v986 = vadd.f32 %v985, %v923
          %v987 = vadd.f32 %v986, %v924
          %v988 = vadd.f32 %v987, %v925
          %v989 = vadd.f32 %v988, %v926
          %v990 = vadd.f32 %v989, %v927
          %v991 = vadd.f32 %v990, %v928
          %v992 = vadd.f32 %v991, %v929
          %v993 = vadd.f32 %v992, %v930
          %v994 = vadd.f32 %v993, %v931
          %v995 = vadd.f32 %v994, %v932
          %v996 = vadd.f32 %v995, %v933
          %v997 = vadd.f32 %v996, %v934
          %v998 = vadd.f32 %v997, %v935
          %v999 = vadd.f32 %v998, %v936
          %v1000 = vadd.f32 %v999, %v937
          %v1001 = vadd.f32 %v1000, %v938
          %v1002 = vadd.f32 %v1001, %v939
          %v1003 = vadd.f32 %v1002, %v940
          %v1004 = vadd.f32 %v1003, %v941
          %v1005 = vadd.f32 %v1004, %v942
          %v1006 = vadd.f32 %v1005, %v943
          %v1007 = vrot.slane %v1006, 4
          %v1008 = vadd.f32 %v1006, %v1007
          %v1009 = vrot.slane %v1008, 2
          %v1010 = vadd.f32 %v1008, %v1009
          %v1011 = vrot.slane %v1010, 1
          %v1012 = vadd.f32 %v1010, %v1011
          %v1013 = vmul.f32 %v912, %v912
          %v1014 = vmul.f32 %v913, %v913
          %v1015 = vmul.f32 %v914, %v914
          %v1016 = vmul.f32 %v915, %v915
          %v1017 = vmul.f32 %v916, %v916
          %v1018 = vmul.f32 %v917, %v917
          %v1019 = vmul.f32 %v918, %v918
          %v1020 = vmul.f32 %v919, %v919
          %v1021 = vmul.f32 %v920, %v920
          %v1022 = vmul.f32 %v921, %v921
          %v1023 = vmul.f32 %v922, %v922
          %v1024 = vmul.f32 %v923, %v923
          %v1025 = vmul.f32 %v924, %v924
          %v1026 = vmul.f32 %v925, %v925
          %v1027 = vmul.f32 %v926, %v926
          %v1028 = vmul.f32 %v927, %v927
          %v1029 = vmul.f32 %v928, %v928
          %v1030 = vmul.f32 %v929, %v929
          %v1031 = vmul.f32 %v930, %v930
          %v1032 = vmul.f32 %v931, %v931
          %v1033 = vmul.f32 %v932, %v932
          %v1034 = vmul.f32 %v933, %v933
          %v1035 = vmul.f32 %v934, %v934
          %v1036 = vmul.f32 %v935, %v935
          %v1037 = vmul.f32 %v936, %v936
          %v1038 = vmul.f32 %v937, %v937
          %v1039 = vmul.f32 %v938, %v938
          %v1040 = vmul.f32 %v939, %v939
          %v1041 = vmul.f32 %v940, %v940
          %v1042 = vmul.f32 %v941, %v941
          %v1043 = vmul.f32 %v942, %v942
          %v1044 = vmul.f32 %v943, %v943
          %v1045 = vadd.f32 %v1013, %v1014
          %v1046 = vadd.f32 %v1045, %v1015
          %v1047 = vadd.f32 %v1046, %v1016
          %v1048 = vadd.f32 %v1047, %v1017
          %v1049 = vadd.f32 %v1048, %v1018
          %v1050 = vadd.f32 %v1049, %v1019
          %v1051 = vadd.f32 %v1050, %v1020
          %v1052 = vadd.f32 %v1051, %v1021
          %v1053 = vadd.f32 %v1052, %v1022
          %v1054 = vadd.f32 %v1053, %v1023
          %v1055 = vadd.f32 %v1054, %v1024
          %v1056 = vadd.f32 %v1055, %v1025
          %v1057 = vadd.f32 %v1056, %v1026
          %v1058 = vadd.f32 %v1057, %v1027
          %v1059 = vadd.f32 %v1058, %v1028
          %v1060 = vadd.f32 %v1059, %v1029
          %v1061 = vadd.f32 %v1060, %v1030
          %v1062 = vadd.f32 %v1061, %v1031
          %v1063 = vadd.f32 %v1062, %v1032
          %v1064 = vadd.f32 %v1063, %v1033
          %v1065 = vadd.f32 %v1064, %v1034
          %v1066 = vadd.f32 %v1065, %v1035
          %v1067 = vadd.f32 %v1066, %v1036
          %v1068 = vadd.f32 %v1067, %v1037
          %v1069 = vadd.f32 %v1068, %v1038
          %v1070 = vadd.f32 %v1069, %v1039
          %v1071 = vadd.f32 %v1070, %v1040
          %v1072 = vadd.f32 %v1071, %v1041
          %v1073 = vadd.f32 %v1072, %v1042
          %v1074 = vadd.f32 %v1073, %v1043
          %v1075 = vadd.f32 %v1074, %v1044
          %v1076 = vrot.slane %v1075, 4
          %v1077 = vadd.f32 %v1075, %v1076
          %v1078 = vrot.slane %v1077, 2
          %v1079 = vadd.f32 %v1077, %v1078
          %v1080 = vrot.slane %v1079, 1
          %v1081 = vadd.f32 %v1079, %v1080
          %vm1082 = vcmask 1040384
          %v1083 = vsel %vm1082, %v1012, %v1081
          %1084 = vst [vmem:[%s421] sm:$0x3] %v1083
        $region77: #{bottleneck_forward.8} parent=64 // pred_fallthru
          _
        %s1085 = smul.u32 32, %s20
        %p1086 = scmp.lt.s32.totalorder %s1085, 63
        %s1087 = scalar_select %p1086, %s1085, 63
        %p1088 = scmp.lt.s32.totalorder %s21, 0
        %s1089 = scalar_select %p1088, %s21, 0
        %s1090 = sadd.s32 %s1089, %s1087
        %s1091 = smul.addr %s1090, 8
        %s1092 = scalar_lea.vmem %s2, %s1091
        %p1093 = scmp.lt.s32.totalorder %s20, 1
        %s1094 = scalar_select %p1093, %s20, 1
        %p1095 = scmp.lt.s32.totalorder %s21, 0
        %s1096 = scalar_select %p1095, %s21, 0
        %s1097 = sadd.s32 %s1096, %s1094
        %s1098 = smul.addr %s1097, 2
        %s1099 = scalar_lea.vmem %s3, %s1098
        // Predicated region
        $region78: #{bottleneck_forward.8} parent=64 // pred_check
          %p1100 = pneg %p110
        $region79: #{bottleneck_forward.8} parent=64 // pred_check_branch
          %1102 = sbr.rel (%p1100) target = $region81
        $region80: #{bottleneck_forward.8} parent=64 // pred_region
          %s1103 = smul.u32 32, %s20
        $region81: #{bottleneck_forward.8} parent=64 // pred_fallthru
          _
        // Predicated region
        $region82: #{bottleneck_forward.8} parent=64 // pred_check
          %p1104 = pneg %p138
        $region83: #{bottleneck_forward.8} parent=64 // pred_check_branch
          %1106 = sbr.rel (%p1104) target = $region85
        $region84: #{bottleneck_forward.8} parent=64 // pred_region
          _
        $region85: #{bottleneck_forward.8} parent=64 // pred_fallthru
          _
      $region65: #{bottleneck_forward.8} parent=5 // pred_fallthru
        _
      %p1107 = scmp.le.s32.totalorder 2, %s10
      // Predicated region
      $region86: #{bottleneck_forward.8} parent=5 // pred_check
        %p1108 = pneg %p1107
      $region87: #{bottleneck_forward.8} parent=5 // pred_check_branch
        %1110 = sbr.rel (%p1108) target = $region89
      $region88: #{bottleneck_forward.8} parent=5 // pred_region
        %s1111 = ssub.s32 %s10, 2
        // Predicated region
        $region90: #{bottleneck_forward.8} parent=88 // pred_check
          %p1112 = pneg %p116
        $region91: #{bottleneck_forward.8} parent=88 // pred_check_branch
          %1114 = sbr.rel (%p1112) target = $region93
        $region92: #{bottleneck_forward.8} parent=88 // pred_region
          %s1115 = smul.u32 32, %s23
          %p1116 = scmp.lt.s32.totalorder %s1115, 63
          %s1117 = scalar_select %p1116, %s1115, 63
          %p1118 = scmp.lt.s32.totalorder %s24, 0
          %s1119 = scalar_select %p1118, %s24, 0
          %s1120 = sadd.s32 %s1119, %s1117
          %s1121 = smul.addr %s1120, 8
          %s1122 = scalar_lea.vmem %s2, %s1121
        $region93: #{bottleneck_forward.8} parent=88 // pred_fallthru
          _
        // Predicated region
        $region94: #{bottleneck_forward.8} parent=88 // pred_check
          %p1123 = pneg %p144
        $region95: #{bottleneck_forward.8} parent=88 // pred_check_branch
          %1125 = sbr.rel (%p1123) target = $region97
        $region96: #{bottleneck_forward.8} parent=88 // pred_region
          %p1126 = scmp.lt.s32.totalorder %s23, 1
          %s1127 = scalar_select %p1126, %s23, 1
          %p1128 = scmp.lt.s32.totalorder %s24, 0
          %s1129 = scalar_select %p1128, %s24, 0
          %s1130 = sadd.s32 %s1129, %s1127
          %s1131 = smul.addr %s1130, 2
          %s1132 = scalar_lea.vmem %s3, %s1131
        $region97: #{bottleneck_forward.8} parent=88 // pred_fallthru
          _
      $region89: #{bottleneck_forward.8} parent=5 // pred_fallthru
        _
    $region6: #{bottleneck_forward.8} parent=1 // loop_footer
      %s14 = sadd.s32 1, %s10
    $region7: #{bottleneck_forward.8} parent=1 // loop_footer_branch
      %9 = sbr.rel target = $region3
    $region8: #{bottleneck_forward.8} parent=1 // loop_exit
      _

</llo_original>
